<compile_context>
chip_gen: v5e
topology: v5e:2x2
jax: 0.10.0
libtpu: 0.0.40
codegen_flags: <defaults>
</compile_context>

<pallas_src>
import functools

import jax
import jax.numpy as jnp
from jax.experimental import pallas as pl
from jax.experimental.pallas import tpu as pltpu

PAD_INDEX = 0


def _squash(x):
    # squash(x) = (|x| / (1 + |x|^2)) * x   (matches the reference `squash`)
    sq = jnp.sum(x * x, axis=-1, keepdims=True)
    return (jnp.sqrt(sq) / (1.0 + sq)) * x


def _recip(x, approx):
    # Exact divide on the f32 check path; EUP approximate reciprocal otherwise.
    return pl.reciprocal(x, approx=True) if approx else 1.0 / x


def capsule_kernel(sent_ref, mask_ref, asp_ref,
                   w_enc_ref, b_enc_ref,
                   w_cat_ref, b_cat_ref,
                   w_asp_ref, b_asp_ref,
                   w_att_ref, scale_ref,
                   out_ref, *, approx):
    f32 = jnp.float32
    Bb, T, E = sent_ref.shape
    K = w_asp_ref.shape[1]
    C = out_ref.shape[1]

    emb = sent_ref[...].reshape(Bb * T, E)          # (Bb*T, E)  token rows, flat
    mask = mask_ref[...]                            # (Bb, T)    1.0 where token != PAD
    asp = asp_ref[...]                              # (Bb, E)    mean-pooled aspect

    # --- sentence encoder (abstract in reference; deterministic linear+tanh) ---
    h = jnp.tanh(jnp.dot(emb, w_enc_ref[...], preferred_element_type=f32)
                 + b_enc_ref[...])                                       # (Bb*T, H) f32
    h = h.astype(w_cat_ref.dtype)

    # --- fused sentence_transform + guide-routing logits: one (Bb*T,H)@(H,K+C) pass ---
    # w_cat = [w_sent | w_sent @ w_guide_eff],  b_cat = [b_sent | b_sent @ w_guide_eff]
    sc = jnp.dot(h, w_cat_ref[...], preferred_element_type=f32) + b_cat_ref[...]
    s = sc[:, :K]                                   # pre-squash primary capsules
    g = sc[:, K:]                                   # pre-squash-scale guide logits
    sq = jnp.sum(s * s, axis=-1, keepdims=True)
    sscale = jnp.sqrt(sq) * _recip(1.0 + sq, approx)
    primary_flat = sscale * s                       # (Bb*T, K)  == squash(s)
    gm = sscale * g                                 # (Bb*T, C)  == primary @ Wg @ guide.T

    # --- guide softmax over categories (flat layout, C on lanes) ---
    gm = gm - jnp.max(gm, axis=-1, keepdims=True)
    gm = jnp.exp(gm)
    gm = gm * _recip(jnp.sum(gm, axis=-1, keepdims=True), approx)        # (Bb*T, C)

    # --- aspect_transform -> aspect capsule ---
    a = jnp.dot(asp, w_asp_ref[...], preferred_element_type=f32) + b_asp_ref[...]
    asq = jnp.sum(a * a, axis=-1, keepdims=True)
    aspect_capsule = (jnp.sqrt(asq) * _recip(1.0 + asq, approx)) * a     # (Bb, K) f32

    # --- bilinear attention over time (batched MXU einsum, num_queries = 1) ---
    primary = primary_flat.reshape(Bb, T, K)        # single reshape of primary
    q = jnp.dot(aspect_capsule.astype(w_att_ref.dtype), w_att_ref[...],
                preferred_element_type=f32)                              # (Bb, K) f32
    score = jnp.einsum("bqk,btk->bqt", q[:, None, :], primary,
                       preferred_element_type=f32)[:, 0, :]              # (Bb, T) f32
    score = jnp.where(mask > 0, score, -1e30)
    score = score - jnp.max(score, axis=-1, keepdims=True)
    e = jnp.exp(score)
    norm_w = e * _recip(jnp.sum(e, axis=-1, keepdims=True), approx)      # (Bb, T)

    # --- capsule-guided routing weights ---
    w_route = gm.reshape(Bb, T, C) * (norm_w * scale_ref[0])[:, :, None]  # (Bb, T, C)

    # --- category aggregation + norm, unrolled over the tiny C axis ---
    # cat[b, c, :] = sum_t w_route[b, t, c] * primary[b, t, :]
    # and ||squash(v)|| == |v|^2 / (1 + |v|^2), so only the squared norm is needed.
    norms = []
    for c in range(C):
        cat_c = jnp.sum(w_route[:, :, c:c + 1] * primary, axis=1)        # (Bb, K)
        norms.append(jnp.sum(cat_c * cat_c, axis=-1, keepdims=True))     # (Bb, 1)
    n = jnp.concatenate(norms, axis=-1)                                  # (Bb, C)
    out_ref[...] = (n * _recip(1.0 + n, approx)).astype(out_ref.dtype)


def prepare_params(params, compute_dtype=jnp.float32):
    """One-time parameter prep: fold guide routing into sentence_transform, cast weights."""
    hi = jax.lax.Precision.HIGHEST
    guide = _squash(params["guide_capsule"])                              # (C, K)
    w_ge = jnp.dot(params["guide_weight"], guide.T, precision=hi)         # (K, C)
    w_sg = jnp.dot(params["w_sent"], w_ge, precision=hi)                  # (H, C)
    b_sg = jnp.dot(params["b_sent"], w_ge, precision=hi)                  # (1, C)
    cd = compute_dtype
    return {
        "embedding": params["embedding"].astype(cd),
        "w_enc": params["w_enc"].astype(cd),
        "b_enc": params["b_enc"].astype(jnp.float32),
        "w_cat": jnp.concatenate([params["w_sent"], w_sg], axis=1).astype(cd),
        "b_cat": jnp.concatenate([params["b_sent"], b_sg], axis=1).astype(jnp.float32),
        "w_asp": params["w_asp"].astype(cd),
        "b_asp": params["b_asp"].astype(jnp.float32),
        "w_att": params["w_att"].astype(cd),
        "scale": params["scale"].reshape(1).astype(jnp.float32),
    }


def capsule_forward(sent_ids, asp_ids, prep, *, block_b=None):
    """Embedding lookup + aspect pooling (plain JAX), then the fused Pallas kernel."""
    emb_table = prep["embedding"]
    cd = emb_table.dtype
    B, T = sent_ids.shape
    E = emb_table.shape[1]
    H = prep["w_enc"].shape[1]
    K = prep["w_asp"].shape[1]
    KC = prep["w_cat"].shape[1]
    C = KC - K

    sent_mask_f = (sent_ids != PAD_INDEX).astype(jnp.float32)
    asp_mask = (asp_ids != PAD_INDEX)

    # TODO(synk): embedding gather + aspect mean-pool stay in XLA (one fused gather); an
    # in-kernel scalar-prefetch row gather needs Mosaic dynamic-gather / per-row DMA and
    # is left out for lowering robustness at production vocab sizes.
    sent_emb = jnp.take(emb_table, sent_ids, axis=0)                     # (B, T, E) in cd
    asp_rows = jnp.take(emb_table, asp_ids, axis=0).astype(jnp.float32)
    asp_rows = jnp.where(asp_mask[..., None], asp_rows, 0.0)
    asp_len = jnp.maximum(jnp.sum(asp_mask, axis=1, keepdims=True).astype(jnp.float32), 1.0)
    asp_vec = (jnp.sum(asp_rows, axis=1) / asp_len).astype(cd)           # (B, E)

    # Single grid step by default; split only if a block's sentence slab exceeds ~4 MiB.
    B8 = -(-B // 8) * 8
    if block_b is None:
        bytes_per_row = T * E * jnp.dtype(cd).itemsize
        rows_budget = max(8, ((4 << 20) // bytes_per_row) // 8 * 8)
        block_b = min(B8, rows_budget)
    B_pad = -(-B // block_b) * block_b

    if B_pad != B:
        pad = B_pad - B
        sent_emb = jnp.pad(sent_emb, ((0, pad), (0, 0), (0, 0)))
        sent_mask_f = jnp.pad(sent_mask_f, ((0, pad), (0, 0)))
        asp_vec = jnp.pad(asp_vec, ((0, pad), (0, 0)))

    grid = (B_pad // block_b,)
    approx = jnp.dtype(cd) != jnp.dtype(jnp.float32)
    kernel = functools.partial(capsule_kernel, approx=approx)

    out = pl.pallas_call(
        kernel,
        grid=grid,
        in_specs=[
            pl.BlockSpec((block_b, T, E), lambda b: (b, 0, 0)),   # sentence embeddings
            pl.BlockSpec((block_b, T), lambda b: (b, 0)),          # sentence mask
            pl.BlockSpec((block_b, E), lambda b: (b, 0)),          # pooled aspect
            pl.BlockSpec((E, H), lambda b: (0, 0)),                # encoder W
            pl.BlockSpec((1, H), lambda b: (0, 0)),                # encoder b
            pl.BlockSpec((H, KC), lambda b: (0, 0)),               # [w_sent | w_sent@w_ge]
            pl.BlockSpec((1, KC), lambda b: (0, 0)),               # [b_sent | b_sent@w_ge]
            pl.BlockSpec((E, K), lambda b: (0, 0)),                # aspect_transform W
            pl.BlockSpec((1, K), lambda b: (0, 0)),                # aspect_transform b
            pl.BlockSpec((K, K), lambda b: (0, 0)),                # bilinear attention W
            pl.BlockSpec(memory_space=pltpu.MemorySpace.SMEM),     # scale (scalar)
        ],
        out_specs=pl.BlockSpec((block_b, C), lambda b: (b, 0)),
        out_shape=jax.ShapeDtypeStruct((B_pad, C), jnp.float32),
        compiler_params=pltpu.CompilerParams(dimension_semantics=("parallel",)),
    )(
        sent_emb, sent_mask_f, asp_vec,
        prep["w_enc"], prep["b_enc"],
        prep["w_cat"], prep["b_cat"],
        prep["w_asp"], prep["b_asp"],
        prep["w_att"], prep["scale"],
    )
    return out[:B]


def capsule_forward_ref(sent_ids, asp_ids, params):
    """Pure-JAX reference of the same forward pass (for correctness checking)."""
    emb_table = params["embedding"]
    sent_mask = (sent_ids != PAD_INDEX)
    asp_mask = (asp_ids != PAD_INDEX)
    sent_emb = jnp.take(emb_table, sent_ids, axis=0)
    asp_emb = jnp.take(emb_table, asp_ids, axis=0)
    asp_emb = jnp.where(asp_mask[..., None], asp_emb, 0.0)
    asp_vec = jnp.sum(asp_emb, axis=1) / jnp.maximum(
        jnp.sum(asp_mask, axis=1, keepdims=True).astype(jnp.float32), 1.0)

    h = jnp.tanh(sent_emb @ params["w_enc"] + params["b_enc"])
    primary = _squash(h @ params["w_sent"] + params["b_sent"])
    aspect_capsule = _squash(asp_vec @ params["w_asp"] + params["b_asp"])

    score = jnp.einsum("bk,btk->bt", aspect_capsule @ params["w_att"], primary)
    score = jnp.where(sent_mask, score, -1e30)
    norm_w = jax.nn.softmax(score, axis=-1)

    guide = _squash(params["guide_capsule"])
    gm = (primary @ params["guide_weight"]) @ guide.T
    gm = jax.nn.softmax(gm, axis=-1)
    gm = gm * norm_w[..., None] * params["scale"][0, 0]
    cat = _squash(jnp.einsum("btc,btk->bck", gm, primary))
    return jnp.sqrt(jnp.sum(cat * cat, axis=-1))


def _xavier(key, shape):
    fan_in, fan_out = shape[0], shape[1]
    limit = jnp.sqrt(6.0 / (fan_in + fan_out))
    return jax.random.uniform(key, shape, jnp.float32, -limit, limit)


def make_params(key, vocab, embed_size, hidden_size, capsule_size, num_categories):
    ks = jax.random.split(key, 10)
    return {
        "embedding": jax.random.normal(ks[0], (vocab, embed_size), jnp.float32) * 0.1,
        "w_enc": _xavier(ks[1], (embed_size, hidden_size)),
        "b_enc": jnp.zeros((1, hidden_size), jnp.float32),
        "w_sent": _xavier(ks[2], (hidden_size, capsule_size)),
        "b_sent": jax.random.normal(ks[3], (1, capsule_size), jnp.float32) * 0.01,
        "w_asp": _xavier(ks[4], (embed_size, capsule_size)),
        "b_asp": jax.random.normal(ks[5], (1, capsule_size), jnp.float32) * 0.01,
        "w_att": _xavier(ks[6], (capsule_size, capsule_size)),
        "guide_capsule": _xavier(ks[7], (num_categories, capsule_size)),
        "guide_weight": _xavier(ks[8], (capsule_size, capsule_size)),
        "scale": jnp.full((1, 1), 4.0, jnp.float32),
    }


if __name__ == "__main__":
    B, T, Ta = 16, 16, 4
    vocab, E, H, K, C = 50, 32, 32, 16, 4

    key = jax.random.PRNGKey(0)
    k_sent, k_asp, k_par = jax.random.split(key, 3)

    sent_ids = jax.random.randint(k_sent, (B, T), 1, vocab, dtype=jnp.int32)
    # introduce padding at the tail of a couple of rows
    sent_ids = sent_ids.at[1, T - 5:].set(PAD_INDEX)
    sent_ids = sent_ids.at[7, T - 9:].set(PAD_INDEX)
    asp_ids = jax.random.randint(k_asp, (B, Ta), 1, vocab, dtype=jnp.int32)
    asp_ids = asp_ids.at[1, Ta - 2:].set(PAD_INDEX)

    params = make_params(k_par, vocab, E, H, K, C)
    ref = capsule_forward_ref(sent_ids, asp_ids, params)

    fwd = jax.jit(capsule_forward)

    # f32 path: tight check against the pure-JAX reference (exact divides in-kernel).
    prep32 = prepare_params(params, jnp.float32)
    out = jax.block_until_ready(fwd(sent_ids, asp_ids, prep32))
    assert out.shape == (B, C)
    assert jnp.allclose(out, ref, rtol=2e-4, atol=2e-4), (out, ref)

    # bf16 MXU path (recommended on v6e/v7x): bf16 weights/activations into the MXU with
    # f32 accumulation; softmax/squash stay f32; EUP approx reciprocals enabled.
    prep16 = prepare_params(params, jnp.bfloat16)
    out16 = jax.block_until_ready(fwd(sent_ids, asp_ids, prep16))
    assert out16.shape == (B, C)
    assert bool(jnp.all(jnp.isfinite(out16)))
    assert jnp.allclose(out16, ref, rtol=1e-1, atol=5e-2)

    print("KERNEL_OK")
</pallas_src>

<mosaic_0001>
module attributes {stable_mosaic.version = 11 : i64} {
  func.func @capsule_kernel(%arg0: i32, %arg1: memref<16x16x32xf32, #tpu.memory_space<vmem>>, %arg2: memref<16x16xf32, #tpu.memory_space<vmem>>, %arg3: memref<16x32xf32, #tpu.memory_space<vmem>>, %arg4: memref<32x32xf32, #tpu.memory_space<vmem>>, %arg5: memref<1x32xf32, #tpu.memory_space<vmem>>, %arg6: memref<32x20xf32, #tpu.memory_space<vmem>>, %arg7: memref<1x20xf32, #tpu.memory_space<vmem>>, %arg8: memref<32x16xf32, #tpu.memory_space<vmem>>, %arg9: memref<1x16xf32, #tpu.memory_space<vmem>>, %arg10: memref<16x16xf32, #tpu.memory_space<vmem>>, %arg11: memref<1xf32, #tpu.memory_space<smem>>, %arg12: memref<16x4xf32, #tpu.memory_space<vmem>>) attributes {dimension_semantics = [#tpu.dimension_semantics<parallel>], iteration_bounds = array<i64: 1>, scalar_prefetch = 0 : i64, scratch_operands = 0 : i64, tpu.core_type = #tpu.core_type<tc>, window_params = [{transform_indices = @transform_0, window_bounds = array<i64: 16, 16, 32>}, {transform_indices = @transform_1, window_bounds = array<i64: 16, 16>}, {transform_indices = @transform_2, window_bounds = array<i64: 16, 32>}, {pipeline_mode = #tpu.pipeline_mode<synchronous>, transform_indices = @transform_3, window_bounds = array<i64: 32, 32>}, {pipeline_mode = #tpu.pipeline_mode<synchronous>, transform_indices = @transform_4, window_bounds = array<i64: 1, 32>}, {pipeline_mode = #tpu.pipeline_mode<synchronous>, transform_indices = @transform_5, window_bounds = array<i64: 32, 20>}, {pipeline_mode = #tpu.pipeline_mode<synchronous>, transform_indices = @transform_6, window_bounds = array<i64: 1, 20>}, {pipeline_mode = #tpu.pipeline_mode<synchronous>, transform_indices = @transform_7, window_bounds = array<i64: 32, 16>}, {pipeline_mode = #tpu.pipeline_mode<synchronous>, transform_indices = @transform_8, window_bounds = array<i64: 1, 16>}, {pipeline_mode = #tpu.pipeline_mode<synchronous>, transform_indices = @transform_9, window_bounds = array<i64: 16, 16>}, {transform_indices = @transform_10, window_bounds = array<i64: 1>}, {transform_indices = @transform_11, window_bounds = array<i64: 16, 4>}]} {
    %c0 = arith.constant 0 : index
    %c0_0 = arith.constant 0 : index
    %c0_1 = arith.constant 0 : index
    %0 = vector.load %arg1[%c0, %c0_0, %c0_1] : memref<16x16x32xf32, #tpu.memory_space<vmem>>, vector<16x16x32xf32>
    %1 = vector.shape_cast %0 : vector<16x16x32xf32> to vector<256x32xf32>
    %c0_2 = arith.constant 0 : index
    %c0_3 = arith.constant 0 : index
    %2 = vector.load %arg2[%c0_2, %c0_3] : memref<16x16xf32, #tpu.memory_space<vmem>>, vector<16x16xf32>
    %c0_4 = arith.constant 0 : index
    %c0_5 = arith.constant 0 : index
    %3 = vector.load %arg3[%c0_4, %c0_5] : memref<16x32xf32, #tpu.memory_space<vmem>>, vector<16x32xf32>
    %c0_6 = arith.constant 0 : index
    %c0_7 = arith.constant 0 : index
    %4 = vector.load %arg4[%c0_6, %c0_7] : memref<32x32xf32, #tpu.memory_space<vmem>>, vector<32x32xf32>
    %cst = arith.constant dense<0.000000e+00> : vector<256x32xf32>
    %5 = tpu.matmul %1, %4, %cst {dimension_numbers = #tpu.dot_dimension_numbers<[1], [0], [0], [1], [0, 0, 1, 1], [], []>} : vector<256x32xf32>, vector<32x32xf32>, vector<256x32xf32> -> vector<256x32xf32>
    %c0_8 = arith.constant 0 : index
    %c0_9 = arith.constant 0 : index
    %6 = vector.load %arg5[%c0_8, %c0_9] : memref<1x32xf32, #tpu.memory_space<vmem>>, vector<1x32xf32>
    %7 = vector.broadcast %6 : vector<1x32xf32> to vector<256x32xf32>
    %8 = arith.addf %5, %7 : vector<256x32xf32>
    %9 = math.tanh %8 : vector<256x32xf32>
    %c0_10 = arith.constant 0 : index
    %c0_11 = arith.constant 0 : index
    %10 = vector.load %arg6[%c0_10, %c0_11] : memref<32x20xf32, #tpu.memory_space<vmem>>, vector<32x20xf32>
    %cst_12 = arith.constant dense<0.000000e+00> : vector<256x20xf32>
    %11 = tpu.matmul %9, %10, %cst_12 {dimension_numbers = #tpu.dot_dimension_numbers<[1], [0], [0], [1], [0, 0, 1, 1], [], []>} : vector<256x32xf32>, vector<32x20xf32>, vector<256x20xf32> -> vector<256x20xf32>
    %c0_13 = arith.constant 0 : index
    %c0_14 = arith.constant 0 : index
    %12 = vector.load %arg7[%c0_13, %c0_14] : memref<1x20xf32, #tpu.memory_space<vmem>>, vector<1x20xf32>
    %13 = vector.broadcast %12 : vector<1x20xf32> to vector<256x20xf32>
    %14 = arith.addf %11, %13 : vector<256x20xf32>
    %15 = vector.extract_strided_slice %14 {offsets = [0, 0], sizes = [256, 16], strides = [1, 1]} : vector<256x20xf32> to vector<256x16xf32>
    %16 = vector.extract_strided_slice %14 {offsets = [0, 16], sizes = [256, 4], strides = [1, 1]} : vector<256x20xf32> to vector<256x4xf32>
    %17 = arith.mulf %15, %15 : vector<256x16xf32>
    %cst_15 = arith.constant dense<0.000000e+00> : vector<256xf32>
    %18 = vector.multi_reduction <add>, %17, %cst_15 [1] : vector<256x16xf32> to vector<256xf32>
    %19 = vector.shape_cast %18 : vector<256xf32> to vector<256x1xf32>
    %20 = math.sqrt %19 : vector<256x1xf32>
    %cst_16 = arith.constant 1.000000e+00 : f32
    %21 = vector.broadcast %cst_16 : f32 to vector<256x1xf32>
    %22 = arith.addf %21, %19 : vector<256x1xf32>
    %cst_17 = arith.constant 1.000000e+00 : f32
    %23 = vector.broadcast %cst_17 : f32 to vector<256x1xf32>
    %24 = arith.divf %23, %22 : vector<256x1xf32>
    %25 = arith.mulf %20, %24 : vector<256x1xf32>
    %26 = vector.broadcast %25 : vector<256x1xf32> to vector<256x16xf32>
    %27 = arith.mulf %26, %15 : vector<256x16xf32>
    %28 = vector.broadcast %25 : vector<256x1xf32> to vector<256x4xf32>
    %29 = arith.mulf %28, %16 : vector<256x4xf32>
    %cst_18 = arith.constant dense<0xFF800000> : vector<256xf32>
    %30 = vector.multi_reduction <maximumf>, %29, %cst_18 [1] : vector<256x4xf32> to vector<256xf32>
    %31 = vector.shape_cast %30 : vector<256xf32> to vector<256x1xf32>
    %32 = vector.broadcast %31 : vector<256x1xf32> to vector<256x4xf32>
    %33 = arith.subf %29, %32 : vector<256x4xf32>
    %34 = math.exp %33 : vector<256x4xf32>
    %cst_19 = arith.constant dense<0.000000e+00> : vector<256xf32>
    %35 = vector.multi_reduction <add>, %34, %cst_19 [1] : vector<256x4xf32> to vector<256xf32>
    %36 = vector.shape_cast %35 : vector<256xf32> to vector<256x1xf32>
    %cst_20 = arith.constant 1.000000e+00 : f32
    %37 = vector.broadcast %cst_20 : f32 to vector<256x1xf32>
    %38 = arith.divf %37, %36 : vector<256x1xf32>
    %39 = vector.broadcast %38 : vector<256x1xf32> to vector<256x4xf32>
    %40 = arith.mulf %34, %39 : vector<256x4xf32>
    %c0_21 = arith.constant 0 : index
    %c0_22 = arith.constant 0 : index
    %41 = vector.load %arg8[%c0_21, %c0_22] : memref<32x16xf32, #tpu.memory_space<vmem>>, vector<32x16xf32>
    %cst_23 = arith.constant dense<0.000000e+00> : vector<16x16xf32>
    %42 = tpu.matmul %3, %41, %cst_23 {dimension_numbers = #tpu.dot_dimension_numbers<[1], [0], [0], [1], [0, 0, 1, 1], [], []>} : vector<16x32xf32>, vector<32x16xf32>, vector<16x16xf32> -> vector<16x16xf32>
    %c0_24 = arith.constant 0 : index
    %c0_25 = arith.constant 0 : index
    %43 = vector.load %arg9[%c0_24, %c0_25] : memref<1x16xf32, #tpu.memory_space<vmem>>, vector<1x16xf32>
    %44 = vector.broadcast %43 : vector<1x16xf32> to vector<16x16xf32>
    %45 = arith.addf %42, %44 : vector<16x16xf32>
    %46 = arith.mulf %45, %45 : vector<16x16xf32>
    %cst_26 = arith.constant dense<0.000000e+00> : vector<16xf32>
    %47 = vector.multi_reduction <add>, %46, %cst_26 [1] : vector<16x16xf32> to vector<16xf32>
    %48 = vector.shape_cast %47 : vector<16xf32> to vector<16x1xf32>
    %49 = math.sqrt %48 : vector<16x1xf32>
    %cst_27 = arith.constant 1.000000e+00 : f32
    %50 = vector.broadcast %cst_27 : f32 to vector<16x1xf32>
    %51 = arith.addf %50, %48 : vector<16x1xf32>
    %cst_28 = arith.constant 1.000000e+00 : f32
    %52 = vector.broadcast %cst_28 : f32 to vector<16x1xf32>
    %53 = arith.divf %52, %51 : vector<16x1xf32>
    %54 = arith.mulf %49, %53 : vector<16x1xf32>
    %55 = vector.broadcast %54 : vector<16x1xf32> to vector<16x16xf32>
    %56 = arith.mulf %55, %45 : vector<16x16xf32>
    %57 = vector.shape_cast %27 : vector<256x16xf32> to vector<16x16x16xf32>
    %c0_29 = arith.constant 0 : index
    %c0_30 = arith.constant 0 : index
    %58 = vector.load %arg10[%c0_29, %c0_30] : memref<16x16xf32, #tpu.memory_space<vmem>>, vector<16x16xf32>
    %cst_31 = arith.constant dense<0.000000e+00> : vector<16x16xf32>
    %59 = tpu.matmul %56, %58, %cst_31 {dimension_numbers = #tpu.dot_dimension_numbers<[1], [0], [0], [1], [0, 0, 1, 1], [], []>} : vector<16x16xf32>, vector<16x16xf32>, vector<16x16xf32> -> vector<16x16xf32>
    %60 = vector.shape_cast %59 : vector<16x16xf32> to vector<16x1x16xf32>
    "tpu.trace_start"() <{level = 10 : i32, message = "bqk,btk->bqt"}> : () -> ()
    %cst_32 = arith.constant dense<0.000000e+00> : vector<16x1x16xf32>
    %61 = tpu.matmul %60, %57, %cst_32 {dimension_numbers = #tpu.dot_dimension_numbers<[2], [2], [1], [1], [0, 0, 0, 1, 1, 1], [0], [0]>} : vector<16x1x16xf32>, vector<16x16x16xf32>, vector<16x1x16xf32> -> vector<16x1x16xf32>
    "tpu.trace_stop"() : () -> ()
    %62 = vector.shape_cast %61 : vector<16x1x16xf32> to vector<16x16xf32>
    %cst_33 = arith.constant 0.000000e+00 : f32
    %63 = vector.broadcast %cst_33 : f32 to vector<16x16xf32>
    %64 = arith.cmpf ogt, %2, %63 : vector<16x16xf32>
    %cst_34 = arith.constant -1.000000e+30 : f32
    %65 = vector.broadcast %cst_34 : f32 to vector<16x16xf32>
    %66 = arith.select %64, %62, %65 : vector<16x16xi1>, vector<16x16xf32>
    %cst_35 = arith.constant dense<0xFF800000> : vector<16xf32>
    %67 = vector.multi_reduction <maximumf>, %66, %cst_35 [1] : vector<16x16xf32> to vector<16xf32>
    %68 = vector.shape_cast %67 : vector<16xf32> to vector<16x1xf32>
    %69 = vector.broadcast %68 : vector<16x1xf32> to vector<16x16xf32>
    %70 = arith.subf %66, %69 : vector<16x16xf32>
    %71 = math.exp %70 : vector<16x16xf32>
    %cst_36 = arith.constant dense<0.000000e+00> : vector<16xf32>
    %72 = vector.multi_reduction <add>, %71, %cst_36 [1] : vector<16x16xf32> to vector<16xf32>
    %73 = vector.shape_cast %72 : vector<16xf32> to vector<16x1xf32>
    %cst_37 = arith.constant 1.000000e+00 : f32
    %74 = vector.broadcast %cst_37 : f32 to vector<16x1xf32>
    %75 = arith.divf %74, %73 : vector<16x1xf32>
    %76 = vector.broadcast %75 : vector<16x1xf32> to vector<16x16xf32>
    %77 = arith.mulf %71, %76 : vector<16x16xf32>
    %78 = vector.shape_cast %40 : vector<256x4xf32> to vector<16x16x4xf32>
    %c0_38 = arith.constant 0 : index
    %79 = memref.load %arg11[%c0_38] : memref<1xf32, #tpu.memory_space<smem>>
    %80 = vector.broadcast %79 : f32 to vector<16x16xf32>
    %81 = arith.mulf %77, %80 : vector<16x16xf32>
    %82 = vector.shape_cast %81 : vector<16x16xf32> to vector<16x16x1xf32>
    %83 = vector.broadcast %82 : vector<16x16x1xf32> to vector<16x16x4xf32>
    %84 = arith.mulf %78, %83 : vector<16x16x4xf32>
    %85 = vector.extract_strided_slice %84 {offsets = [0, 0, 0], sizes = [16, 16, 1], strides = [1, 1, 1]} : vector<16x16x4xf32> to vector<16x16x1xf32>
    %86 = vector.broadcast %85 : vector<16x16x1xf32> to vector<16x16x16xf32>
    %87 = arith.mulf %86, %57 : vector<16x16x16xf32>
    %cst_39 = arith.constant dense<0.000000e+00> : vector<16x16xf32>
    %88 = vector.multi_reduction <add>, %87, %cst_39 [1] : vector<16x16x16xf32> to vector<16x16xf32>
    %89 = arith.mulf %88, %88 : vector<16x16xf32>
    %cst_40 = arith.constant dense<0.000000e+00> : vector<16xf32>
    %90 = vector.multi_reduction <add>, %89, %cst_40 [1] : vector<16x16xf32> to vector<16xf32>
    %91 = vector.shape_cast %90 : vector<16xf32> to vector<16x1xf32>
    %92 = vector.extract_strided_slice %84 {offsets = [0, 0, 1], sizes = [16, 16, 1], strides = [1, 1, 1]} : vector<16x16x4xf32> to vector<16x16x1xf32>
    %93 = vector.broadcast %92 : vector<16x16x1xf32> to vector<16x16x16xf32>
    %94 = arith.mulf %93, %57 : vector<16x16x16xf32>
    %cst_41 = arith.constant dense<0.000000e+00> : vector<16x16xf32>
    %95 = vector.multi_reduction <add>, %94, %cst_41 [1] : vector<16x16x16xf32> to vector<16x16xf32>
    %96 = arith.mulf %95, %95 : vector<16x16xf32>
    %cst_42 = arith.constant dense<0.000000e+00> : vector<16xf32>
    %97 = vector.multi_reduction <add>, %96, %cst_42 [1] : vector<16x16xf32> to vector<16xf32>
    %98 = vector.shape_cast %97 : vector<16xf32> to vector<16x1xf32>
    %99 = vector.extract_strided_slice %84 {offsets = [0, 0, 2], sizes = [16, 16, 1], strides = [1, 1, 1]} : vector<16x16x4xf32> to vector<16x16x1xf32>
    %100 = vector.broadcast %99 : vector<16x16x1xf32> to vector<16x16x16xf32>
    %101 = arith.mulf %100, %57 : vector<16x16x16xf32>
    %cst_43 = arith.constant dense<0.000000e+00> : vector<16x16xf32>
    %102 = vector.multi_reduction <add>, %101, %cst_43 [1] : vector<16x16x16xf32> to vector<16x16xf32>
    %103 = arith.mulf %102, %102 : vector<16x16xf32>
    %cst_44 = arith.constant dense<0.000000e+00> : vector<16xf32>
    %104 = vector.multi_reduction <add>, %103, %cst_44 [1] : vector<16x16xf32> to vector<16xf32>
    %105 = vector.shape_cast %104 : vector<16xf32> to vector<16x1xf32>
    %106 = vector.extract_strided_slice %84 {offsets = [0, 0, 3], sizes = [16, 16, 1], strides = [1, 1, 1]} : vector<16x16x4xf32> to vector<16x16x1xf32>
    %107 = vector.broadcast %106 : vector<16x16x1xf32> to vector<16x16x16xf32>
    %108 = arith.mulf %107, %57 : vector<16x16x16xf32>
    %cst_45 = arith.constant dense<0.000000e+00> : vector<16x16xf32>
    %109 = vector.multi_reduction <add>, %108, %cst_45 [1] : vector<16x16x16xf32> to vector<16x16xf32>
    %110 = arith.mulf %109, %109 : vector<16x16xf32>
    %cst_46 = arith.constant dense<0.000000e+00> : vector<16xf32>
    %111 = vector.multi_reduction <add>, %110, %cst_46 [1] : vector<16x16xf32> to vector<16xf32>
    %112 = vector.shape_cast %111 : vector<16xf32> to vector<16x1xf32>
    %113 = tpu.concatenate %91, %98, %105, %112 in 1 : vector<16x1xf32>, vector<16x1xf32>, vector<16x1xf32>, vector<16x1xf32> -> vector<16x4xf32>
    %cst_47 = arith.constant 1.000000e+00 : f32
    %114 = vector.broadcast %cst_47 : f32 to vector<16x4xf32>
    %115 = arith.addf %114, %113 : vector<16x4xf32>
    %cst_48 = arith.constant 1.000000e+00 : f32
    %116 = vector.broadcast %cst_48 : f32 to vector<16x4xf32>
    %117 = arith.divf %116, %115 : vector<16x4xf32>
    %118 = arith.mulf %113, %117 : vector<16x4xf32>
    %c0_49 = arith.constant 0 : index
    %c0_50 = arith.constant 0 : index
    %119 = vector.load %arg12[%c0_49, %c0_50] : memref<16x4xf32, #tpu.memory_space<vmem>>, vector<16x4xf32>
    tpu.vector_store %arg12[%c0_49, %c0_50], %118 {strides = array<i32>} : memref<16x4xf32, #tpu.memory_space<vmem>>, vector<16x4xf32>,
    return
  }
  func.func @transform_0(%arg0: i32) -> (i32, i32, i32) {
    %c0_i32 = arith.constant 0 : i32
    %c0_i32_0 = arith.constant 0 : i32
    %c0_i32_1 = arith.constant 0 : i32
    return %arg0, %c0_i32, %c0_i32_0 : i32, i32, i32
  }
  func.func @transform_1(%arg0: i32) -> (i32, i32) {
    %c0_i32 = arith.constant 0 : i32
    %c0_i32_0 = arith.constant 0 : i32
    return %arg0, %c0_i32 : i32, i32
  }
  func.func @transform_2(%arg0: i32) -> (i32, i32) {
    %c0_i32 = arith.constant 0 : i32
    %c0_i32_0 = arith.constant 0 : i32
    return %arg0, %c0_i32 : i32, i32
  }
  func.func @transform_3(%arg0: i32) -> (i32, i32) {
    %c0_i32 = arith.constant 0 : i32
    %c0_i32_0 = arith.constant 0 : i32
    %c0_i32_1 = arith.constant 0 : i32
    return %c0_i32, %c0_i32_0 : i32, i32
  }
  func.func @transform_4(%arg0: i32) -> (i32, i32) {
    %c0_i32 = arith.constant 0 : i32
    %c0_i32_0 = arith.constant 0 : i32
    %c0_i32_1 = arith.constant 0 : i32
    return %c0_i32, %c0_i32_0 : i32, i32
  }
  func.func @transform_5(%arg0: i32) -> (i32, i32) {
    %c0_i32 = arith.constant 0 : i32
    %c0_i32_0 = arith.constant 0 : i32
    %c0_i32_1 = arith.constant 0 : i32
    return %c0_i32, %c0_i32_0 : i32, i32
  }
  func.func @transform_6(%arg0: i32) -> (i32, i32) {
    %c0_i32 = arith.constant 0 : i32
    %c0_i32_0 = arith.constant 0 : i32
    %c0_i32_1 = arith.constant 0 : i32
    return %c0_i32, %c0_i32_0 : i32, i32
  }
  func.func @transform_7(%arg0: i32) -> (i32, i32) {
    %c0_i32 = arith.constant 0 : i32
    %c0_i32_0 = arith.constant 0 : i32
    %c0_i32_1 = arith.constant 0 : i32
    return %c0_i32, %c0_i32_0 : i32, i32
  }
  func.func @transform_8(%arg0: i32) -> (i32, i32) {
    %c0_i32 = arith.constant 0 : i32
    %c0_i32_0 = arith.constant 0 : i32
    %c0_i32_1 = arith.constant 0 : i32
    return %c0_i32, %c0_i32_0 : i32, i32
  }
  func.func @transform_9(%arg0: i32) -> (i32, i32) {
    %c0_i32 = arith.constant 0 : i32
    %c0_i32_0 = arith.constant 0 : i32
    %c0_i32_1 = arith.constant 0 : i32
    return %c0_i32, %c0_i32_0 : i32, i32
  }
  func.func @transform_10(%arg0: i32) -> i32 {
    %c0_i32 = arith.constant 0 : i32
    %c0_i32_0 = arith.constant 0 : i32
    return %c0_i32 : i32
  }
  func.func @transform_11(%arg0: i32) -> (i32, i32) {
    %c0_i32 = arith.constant 0 : i32
    %c0_i32_0 = arith.constant 0 : i32
    return %arg0, %c0_i32 : i32, i32
  }
}

</mosaic_0001>

<llo_original>
// kernel: capsule_forward.1
$region0: #{capsule_forward.1}
  #allocation0 [shape = 'u32[]', space=smem, size = 0x4, offset = 0x4, fixed_abs, tag = 'smem constant byte address 0x4 - core index']
  #allocation1 [shape = 'u32[72,128]{1,0:T(1,128)}', space=vmem, size = 0x9000, scoped, tag = 'internal scratch']
  #allocation2 [shape = 'f32[1]{0:T(128)S(6)}', space=smem, size = 0x200, scoped, tag = 'scoped memory for capsule_forward.1']
  %s0 = inlined_call_operand.vmem [shape: f32[16,16,32], index: 0, kind: input, shape index: {}]
  %s1 = inlined_call_operand.vmem [shape: f32[16,16], index: 1, kind: input, shape index: {}]
  %s2 = inlined_call_operand.vmem [shape: f32[16,32], index: 2, kind: input, shape index: {}]
  %s3 = inlined_call_operand.vmem [shape: f32[32,32], index: 3, kind: input, shape index: {}]
  %s4 = inlined_call_operand.vmem [shape: f32[1,32], index: 4, kind: input, shape index: {}]
  %s5 = inlined_call_operand.vmem [shape: f32[32,20], index: 5, kind: input, shape index: {}]
  %s6 = inlined_call_operand.vmem [shape: f32[1,20], index: 6, kind: input, shape index: {}]
  %s7 = inlined_call_operand.vmem [shape: f32[32,16], index: 7, kind: input, shape index: {}]
  %s8 = inlined_call_operand.vmem [shape: f32[1,16], index: 8, kind: input, shape index: {}]
  %s9 = inlined_call_operand.vmem [shape: f32[16,16], index: 9, kind: input, shape index: {}]
  %s10 = inlined_call_operand.<no memory space> [shape: f32[1], index: 10, kind: input, shape index: {}]
  %s11 = inlined_call_operand.vmem [shape: f32[16,4], index: 11, kind: output, shape index: {}]
  %s12 = sld [smem:[#allocation0]]
  $region54: #{capsule_forward.1} parent=0
    _
  %s14 = ssub.s32 1, %s12
  %s15 = scalar_select 0, %s14, %s12
  %16 = sst [smem:[#allocation2]] %s10
  // Predicated region
  $region2: #{capsule_forward.1} parent=0 // pred_check
    _
  $region3: #{capsule_forward.1} parent=0 // pred_check_branch
    %18 = sbr.rel (0) target = $region5
  $region4: #{capsule_forward.1} parent=0 // pred_region
    _
  $region5: #{capsule_forward.1} parent=0 // pred_fallthru
    _
  // Predicated region
  $region6: #{capsule_forward.1} parent=0 // pred_check
    _
  $region7: #{capsule_forward.1} parent=0 // pred_check_branch
    %20 = sbr.rel (0) target = $region9
  $region8: #{capsule_forward.1} parent=0 // pred_region
    _
  $region9: #{capsule_forward.1} parent=0 // pred_fallthru
    _
  // Predicated region
  $region10: #{capsule_forward.1} parent=0 // pred_check
    _
  $region11: #{capsule_forward.1} parent=0 // pred_check_branch
    %22 = sbr.rel (0) target = $region13
  $region12: #{capsule_forward.1} parent=0 // pred_region
    _
  $region13: #{capsule_forward.1} parent=0 // pred_fallthru
    _
  // Predicated region
  $region14: #{capsule_forward.1} parent=0 // pred_check
    _
  $region15: #{capsule_forward.1} parent=0 // pred_check_branch
    %24 = sbr.rel (0) target = $region17
  $region16: #{capsule_forward.1} parent=0 // pred_region
    _
  $region17: #{capsule_forward.1} parent=0 // pred_fallthru
    _
  // Predicated region
  $region18: #{capsule_forward.1} parent=0 // pred_check
    _
  $region19: #{capsule_forward.1} parent=0 // pred_check_branch
    %26 = sbr.rel (0) target = $region21
  $region20: #{capsule_forward.1} parent=0 // pred_region
    _
  $region21: #{capsule_forward.1} parent=0 // pred_fallthru
    _
  // Predicated region
  $region22: #{capsule_forward.1} parent=0 // pred_check
    _
  $region23: #{capsule_forward.1} parent=0 // pred_check_branch
    %28 = sbr.rel (0) target = $region25
  $region24: #{capsule_forward.1} parent=0 // pred_region
    _
  $region25: #{capsule_forward.1} parent=0 // pred_fallthru
    _
  // Predicated region
  $region26: #{capsule_forward.1} parent=0 // pred_check
    _
  $region27: #{capsule_forward.1} parent=0 // pred_check_branch
    %30 = sbr.rel (0) target = $region29
  $region28: #{capsule_forward.1} parent=0 // pred_region
    _
  $region29: #{capsule_forward.1} parent=0 // pred_fallthru
    _
  // Predicated region
  $region30: #{capsule_forward.1} parent=0 // pred_check
    _
  $region31: #{capsule_forward.1} parent=0 // pred_check_branch
    %32 = sbr.rel (0) target = $region33
  $region32: #{capsule_forward.1} parent=0 // pred_region
    _
  $region33: #{capsule_forward.1} parent=0 // pred_fallthru
    _
  // Predicated region
  $region34: #{capsule_forward.1} parent=0 // pred_check
    _
  $region35: #{capsule_forward.1} parent=0 // pred_check_branch
    %34 = sbr.rel (0) target = $region37
  $region36: #{capsule_forward.1} parent=0 // pred_region
    _
  $region37: #{capsule_forward.1} parent=0 // pred_fallthru
    _
  // Predicated region
  $region38: #{capsule_forward.1} parent=0 // pred_check
    _
  $region39: #{capsule_forward.1} parent=0 // pred_check_branch
    %36 = sbr.rel (0) target = $region41
  $region40: #{capsule_forward.1} parent=0 // pred_region
    _
  $region41: #{capsule_forward.1} parent=0 // pred_fallthru
    _
  // Predicated region
  $region42: #{capsule_forward.1} parent=0 // pred_check
    _
  $region43: #{capsule_forward.1} parent=0 // pred_check_branch
    %38 = sbr.rel (0) target = $region45
  $region44: #{capsule_forward.1} parent=0 // pred_region
    _
  $region45: #{capsule_forward.1} parent=0 // pred_fallthru
    _
  %v39 = vld [vmem:[%s0] sm:$0xff]
  %v40 = vld [vmem:[%s0 + $0x8] sm:$0xff]
  %v41 = vld [vmem:[%s0 + $0x10] sm:$0xff]
  %v42 = vld [vmem:[%s0 + $0x18] sm:$0xff]
  %v43 = vld [vmem:[%s0 + $0x20] sm:$0xff]
  %v44 = vld [vmem:[%s0 + $0x28] sm:$0xff]
  %v45 = vld [vmem:[%s0 + $0x30] sm:$0xff]
  %v46 = vld [vmem:[%s0 + $0x38] sm:$0xff]
  %v47 = vld [vmem:[%s0 + $0x40] sm:$0xff]
  %v48 = vld [vmem:[%s0 + $0x48] sm:$0xff]
  %v49 = vld [vmem:[%s0 + $0x50] sm:$0xff]
  %v50 = vld [vmem:[%s0 + $0x58] sm:$0xff]
  %v51 = vld [vmem:[%s0 + $0x60] sm:$0xff]
  %v52 = vld [vmem:[%s0 + $0x68] sm:$0xff]
  %v53 = vld [vmem:[%s0 + $0x70] sm:$0xff]
  %v54 = vld [vmem:[%s0 + $0x78] sm:$0xff]
  %v55 = vld [vmem:[%s0 + $0x80] sm:$0xff]
  %v56 = vld [vmem:[%s0 + $0x88] sm:$0xff]
  %v57 = vld [vmem:[%s0 + $0x90] sm:$0xff]
  %v58 = vld [vmem:[%s0 + $0x98] sm:$0xff]
  %v59 = vld [vmem:[%s0 + $0xa0] sm:$0xff]
  %v60 = vld [vmem:[%s0 + $0xa8] sm:$0xff]
  %v61 = vld [vmem:[%s0 + $0xb0] sm:$0xff]
  %v62 = vld [vmem:[%s0 + $0xb8] sm:$0xff]
  %v63 = vld [vmem:[%s0 + $0xc0] sm:$0xff]
  %v64 = vld [vmem:[%s0 + $0xc8] sm:$0xff]
  %v65 = vld [vmem:[%s0 + $0xd0] sm:$0xff]
  %v66 = vld [vmem:[%s0 + $0xd8] sm:$0xff]
  %v67 = vld [vmem:[%s0 + $0xe0] sm:$0xff]
  %v68 = vld [vmem:[%s0 + $0xe8] sm:$0xff]
  %v69 = vld [vmem:[%s0 + $0xf0] sm:$0xff]
  %v70 = vld [vmem:[%s0 + $0xf8] sm:$0xff]
  %v71 = vld [vmem:[%s1] sm:$0xff]
  %v72 = vld [vmem:[%s1 + $0x8] sm:$0xff]
  %v73 = vld [vmem:[%s2] sm:$0xff]
  %v74 = vld [vmem:[%s2 + $0x8] sm:$0xff]
  %v75 = vld [vmem:[%s3] sm:$0xff]
  %v76 = vld [vmem:[%s3 + $0x8] sm:$0xff]
  %v77 = vld [vmem:[%s3 + $0x10] sm:$0xff]
  %v78 = vld [vmem:[%s3 + $0x18] sm:$0xff]
  %v79 = vld [vmem:[%s4] sm:$0x1]
  %v81 = vperm.slane %v79, 0
  %vm83 = vcmask 261120
  %v85 = vsel %vm83, %v39, 0
  %v88 = vsel %vm83, %v40, 0
  %v91 = vsel %vm83, %v41, 0
  %v94 = vsel %vm83, %v42, 0
  %v97 = vsel %vm83, %v43, 0
  %v100 = vsel %vm83, %v44, 0
  %v103 = vsel %vm83, %v45, 0
  %v106 = vsel %vm83, %v46, 0
  %v109 = vsel %vm83, %v47, 0
  %v112 = vsel %vm83, %v48, 0
  %v115 = vsel %vm83, %v49, 0
  %v118 = vsel %vm83, %v50, 0
  %v121 = vsel %vm83, %v51, 0
  %v124 = vsel %vm83, %v52, 0
  %v127 = vsel %vm83, %v53, 0
  %v130 = vsel %vm83, %v54, 0
  %v133 = vsel %vm83, %v55, 0
  %v136 = vsel %vm83, %v56, 0
  %v139 = vsel %vm83, %v57, 0
  %v142 = vsel %vm83, %v58, 0
  %v145 = vsel %vm83, %v59, 0
  %v148 = vsel %vm83, %v60, 0
  %v151 = vsel %vm83, %v61, 0
  %v154 = vsel %vm83, %v62, 0
  %v157 = vsel %vm83, %v63, 0
  %v160 = vsel %vm83, %v64, 0
  %v163 = vsel %vm83, %v65, 0
  %v166 = vsel %vm83, %v66, 0
  %v169 = vsel %vm83, %v67, 0
  %v172 = vsel %vm83, %v68, 0
  %v175 = vsel %vm83, %v69, 0
  %v178 = vsel %vm83, %v70, 0
  %180 = vmatpush.msra.mxu0 0.0
  %181 = vmatpush.msra.mxu0 0.0
  %182 = vmatpush.msra.mxu0 0.0
  %183 = vmatpush.msra.mxu0 0.0
  %184 = vmatpush.msra.mxu0 0.0
  %185 = vmatpush.msra.mxu0 0.0
  %186 = vmatpush.msra.mxu0 0.0
  %187 = vmatpush.msra.mxu0 0.0
  %188 = vmatpush.msra.mxu0 0.0
  %189 = vmatpush.msra.mxu0 0.0
  %190 = vmatpush.msra.mxu0 0.0
  %191 = vmatpush.msra.mxu0 0.0
  %192 = vmatpush.msra.mxu0 %v78
  %193 = vmatpush.msra.mxu0 %v77
  %194 = vmatpush.msra.mxu0 %v76
  %195 = vmatpush.msra.mxu0 %v75
  %196 = vmatmul.f32.gmra.mxu0 %v85
  %v197 = vpop.f32.mrf.mxu0
  %v198 = vadd.f32 %v81, %v197
  %199 = vmatmul.f32.gmra.mxu0 %v88
  %v200 = vpop.f32.mrf.mxu0
  %v201 = vadd.f32 %v81, %v200
  %202 = vmatmul.f32.gmra.mxu0 %v91
  %v203 = vpop.f32.mrf.mxu0
  %v204 = vadd.f32 %v81, %v203
  %205 = vmatmul.f32.gmra.mxu0 %v94
  %v206 = vpop.f32.mrf.mxu0
  %v207 = vadd.f32 %v81, %v206
  %208 = vmatmul.f32.gmra.mxu0 %v97
  %v209 = vpop.f32.mrf.mxu0
  %v210 = vadd.f32 %v81, %v209
  %211 = vmatmul.f32.gmra.mxu0 %v100
  %v212 = vpop.f32.mrf.mxu0
  %v213 = vadd.f32 %v81, %v212
  %214 = vmatmul.f32.gmra.mxu0 %v103
  %v215 = vpop.f32.mrf.mxu0
  %v216 = vadd.f32 %v81, %v215
  %217 = vmatmul.f32.gmra.mxu0 %v106
  %v218 = vpop.f32.mrf.mxu0
  %v219 = vadd.f32 %v81, %v218
  %220 = vmatmul.f32.gmra.mxu0 %v109
  %v221 = vpop.f32.mrf.mxu0
  %v222 = vadd.f32 %v81, %v221
  %223 = vmatmul.f32.gmra.mxu0 %v112
  %v224 = vpop.f32.mrf.mxu0
  %v225 = vadd.f32 %v81, %v224
  %226 = vmatmul.f32.gmra.mxu0 %v115
  %v227 = vpop.f32.mrf.mxu0
  %v228 = vadd.f32 %v81, %v227
  %229 = vmatmul.f32.gmra.mxu0 %v118
  %v230 = vpop.f32.mrf.mxu0
  %v231 = vadd.f32 %v81, %v230
  %232 = vmatmul.f32.gmra.mxu0 %v121
  %v233 = vpop.f32.mrf.mxu0
  %v234 = vadd.f32 %v81, %v233
  %235 = vmatmul.f32.gmra.mxu0 %v124
  %v236 = vpop.f32.mrf.mxu0
  %v237 = vadd.f32 %v81, %v236
  %238 = vmatmul.f32.gmra.mxu0 %v127
  %v239 = vpop.f32.mrf.mxu0
  %v240 = vadd.f32 %v81, %v239
  %241 = vmatmul.f32.gmra.mxu0 %v130
  %v242 = vpop.f32.mrf.mxu0
  %v243 = vadd.f32 %v81, %v242
  %244 = vmatmul.f32.gmra.mxu0 %v133
  %v245 = vpop.f32.mrf.mxu0
  %v246 = vadd.f32 %v81, %v245
  %247 = vmatmul.f32.gmra.mxu0 %v136
  %v248 = vpop.f32.mrf.mxu0
  %v249 = vadd.f32 %v81, %v248
  %250 = vmatmul.f32.gmra.mxu0 %v139
  %v251 = vpop.f32.mrf.mxu0
  %v252 = vadd.f32 %v81, %v251
  %253 = vmatmul.f32.gmra.mxu0 %v142
  %v254 = vpop.f32.mrf.mxu0
  %v255 = vadd.f32 %v81, %v254
  %256 = vmatmul.f32.gmra.mxu0 %v145
  %v257 = vpop.f32.mrf.mxu0
  %v258 = vadd.f32 %v81, %v257
  %259 = vmatmul.f32.gmra.mxu0 %v148
  %v260 = vpop.f32.mrf.mxu0
  %v261 = vadd.f32 %v81, %v260
  %262 = vmatmul.f32.gmra.mxu0 %v151
  %v263 = vpop.f32.mrf.mxu0
  %v264 = vadd.f32 %v81, %v263
  %265 = vmatmul.f32.gmra.mxu0 %v154
  %v266 = vpop.f32.mrf.mxu0
  %v267 = vadd.f32 %v81, %v266
  %268 = vmatmul.f32.gmra.mxu0 %v157
  %v269 = vpop.f32.mrf.mxu0
  %v270 = vadd.f32 %v81, %v269
  %271 = vmatmul.f32.gmra.mxu0 %v160
  %v272 = vpop.f32.mrf.mxu0
  %v273 = vadd.f32 %v81, %v272
  %274 = vmatmul.f32.gmra.mxu0 %v163
  %v275 = vpop.f32.mrf.mxu0
  %v276 = vadd.f32 %v81, %v275
  %277 = vmatmul.f32.gmra.mxu0 %v166
  %v278 = vpop.f32.mrf.mxu0
  %v279 = vadd.f32 %v81, %v278
  %280 = vmatmul.f32.gmra.mxu0 %v169
  %v281 = vpop.f32.mrf.mxu0
  %v282 = vadd.f32 %v81, %v281
  %283 = vmatmul.f32.gmra.mxu0 %v172
  %v284 = vpop.f32.mrf.mxu0
  %v285 = vadd.f32 %v81, %v284
  %286 = vmatmul.f32.gmra.mxu0 %v175
  %v287 = vpop.f32.mrf.mxu0
  %v288 = vadd.f32 %v81, %v287
  %289 = vmatmul.f32.gmra.mxu0 %v178
  %v290 = vpop.f32.mrf.mxu0
  %v291 = vadd.f32 %v81, %v290
  %292 = vdwg.mxu0
  %v293 = vtanh.pop %v198
  %v294 = vtanh.pop %v201
  %v295 = vtanh.pop %v204
  %v296 = vtanh.pop %v207
  %v297 = vtanh.pop %v210
  %v298 = vtanh.pop %v213
  %v299 = vtanh.pop %v216
  %v300 = vtanh.pop %v219
  %v301 = vtanh.pop %v222
  %v302 = vtanh.pop %v225
  %v303 = vtanh.pop %v228
  %v304 = vtanh.pop %v231
  %v305 = vtanh.pop %v234
  %v306 = vtanh.pop %v237
  %v307 = vtanh.pop %v240
  %v308 = vtanh.pop %v243
  %v309 = vtanh.pop %v246
  %v310 = vtanh.pop %v249
  %v311 = vtanh.pop %v252
  %v312 = vtanh.pop %v255
  %v313 = vtanh.pop %v258
  %v314 = vtanh.pop %v261
  %v315 = vtanh.pop %v264
  %v316 = vtanh.pop %v267
  %v317 = vtanh.pop %v270
  %v318 = vtanh.pop %v273
  %v319 = vtanh.pop %v276
  %v320 = vtanh.pop %v279
  %v321 = vtanh.pop %v282
  %v322 = vtanh.pop %v285
  %v323 = vtanh.pop %v288
  %v324 = vtanh.pop %v291
  %v325 = vld [vmem:[%s5] sm:$0xff]
  %v326 = vld [vmem:[%s5 + $0x8] sm:$0xff]
  %v327 = vld [vmem:[%s5 + $0x10] sm:$0xff]
  %v328 = vld [vmem:[%s5 + $0x18] sm:$0xff]
  %v329 = vld [vmem:[%s6] sm:$0x1]
  %v331 = vperm.slane %v329, 0
  %v334 = vsel %vm83, %v293, 0
  %v337 = vsel %vm83, %v294, 0
  %v340 = vsel %vm83, %v295, 0
  %v343 = vsel %vm83, %v296, 0
  %v346 = vsel %vm83, %v297, 0
  %v349 = vsel %vm83, %v298, 0
  %v352 = vsel %vm83, %v299, 0
  %v355 = vsel %vm83, %v300, 0
  %v358 = vsel %vm83, %v301, 0
  %v361 = vsel %vm83, %v302, 0
  %v364 = vsel %vm83, %v303, 0
  %v367 = vsel %vm83, %v304, 0
  %v370 = vsel %vm83, %v305, 0
  %v373 = vsel %vm83, %v306, 0
  %v376 = vsel %vm83, %v307, 0
  %v379 = vsel %vm83, %v308, 0
  %v382 = vsel %vm83, %v309, 0
  %v385 = vsel %vm83, %v310, 0
  %v388 = vsel %vm83, %v311, 0
  %v391 = vsel %vm83, %v312, 0
  %v394 = vsel %vm83, %v313, 0
  %v397 = vsel %vm83, %v314, 0
  %v400 = vsel %vm83, %v315, 0
  %v403 = vsel %vm83, %v316, 0
  %v406 = vsel %vm83, %v317, 0
  %v409 = vsel %vm83, %v318, 0
  %v412 = vsel %vm83, %v319, 0
  %v415 = vsel %vm83, %v320, 0
  %v418 = vsel %vm83, %v321, 0
  %v421 = vsel %vm83, %v322, 0
  %v424 = vsel %vm83, %v323, 0
  %v427 = vsel %vm83, %v324, 0
  %429 = vmatpush.msra.mxu0 0.0
  %430 = vmatpush.msra.mxu0 0.0
  %431 = vmatpush.msra.mxu0 0.0
  %432 = vmatpush.msra.mxu0 0.0
  %433 = vmatpush.msra.mxu0 0.0
  %434 = vmatpush.msra.mxu0 0.0
  %435 = vmatpush.msra.mxu0 0.0
  %436 = vmatpush.msra.mxu0 0.0
  %437 = vmatpush.msra.mxu0 0.0
  %438 = vmatpush.msra.mxu0 0.0
  %439 = vmatpush.msra.mxu0 0.0
  %440 = vmatpush.msra.mxu0 0.0
  %441 = vmatpush.msra.mxu0 %v328
  %442 = vmatpush.msra.mxu0 %v327
  %443 = vmatpush.msra.mxu0 %v326
  %444 = vmatpush.msra.mxu0 %v325
  %445 = vmatmul.f32.gmra.mxu0 %v334
  %v446 = vpop.f32.mrf.mxu0
  %v447 = vadd.f32 %v331, %v446
  %448 = vmatmul.f32.gmra.mxu0 %v337
  %v449 = vpop.f32.mrf.mxu0
  %v450 = vadd.f32 %v331, %v449
  %451 = vmatmul.f32.gmra.mxu0 %v340
  %v452 = vpop.f32.mrf.mxu0
  %v453 = vadd.f32 %v331, %v452
  %454 = vmatmul.f32.gmra.mxu0 %v343
  %v455 = vpop.f32.mrf.mxu0
  %v456 = vadd.f32 %v331, %v455
  %457 = vmatmul.f32.gmra.mxu0 %v346
  %v458 = vpop.f32.mrf.mxu0
  %v459 = vadd.f32 %v331, %v458
  %460 = vmatmul.f32.gmra.mxu0 %v349
  %v461 = vpop.f32.mrf.mxu0
  %v462 = vadd.f32 %v331, %v461
  %463 = vmatmul.f32.gmra.mxu0 %v352
  %v464 = vpop.f32.mrf.mxu0
  %v465 = vadd.f32 %v331, %v464
  %466 = vmatmul.f32.gmra.mxu0 %v355
  %v467 = vpop.f32.mrf.mxu0
  %v468 = vadd.f32 %v331, %v467
  %469 = vmatmul.f32.gmra.mxu0 %v358
  %v470 = vpop.f32.mrf.mxu0
  %v471 = vadd.f32 %v331, %v470
  %472 = vmatmul.f32.gmra.mxu0 %v361
  %v473 = vpop.f32.mrf.mxu0
  %v474 = vadd.f32 %v331, %v473
  %475 = vmatmul.f32.gmra.mxu0 %v364
  %v476 = vpop.f32.mrf.mxu0
  %v477 = vadd.f32 %v331, %v476
  %478 = vmatmul.f32.gmra.mxu0 %v367
  %v479 = vpop.f32.mrf.mxu0
  %v480 = vadd.f32 %v331, %v479
  %481 = vmatmul.f32.gmra.mxu0 %v370
  %v482 = vpop.f32.mrf.mxu0
  %v483 = vadd.f32 %v331, %v482
  %484 = vmatmul.f32.gmra.mxu0 %v373
  %v485 = vpop.f32.mrf.mxu0
  %v486 = vadd.f32 %v331, %v485
  %487 = vmatmul.f32.gmra.mxu0 %v376
  %v488 = vpop.f32.mrf.mxu0
  %v489 = vadd.f32 %v331, %v488
  %490 = vmatmul.f32.gmra.mxu0 %v379
  %v491 = vpop.f32.mrf.mxu0
  %v492 = vadd.f32 %v331, %v491
  %493 = vmatmul.f32.gmra.mxu0 %v382
  %v494 = vpop.f32.mrf.mxu0
  %v495 = vadd.f32 %v331, %v494
  %496 = vmatmul.f32.gmra.mxu0 %v385
  %v497 = vpop.f32.mrf.mxu0
  %v498 = vadd.f32 %v331, %v497
  %499 = vmatmul.f32.gmra.mxu0 %v388
  %v500 = vpop.f32.mrf.mxu0
  %v501 = vadd.f32 %v331, %v500
  %502 = vmatmul.f32.gmra.mxu0 %v391
  %v503 = vpop.f32.mrf.mxu0
  %v504 = vadd.f32 %v331, %v503
  %505 = vmatmul.f32.gmra.mxu0 %v394
  %v506 = vpop.f32.mrf.mxu0
  %v507 = vadd.f32 %v331, %v506
  %508 = vmatmul.f32.gmra.mxu0 %v397
  %v509 = vpop.f32.mrf.mxu0
  %v510 = vadd.f32 %v331, %v509
  %511 = vmatmul.f32.gmra.mxu0 %v400
  %v512 = vpop.f32.mrf.mxu0
  %v513 = vadd.f32 %v331, %v512
  %514 = vmatmul.f32.gmra.mxu0 %v403
  %v515 = vpop.f32.mrf.mxu0
  %v516 = vadd.f32 %v331, %v515
  %517 = vmatmul.f32.gmra.mxu0 %v406
  %v518 = vpop.f32.mrf.mxu0
  %v519 = vadd.f32 %v331, %v518
  %520 = vmatmul.f32.gmra.mxu0 %v409
  %v521 = vpop.f32.mrf.mxu0
  %v522 = vadd.f32 %v331, %v521
  %523 = vmatmul.f32.gmra.mxu0 %v412
  %v524 = vpop.f32.mrf.mxu0
  %v525 = vadd.f32 %v331, %v524
  %526 = vmatmul.f32.gmra.mxu0 %v415
  %v527 = vpop.f32.mrf.mxu0
  %v528 = vadd.f32 %v331, %v527
  %529 = vmatmul.f32.gmra.mxu0 %v418
  %v530 = vpop.f32.mrf.mxu0
  %v531 = vadd.f32 %v331, %v530
  %532 = vmatmul.f32.gmra.mxu0 %v421
  %v533 = vpop.f32.mrf.mxu0
  %v534 = vadd.f32 %v331, %v533
  %535 = vmatmul.f32.gmra.mxu0 %v424
  %v536 = vpop.f32.mrf.mxu0
  %v537 = vadd.f32 %v331, %v536
  %538 = vmatmul.f32.gmra.mxu0 %v427
  %v539 = vpop.f32.mrf.mxu0
  %v540 = vadd.f32 %v331, %v539
  %541 = vdwg.mxu0
  %v542 = vmul.f32 %v447, %v447
  %v543 = vmul.f32 %v450, %v450
  %v544 = vmul.f32 %v453, %v453
  %v545 = vmul.f32 %v456, %v456
  %v546 = vmul.f32 %v459, %v459
  %v547 = vmul.f32 %v462, %v462
  %v548 = vmul.f32 %v465, %v465
  %v549 = vmul.f32 %v468, %v468
  %v550 = vmul.f32 %v471, %v471
  %v551 = vmul.f32 %v474, %v474
  %v552 = vmul.f32 %v477, %v477
  %v553 = vmul.f32 %v480, %v480
  %v554 = vmul.f32 %v483, %v483
  %v555 = vmul.f32 %v486, %v486
  %v556 = vmul.f32 %v489, %v489
  %v557 = vmul.f32 %v492, %v492
  %v558 = vmul.f32 %v495, %v495
  %v559 = vmul.f32 %v498, %v498
  %v560 = vmul.f32 %v501, %v501
  %v561 = vmul.f32 %v504, %v504
  %v562 = vmul.f32 %v507, %v507
  %v563 = vmul.f32 %v510, %v510
  %v564 = vmul.f32 %v513, %v513
  %v565 = vmul.f32 %v516, %v516
  %v566 = vmul.f32 %v519, %v519
  %v567 = vmul.f32 %v522, %v522
  %v568 = vmul.f32 %v525, %v525
  %v569 = vmul.f32 %v528, %v528
  %v570 = vmul.f32 %v531, %v531
  %v571 = vmul.f32 %v534, %v534
  %v572 = vmul.f32 %v537, %v537
  %v573 = vmul.f32 %v540, %v540
  %vm574 = vcmask 130048
  %v575 = vsel %vm574, %v542, 0.0
  %576 = vadd.xlane.f32.xlu0 %v575
  %v577 = vpop.xlane.xlu0 %576
  %v578 = vsel %vm574, %v543, 0.0
  %579 = vadd.xlane.f32.xlu0 %v578
  %v580 = vpop.xlane.xlu0 %579
  %v581 = vsel %vm574, %v544, 0.0
  %582 = vadd.xlane.f32.xlu0 %v581
  %v583 = vpop.xlane.xlu0 %582
  %v584 = vsel %vm574, %v545, 0.0
  %585 = vadd.xlane.f32.xlu0 %v584
  %v586 = vpop.xlane.xlu0 %585
  %v587 = vsel %vm574, %v546, 0.0
  %588 = vadd.xlane.f32.xlu0 %v587
  %v589 = vpop.xlane.xlu0 %588
  %v590 = vsel %vm574, %v547, 0.0
  %591 = vadd.xlane.f32.xlu0 %v590
  %v592 = vpop.xlane.xlu0 %591
  %v593 = vsel %vm574, %v548, 0.0
  %594 = vadd.xlane.f32.xlu0 %v593
  %v595 = vpop.xlane.xlu0 %594
  %v596 = vsel %vm574, %v549, 0.0
  %597 = vadd.xlane.f32.xlu0 %v596
  %v598 = vpop.xlane.xlu0 %597
  %v599 = vsel %vm574, %v550, 0.0
  %600 = vadd.xlane.f32.xlu0 %v599
  %v601 = vpop.xlane.xlu0 %600
  %v602 = vsel %vm574, %v551, 0.0
  %603 = vadd.xlane.f32.xlu0 %v602
  %v604 = vpop.xlane.xlu0 %603
  %v605 = vsel %vm574, %v552, 0.0
  %606 = vadd.xlane.f32.xlu0 %v605
  %v607 = vpop.xlane.xlu0 %606
  %v608 = vsel %vm574, %v553, 0.0
  %609 = vadd.xlane.f32.xlu0 %v608
  %v610 = vpop.xlane.xlu0 %609
  %v611 = vsel %vm574, %v554, 0.0
  %612 = vadd.xlane.f32.xlu0 %v611
  %v613 = vpop.xlane.xlu0 %612
  %v614 = vsel %vm574, %v555, 0.0
  %615 = vadd.xlane.f32.xlu0 %v614
  %v616 = vpop.xlane.xlu0 %615
  %v617 = vsel %vm574, %v556, 0.0
  %618 = vadd.xlane.f32.xlu0 %v617
  %v619 = vpop.xlane.xlu0 %618
  %v620 = vsel %vm574, %v557, 0.0
  %621 = vadd.xlane.f32.xlu0 %v620
  %v622 = vpop.xlane.xlu0 %621
  %v623 = vsel %vm574, %v558, 0.0
  %624 = vadd.xlane.f32.xlu0 %v623
  %v625 = vpop.xlane.xlu0 %624
  %v626 = vsel %vm574, %v559, 0.0
  %627 = vadd.xlane.f32.xlu0 %v626
  %v628 = vpop.xlane.xlu0 %627
  %v629 = vsel %vm574, %v560, 0.0
  %630 = vadd.xlane.f32.xlu0 %v629
  %v631 = vpop.xlane.xlu0 %630
  %v632 = vsel %vm574, %v561, 0.0
  %633 = vadd.xlane.f32.xlu0 %v632
  %v634 = vpop.xlane.xlu0 %633
  %v635 = vsel %vm574, %v562, 0.0
  %636 = vadd.xlane.f32.xlu0 %v635
  %v637 = vpop.xlane.xlu0 %636
  %v638 = vsel %vm574, %v563, 0.0
  %639 = vadd.xlane.f32.xlu0 %v638
  %v640 = vpop.xlane.xlu0 %639
  %v641 = vsel %vm574, %v564, 0.0
  %642 = vadd.xlane.f32.xlu0 %v641
  %v643 = vpop.xlane.xlu0 %642
  %v644 = vsel %vm574, %v565, 0.0
  %645 = vadd.xlane.f32.xlu0 %v644
  %v646 = vpop.xlane.xlu0 %645
  %v647 = vsel %vm574, %v566, 0.0
  %648 = vadd.xlane.f32.xlu0 %v647
  %v649 = vpop.xlane.xlu0 %648
  %v650 = vsel %vm574, %v567, 0.0
  %651 = vadd.xlane.f32.xlu0 %v650
  %v652 = vpop.xlane.xlu0 %651
  %v653 = vsel %vm574, %v568, 0.0
  %654 = vadd.xlane.f32.xlu0 %v653
  %v655 = vpop.xlane.xlu0 %654
  %v656 = vsel %vm574, %v569, 0.0
  %657 = vadd.xlane.f32.xlu0 %v656
  %v658 = vpop.xlane.xlu0 %657
  %v659 = vsel %vm574, %v570, 0.0
  %660 = vadd.xlane.f32.xlu0 %v659
  %v661 = vpop.xlane.xlu0 %660
  %v662 = vsel %vm574, %v571, 0.0
  %663 = vadd.xlane.f32.xlu0 %v662
  %v664 = vpop.xlane.xlu0 %663
  %v665 = vsel %vm574, %v572, 0.0
  %666 = vadd.xlane.f32.xlu0 %v665
  %v667 = vpop.xlane.xlu0 %666
  %v668 = vsel %vm574, %v573, 0.0
  %669 = vadd.xlane.f32.xlu0 %v668
  %v670 = vpop.xlane.xlu0 %669
  %v671 = vrsqrt.pop %v577
  %v672 = vmul.f32 %v671, %v577
  %v673 = vmul.f32 %v672, %v671
  %v674 = vmul.f32 0.5, %v673
  %v675 = vsub.f32 1.5, %v674
  %v676 = vmul.f32 %v671, %v675
  %v677 = vmul.f32 %v577, %v676
  %vm678 = vcmp.eq.f32.partialorder %v577, inf
  %v679 = vsel %vm678, %v577, %v677
  %vm680 = vcmp.eq.f32.partialorder %v577, 0.0
  %v681 = vand.u32 %v577, 2147483648
  %v682 = vsel %vm680, %v681, %v679
  %v683 = vrsqrt.pop %v580
  %v684 = vmul.f32 %v683, %v580
  %v685 = vmul.f32 %v684, %v683
  %v686 = vmul.f32 0.5, %v685
  %v687 = vsub.f32 1.5, %v686
  %v688 = vmul.f32 %v683, %v687
  %v689 = vmul.f32 %v580, %v688
  %vm690 = vcmp.eq.f32.partialorder %v580, inf
  %v691 = vsel %vm690, %v580, %v689
  %vm692 = vcmp.eq.f32.partialorder %v580, 0.0
  %v693 = vand.u32 %v580, 2147483648
  %v694 = vsel %vm692, %v693, %v691
  %v695 = vrsqrt.pop %v583
  %v696 = vmul.f32 %v695, %v583
  %v697 = vmul.f32 %v696, %v695
  %v698 = vmul.f32 0.5, %v697
  %v699 = vsub.f32 1.5, %v698
  %v700 = vmul.f32 %v695, %v699
  %v701 = vmul.f32 %v583, %v700
  %vm702 = vcmp.eq.f32.partialorder %v583, inf
  %v703 = vsel %vm702, %v583, %v701
  %vm704 = vcmp.eq.f32.partialorder %v583, 0.0
  %v705 = vand.u32 %v583, 2147483648
  %v706 = vsel %vm704, %v705, %v703
  %v707 = vrsqrt.pop %v586
  %v708 = vmul.f32 %v707, %v586
  %v709 = vmul.f32 %v708, %v707
  %v710 = vmul.f32 0.5, %v709
  %v711 = vsub.f32 1.5, %v710
  %v712 = vmul.f32 %v707, %v711
  %v713 = vmul.f32 %v586, %v712
  %vm714 = vcmp.eq.f32.partialorder %v586, inf
  %v715 = vsel %vm714, %v586, %v713
  %vm716 = vcmp.eq.f32.partialorder %v586, 0.0
  %v717 = vand.u32 %v586, 2147483648
  %v718 = vsel %vm716, %v717, %v715
  %v719 = vrsqrt.pop %v589
  %v720 = vmul.f32 %v719, %v589
  %v721 = vmul.f32 %v720, %v719
  %v722 = vmul.f32 0.5, %v721
  %v723 = vsub.f32 1.5, %v722
  %v724 = vmul.f32 %v719, %v723
  %v725 = vmul.f32 %v589, %v724
  %vm726 = vcmp.eq.f32.partialorder %v589, inf
  %v727 = vsel %vm726, %v589, %v725
  %vm728 = vcmp.eq.f32.partialorder %v589, 0.0
  %v729 = vand.u32 %v589, 2147483648
  %v730 = vsel %vm728, %v729, %v727
  %v731 = vrsqrt.pop %v592
  %v732 = vmul.f32 %v731, %v592
  %v733 = vmul.f32 %v732, %v731
  %v734 = vmul.f32 0.5, %v733
  %v735 = vsub.f32 1.5, %v734
  %v736 = vmul.f32 %v731, %v735
  %v737 = vmul.f32 %v592, %v736
  %vm738 = vcmp.eq.f32.partialorder %v592, inf
  %v739 = vsel %vm738, %v592, %v737
  %vm740 = vcmp.eq.f32.partialorder %v592, 0.0
  %v741 = vand.u32 %v592, 2147483648
  %v742 = vsel %vm740, %v741, %v739
  %v743 = vrsqrt.pop %v595
  %v744 = vmul.f32 %v743, %v595
  %v745 = vmul.f32 %v744, %v743
  %v746 = vmul.f32 0.5, %v745
  %v747 = vsub.f32 1.5, %v746
  %v748 = vmul.f32 %v743, %v747
  %v749 = vmul.f32 %v595, %v748
  %vm750 = vcmp.eq.f32.partialorder %v595, inf
  %v751 = vsel %vm750, %v595, %v749
  %vm752 = vcmp.eq.f32.partialorder %v595, 0.0
  %v753 = vand.u32 %v595, 2147483648
  %v754 = vsel %vm752, %v753, %v751
  %v755 = vrsqrt.pop %v598
  %v756 = vmul.f32 %v755, %v598
  %v757 = vmul.f32 %v756, %v755
  %v758 = vmul.f32 0.5, %v757
  %v759 = vsub.f32 1.5, %v758
  %v760 = vmul.f32 %v755, %v759
  %v761 = vmul.f32 %v598, %v760
  %vm762 = vcmp.eq.f32.partialorder %v598, inf
  %v763 = vsel %vm762, %v598, %v761
  %vm764 = vcmp.eq.f32.partialorder %v598, 0.0
  %v765 = vand.u32 %v598, 2147483648
  %v766 = vsel %vm764, %v765, %v763
  %v767 = vrsqrt.pop %v601
  %v768 = vmul.f32 %v767, %v601
  %v769 = vmul.f32 %v768, %v767
  %v770 = vmul.f32 0.5, %v769
  %v771 = vsub.f32 1.5, %v770
  %v772 = vmul.f32 %v767, %v771
  %v773 = vmul.f32 %v601, %v772
  %vm774 = vcmp.eq.f32.partialorder %v601, inf
  %v775 = vsel %vm774, %v601, %v773
  %vm776 = vcmp.eq.f32.partialorder %v601, 0.0
  %v777 = vand.u32 %v601, 2147483648
  %v778 = vsel %vm776, %v777, %v775
  %v779 = vrsqrt.pop %v604
  %v780 = vmul.f32 %v779, %v604
  %v781 = vmul.f32 %v780, %v779
  %v782 = vmul.f32 0.5, %v781
  %v783 = vsub.f32 1.5, %v782
  %v784 = vmul.f32 %v779, %v783
  %v785 = vmul.f32 %v604, %v784
  %vm786 = vcmp.eq.f32.partialorder %v604, inf
  %v787 = vsel %vm786, %v604, %v785
  %vm788 = vcmp.eq.f32.partialorder %v604, 0.0
  %v789 = vand.u32 %v604, 2147483648
  %v790 = vsel %vm788, %v789, %v787
  %v791 = vrsqrt.pop %v607
  %v792 = vmul.f32 %v791, %v607
  %v793 = vmul.f32 %v792, %v791
  %v794 = vmul.f32 0.5, %v793
  %v795 = vsub.f32 1.5, %v794
  %v796 = vmul.f32 %v791, %v795
  %v797 = vmul.f32 %v607, %v796
  %vm798 = vcmp.eq.f32.partialorder %v607, inf
  %v799 = vsel %vm798, %v607, %v797
  %vm800 = vcmp.eq.f32.partialorder %v607, 0.0
  %v801 = vand.u32 %v607, 2147483648
  %v802 = vsel %vm800, %v801, %v799
  %v803 = vrsqrt.pop %v610
  %v804 = vmul.f32 %v803, %v610
  %v805 = vmul.f32 %v804, %v803
  %v806 = vmul.f32 0.5, %v805
  %v807 = vsub.f32 1.5, %v806
  %v808 = vmul.f32 %v803, %v807
  %v809 = vmul.f32 %v610, %v808
  %vm810 = vcmp.eq.f32.partialorder %v610, inf
  %v811 = vsel %vm810, %v610, %v809
  %vm812 = vcmp.eq.f32.partialorder %v610, 0.0
  %v813 = vand.u32 %v610, 2147483648
  %v814 = vsel %vm812, %v813, %v811
  %v815 = vrsqrt.pop %v613
  %v816 = vmul.f32 %v815, %v613
  %v817 = vmul.f32 %v816, %v815
  %v818 = vmul.f32 0.5, %v817
  %v819 = vsub.f32 1.5, %v818
  %v820 = vmul.f32 %v815, %v819
  %v821 = vmul.f32 %v613, %v820
  %vm822 = vcmp.eq.f32.partialorder %v613, inf
  %v823 = vsel %vm822, %v613, %v821
  %vm824 = vcmp.eq.f32.partialorder %v613, 0.0
  %v825 = vand.u32 %v613, 2147483648
  %v826 = vsel %vm824, %v825, %v823
  %v827 = vrsqrt.pop %v616
  %v828 = vmul.f32 %v827, %v616
  %v829 = vmul.f32 %v828, %v827
  %v830 = vmul.f32 0.5, %v829
  %v831 = vsub.f32 1.5, %v830
  %v832 = vmul.f32 %v827, %v831
  %v833 = vmul.f32 %v616, %v832
  %vm834 = vcmp.eq.f32.partialorder %v616, inf
  %v835 = vsel %vm834, %v616, %v833
  %vm836 = vcmp.eq.f32.partialorder %v616, 0.0
  %v837 = vand.u32 %v616, 2147483648
  %v838 = vsel %vm836, %v837, %v835
  %v839 = vrsqrt.pop %v619
  %v840 = vmul.f32 %v839, %v619
  %v841 = vmul.f32 %v840, %v839
  %v842 = vmul.f32 0.5, %v841
  %v843 = vsub.f32 1.5, %v842
  %v844 = vmul.f32 %v839, %v843
  %v845 = vmul.f32 %v619, %v844
  %vm846 = vcmp.eq.f32.partialorder %v619, inf
  %v847 = vsel %vm846, %v619, %v845
  %vm848 = vcmp.eq.f32.partialorder %v619, 0.0
  %v849 = vand.u32 %v619, 2147483648
  %v850 = vsel %vm848, %v849, %v847
  %v851 = vrsqrt.pop %v622
  %v852 = vmul.f32 %v851, %v622
  %v853 = vmul.f32 %v852, %v851
  %v854 = vmul.f32 0.5, %v853
  %v855 = vsub.f32 1.5, %v854
  %v856 = vmul.f32 %v851, %v855
  %v857 = vmul.f32 %v622, %v856
  %vm858 = vcmp.eq.f32.partialorder %v622, inf
  %v859 = vsel %vm858, %v622, %v857
  %vm860 = vcmp.eq.f32.partialorder %v622, 0.0
  %v861 = vand.u32 %v622, 2147483648
  %v862 = vsel %vm860, %v861, %v859
  %v863 = vrsqrt.pop %v625
  %v864 = vmul.f32 %v863, %v625
  %v865 = vmul.f32 %v864, %v863
  %v866 = vmul.f32 0.5, %v865
  %v867 = vsub.f32 1.5, %v866
  %v868 = vmul.f32 %v863, %v867
  %v869 = vmul.f32 %v625, %v868
  %vm870 = vcmp.eq.f32.partialorder %v625, inf
  %v871 = vsel %vm870, %v625, %v869
  %vm872 = vcmp.eq.f32.partialorder %v625, 0.0
  %v873 = vand.u32 %v625, 2147483648
  %v874 = vsel %vm872, %v873, %v871
  %v875 = vrsqrt.pop %v628
  %v876 = vmul.f32 %v875, %v628
  %v877 = vmul.f32 %v876, %v875
  %v878 = vmul.f32 0.5, %v877
  %v879 = vsub.f32 1.5, %v878
  %v880 = vmul.f32 %v875, %v879
  %v881 = vmul.f32 %v628, %v880
  %vm882 = vcmp.eq.f32.partialorder %v628, inf
  %v883 = vsel %vm882, %v628, %v881
  %vm884 = vcmp.eq.f32.partialorder %v628, 0.0
  %v885 = vand.u32 %v628, 2147483648
  %v886 = vsel %vm884, %v885, %v883
  %v887 = vrsqrt.pop %v631
  %v888 = vmul.f32 %v887, %v631
  %v889 = vmul.f32 %v888, %v887
  %v890 = vmul.f32 0.5, %v889
  %v891 = vsub.f32 1.5, %v890
  %v892 = vmul.f32 %v887, %v891
  %v893 = vmul.f32 %v631, %v892
  %vm894 = vcmp.eq.f32.partialorder %v631, inf
  %v895 = vsel %vm894, %v631, %v893
  %vm896 = vcmp.eq.f32.partialorder %v631, 0.0
  %v897 = vand.u32 %v631, 2147483648
  %v898 = vsel %vm896, %v897, %v895
  %v899 = vrsqrt.pop %v634
  %v900 = vmul.f32 %v899, %v634
  %v901 = vmul.f32 %v900, %v899
  %v902 = vmul.f32 0.5, %v901
  %v903 = vsub.f32 1.5, %v902
  %v904 = vmul.f32 %v899, %v903
  %v905 = vmul.f32 %v634, %v904
  %vm906 = vcmp.eq.f32.partialorder %v634, inf
  %v907 = vsel %vm906, %v634, %v905
  %vm908 = vcmp.eq.f32.partialorder %v634, 0.0
  %v909 = vand.u32 %v634, 2147483648
  %v910 = vsel %vm908, %v909, %v907
  %v911 = vrsqrt.pop %v637
  %v912 = vmul.f32 %v911, %v637
  %v913 = vmul.f32 %v912, %v911
  %v914 = vmul.f32 0.5, %v913
  %v915 = vsub.f32 1.5, %v914
  %v916 = vmul.f32 %v911, %v915
  %v917 = vmul.f32 %v637, %v916
  %vm918 = vcmp.eq.f32.partialorder %v637, inf
  %v919 = vsel %vm918, %v637, %v917
  %vm920 = vcmp.eq.f32.partialorder %v637, 0.0
  %v921 = vand.u32 %v637, 2147483648
  %v922 = vsel %vm920, %v921, %v919
  %v923 = vrsqrt.pop %v640
  %v924 = vmul.f32 %v923, %v640
  %v925 = vmul.f32 %v924, %v923
  %v926 = vmul.f32 0.5, %v925
  %v927 = vsub.f32 1.5, %v926
  %v928 = vmul.f32 %v923, %v927
  %v929 = vmul.f32 %v640, %v928
  %vm930 = vcmp.eq.f32.partialorder %v640, inf
  %v931 = vsel %vm930, %v640, %v929
  %vm932 = vcmp.eq.f32.partialorder %v640, 0.0
  %v933 = vand.u32 %v640, 2147483648
  %v934 = vsel %vm932, %v933, %v931
  %v935 = vrsqrt.pop %v643
  %v936 = vmul.f32 %v935, %v643
  %v937 = vmul.f32 %v936, %v935
  %v938 = vmul.f32 0.5, %v937
  %v939 = vsub.f32 1.5, %v938
  %v940 = vmul.f32 %v935, %v939
  %v941 = vmul.f32 %v643, %v940
  %vm942 = vcmp.eq.f32.partialorder %v643, inf
  %v943 = vsel %vm942, %v643, %v941
  %vm944 = vcmp.eq.f32.partialorder %v643, 0.0
  %v945 = vand.u32 %v643, 2147483648
  %v946 = vsel %vm944, %v945, %v943
  %v947 = vrsqrt.pop %v646
  %v948 = vmul.f32 %v947, %v646
  %v949 = vmul.f32 %v948, %v947
  %v950 = vmul.f32 0.5, %v949
  %v951 = vsub.f32 1.5, %v950
  %v952 = vmul.f32 %v947, %v951
  %v953 = vmul.f32 %v646, %v952
  %vm954 = vcmp.eq.f32.partialorder %v646, inf
  %v955 = vsel %vm954, %v646, %v953
  %vm956 = vcmp.eq.f32.partialorder %v646, 0.0
  %v957 = vand.u32 %v646, 2147483648
  %v958 = vsel %vm956, %v957, %v955
  %v959 = vrsqrt.pop %v649
  %v960 = vmul.f32 %v959, %v649
  %v961 = vmul.f32 %v960, %v959
  %v962 = vmul.f32 0.5, %v961
  %v963 = vsub.f32 1.5, %v962
  %v964 = vmul.f32 %v959, %v963
  %v965 = vmul.f32 %v649, %v964
  %vm966 = vcmp.eq.f32.partialorder %v649, inf
  %v967 = vsel %vm966, %v649, %v965
  %vm968 = vcmp.eq.f32.partialorder %v649, 0.0
  %v969 = vand.u32 %v649, 2147483648
  %v970 = vsel %vm968, %v969, %v967
  %v971 = vrsqrt.pop %v652
  %v972 = vmul.f32 %v971, %v652
  %v973 = vmul.f32 %v972, %v971
  %v974 = vmul.f32 0.5, %v973
  %v975 = vsub.f32 1.5, %v974
  %v976 = vmul.f32 %v971, %v975
  %v977 = vmul.f32 %v652, %v976
  %vm978 = vcmp.eq.f32.partialorder %v652, inf
  %v979 = vsel %vm978, %v652, %v977
  %vm980 = vcmp.eq.f32.partialorder %v652, 0.0
  %v981 = vand.u32 %v652, 2147483648
  %v982 = vsel %vm980, %v981, %v979
  %v983 = vrsqrt.pop %v655
  %v984 = vmul.f32 %v983, %v655
  %v985 = vmul.f32 %v984, %v983
  %v986 = vmul.f32 0.5, %v985
  %v987 = vsub.f32 1.5, %v986
  %v988 = vmul.f32 %v983, %v987
  %v989 = vmul.f32 %v655, %v988
  %vm990 = vcmp.eq.f32.partialorder %v655, inf
  %v991 = vsel %vm990, %v655, %v989
  %vm992 = vcmp.eq.f32.partialorder %v655, 0.0
  %v993 = vand.u32 %v655, 2147483648
  %v994 = vsel %vm992, %v993, %v991
  %v995 = vrsqrt.pop %v658
  %v996 = vmul.f32 %v995, %v658
  %v997 = vmul.f32 %v996, %v995
  %v998 = vmul.f32 0.5, %v997
  %v999 = vsub.f32 1.5, %v998
  %v1000 = vmul.f32 %v995, %v999
  %v1001 = vmul.f32 %v658, %v1000
  %vm1002 = vcmp.eq.f32.partialorder %v658, inf
  %v1003 = vsel %vm1002, %v658, %v1001
  %vm1004 = vcmp.eq.f32.partialorder %v658, 0.0
  %v1005 = vand.u32 %v658, 2147483648
  %v1006 = vsel %vm1004, %v1005, %v1003
  %v1007 = vrsqrt.pop %v661
  %v1008 = vmul.f32 %v1007, %v661
  %v1009 = vmul.f32 %v1008, %v1007
  %v1010 = vmul.f32 0.5, %v1009
  %v1011 = vsub.f32 1.5, %v1010
  %v1012 = vmul.f32 %v1007, %v1011
  %v1013 = vmul.f32 %v661, %v1012
  %vm1014 = vcmp.eq.f32.partialorder %v661, inf
  %v1015 = vsel %vm1014, %v661, %v1013
  %vm1016 = vcmp.eq.f32.partialorder %v661, 0.0
  %v1017 = vand.u32 %v661, 2147483648
  %v1018 = vsel %vm1016, %v1017, %v1015
  %v1019 = vrsqrt.pop %v664
  %v1020 = vmul.f32 %v1019, %v664
  %v1021 = vmul.f32 %v1020, %v1019
  %v1022 = vmul.f32 0.5, %v1021
  %v1023 = vsub.f32 1.5, %v1022
  %v1024 = vmul.f32 %v1019, %v1023
  %v1025 = vmul.f32 %v664, %v1024
  %vm1026 = vcmp.eq.f32.partialorder %v664, inf
  %v1027 = vsel %vm1026, %v664, %v1025
  %vm1028 = vcmp.eq.f32.partialorder %v664, 0.0
  %v1029 = vand.u32 %v664, 2147483648
  %v1030 = vsel %vm1028, %v1029, %v1027
  %v1031 = vrsqrt.pop %v667
  %v1032 = vmul.f32 %v1031, %v667
  %v1033 = vmul.f32 %v1032, %v1031
  %v1034 = vmul.f32 0.5, %v1033
  %v1035 = vsub.f32 1.5, %v1034
  %v1036 = vmul.f32 %v1031, %v1035
  %v1037 = vmul.f32 %v667, %v1036
  %vm1038 = vcmp.eq.f32.partialorder %v667, inf
  %v1039 = vsel %vm1038, %v667, %v1037
  %vm1040 = vcmp.eq.f32.partialorder %v667, 0.0
  %v1041 = vand.u32 %v667, 2147483648
  %v1042 = vsel %vm1040, %v1041, %v1039
  %v1043 = vrsqrt.pop %v670
  %v1044 = vmul.f32 %v1043, %v670
  %v1045 = vmul.f32 %v1044, %v1043
  %v1046 = vmul.f32 0.5, %v1045
  %v1047 = vsub.f32 1.5, %v1046
  %v1048 = vmul.f32 %v1043, %v1047
  %v1049 = vmul.f32 %v670, %v1048
  %vm1050 = vcmp.eq.f32.partialorder %v670, inf
  %v1051 = vsel %vm1050, %v670, %v1049
  %vm1052 = vcmp.eq.f32.partialorder %v670, 0.0
  %v1053 = vand.u32 %v670, 2147483648
  %v1054 = vsel %vm1052, %v1053, %v1051
  %v1055 = vadd.f32 %v577, 1.0
  %v1056 = vadd.f32 %v580, 1.0
  %v1057 = vadd.f32 %v583, 1.0
  %v1058 = vadd.f32 %v586, 1.0
  %v1059 = vadd.f32 %v589, 1.0
  %v1060 = vadd.f32 %v592, 1.0
  %v1061 = vadd.f32 %v595, 1.0
  %v1062 = vadd.f32 %v598, 1.0
  %v1063 = vadd.f32 %v601, 1.0
  %v1064 = vadd.f32 %v604, 1.0
  %v1065 = vadd.f32 %v607, 1.0
  %v1066 = vadd.f32 %v610, 1.0
  %v1067 = vadd.f32 %v613, 1.0
  %v1068 = vadd.f32 %v616, 1.0
  %v1069 = vadd.f32 %v619, 1.0
  %v1070 = vadd.f32 %v622, 1.0
  %v1071 = vadd.f32 %v625, 1.0
  %v1072 = vadd.f32 %v628, 1.0
  %v1073 = vadd.f32 %v631, 1.0
  %v1074 = vadd.f32 %v634, 1.0
  %v1075 = vadd.f32 %v637, 1.0
  %v1076 = vadd.f32 %v640, 1.0
  %v1077 = vadd.f32 %v643, 1.0
  %v1078 = vadd.f32 %v646, 1.0
  %v1079 = vadd.f32 %v649, 1.0
  %v1080 = vadd.f32 %v652, 1.0
  %v1081 = vadd.f32 %v655, 1.0
  %v1082 = vadd.f32 %v658, 1.0
  %v1083 = vadd.f32 %v661, 1.0
  %v1084 = vadd.f32 %v664, 1.0
  %v1085 = vadd.f32 %v667, 1.0
  %v1086 = vadd.f32 %v670, 1.0
  %v1087 = vrcp.pop %v1055
  %v1088 = vmul.f32 %v1055, %v1087
  %v1089 = vsub.f32 1.0, %v1088
  %v1090 = vmul.f32 %v1087, %v1089
  %v1091 = vadd.f32 %v1087, %v1090
  %vm1092 = vweird.f32 %v1055
  %vm1093 = vweird.f32 %v1087
  %vm1094 = vmor %vm1092, %vm1093
  %v1095 = vsel %vm1094, %v1087, %v1091
  %v1096 = vand.u32 2147483647, %v1055
  %vm1097 = vcmp.eq.f32.partialorder %v1096, 8.507059e+37
  %v1098 = vand.u32 %v1055, 2147483648
  %v1099 = vor.u32 1.1754944e-38, %v1098
  %v1100 = vsel %vm1097, %v1099, %v1095
  %v1101 = vmul.f32 1.0, %v1100
  %v1102 = vrcp.pop %v1056
  %v1103 = vmul.f32 %v1056, %v1102
  %v1104 = vsub.f32 1.0, %v1103
  %v1105 = vmul.f32 %v1102, %v1104
  %v1106 = vadd.f32 %v1102, %v1105
  %vm1107 = vweird.f32 %v1056
  %vm1108 = vweird.f32 %v1102
  %vm1109 = vmor %vm1107, %vm1108
  %v1110 = vsel %vm1109, %v1102, %v1106
  %v1111 = vand.u32 2147483647, %v1056
  %vm1112 = vcmp.eq.f32.partialorder %v1111, 8.507059e+37
  %v1113 = vand.u32 %v1056, 2147483648
  %v1114 = vor.u32 1.1754944e-38, %v1113
  %v1115 = vsel %vm1112, %v1114, %v1110
  %v1116 = vmul.f32 1.0, %v1115
  %v1117 = vrcp.pop %v1057
  %v1118 = vmul.f32 %v1057, %v1117
  %v1119 = vsub.f32 1.0, %v1118
  %v1120 = vmul.f32 %v1117, %v1119
  %v1121 = vadd.f32 %v1117, %v1120
  %vm1122 = vweird.f32 %v1057
  %vm1123 = vweird.f32 %v1117
  %vm1124 = vmor %vm1122, %vm1123
  %v1125 = vsel %vm1124, %v1117, %v1121
  %v1126 = vand.u32 2147483647, %v1057
  %vm1127 = vcmp.eq.f32.partialorder %v1126, 8.507059e+37
  %v1128 = vand.u32 %v1057, 2147483648
  %v1129 = vor.u32 1.1754944e-38, %v1128
  %v1130 = vsel %vm1127, %v1129, %v1125
  %v1131 = vmul.f32 1.0, %v1130
  %v1132 = vrcp.pop %v1058
  %v1133 = vmul.f32 %v1058, %v1132
  %v1134 = vsub.f32 1.0, %v1133
  %v1135 = vmul.f32 %v1132, %v1134
  %v1136 = vadd.f32 %v1132, %v1135
  %vm1137 = vweird.f32 %v1058
  %vm1138 = vweird.f32 %v1132
  %vm1139 = vmor %vm1137, %vm1138
  %v1140 = vsel %vm1139, %v1132, %v1136
  %v1141 = vand.u32 2147483647, %v1058
  %vm1142 = vcmp.eq.f32.partialorder %v1141, 8.507059e+37
  %v1143 = vand.u32 %v1058, 2147483648
  %v1144 = vor.u32 1.1754944e-38, %v1143
  %v1145 = vsel %vm1142, %v1144, %v1140
  %v1146 = vmul.f32 1.0, %v1145
  %v1147 = vrcp.pop %v1059
  %v1148 = vmul.f32 %v1059, %v1147
  %v1149 = vsub.f32 1.0, %v1148
  %v1150 = vmul.f32 %v1147, %v1149
  %v1151 = vadd.f32 %v1147, %v1150
  %vm1152 = vweird.f32 %v1059
  %vm1153 = vweird.f32 %v1147
  %vm1154 = vmor %vm1152, %vm1153
  %v1155 = vsel %vm1154, %v1147, %v1151
  %v1156 = vand.u32 2147483647, %v1059
  %vm1157 = vcmp.eq.f32.partialorder %v1156, 8.507059e+37
  %v1158 = vand.u32 %v1059, 2147483648
  %v1159 = vor.u32 1.1754944e-38, %v1158
  %v1160 = vsel %vm1157, %v1159, %v1155
  %v1161 = vmul.f32 1.0, %v1160
  %v1162 = vrcp.pop %v1060
  %v1163 = vmul.f32 %v1060, %v1162
  %v1164 = vsub.f32 1.0, %v1163
  %v1165 = vmul.f32 %v1162, %v1164
  %v1166 = vadd.f32 %v1162, %v1165
  %vm1167 = vweird.f32 %v1060
  %vm1168 = vweird.f32 %v1162
  %vm1169 = vmor %vm1167, %vm1168
  %v1170 = vsel %vm1169, %v1162, %v1166
  %v1171 = vand.u32 2147483647, %v1060
  %vm1172 = vcmp.eq.f32.partialorder %v1171, 8.507059e+37
  %v1173 = vand.u32 %v1060, 2147483648
  %v1174 = vor.u32 1.1754944e-38, %v1173
  %v1175 = vsel %vm1172, %v1174, %v1170
  %v1176 = vmul.f32 1.0, %v1175
  %v1177 = vrcp.pop %v1061
  %v1178 = vmul.f32 %v1061, %v1177
  %v1179 = vsub.f32 1.0, %v1178
  %v1180 = vmul.f32 %v1177, %v1179
  %v1181 = vadd.f32 %v1177, %v1180
  %vm1182 = vweird.f32 %v1061
  %vm1183 = vweird.f32 %v1177
  %vm1184 = vmor %vm1182, %vm1183
  %v1185 = vsel %vm1184, %v1177, %v1181
  %v1186 = vand.u32 2147483647, %v1061
  %vm1187 = vcmp.eq.f32.partialorder %v1186, 8.507059e+37
  %v1188 = vand.u32 %v1061, 2147483648
  %v1189 = vor.u32 1.1754944e-38, %v1188
  %v1190 = vsel %vm1187, %v1189, %v1185
  %v1191 = vmul.f32 1.0, %v1190
  %v1192 = vrcp.pop %v1062
  %v1193 = vmul.f32 %v1062, %v1192
  %v1194 = vsub.f32 1.0, %v1193
  %v1195 = vmul.f32 %v1192, %v1194
  %v1196 = vadd.f32 %v1192, %v1195
  %vm1197 = vweird.f32 %v1062
  %vm1198 = vweird.f32 %v1192
  %vm1199 = vmor %vm1197, %vm1198
  %v1200 = vsel %vm1199, %v1192, %v1196
  %v1201 = vand.u32 2147483647, %v1062
  %vm1202 = vcmp.eq.f32.partialorder %v1201, 8.507059e+37
  %v1203 = vand.u32 %v1062, 2147483648
  %v1204 = vor.u32 1.1754944e-38, %v1203
  %v1205 = vsel %vm1202, %v1204, %v1200
  %v1206 = vmul.f32 1.0, %v1205
  %v1207 = vrcp.pop %v1063
  %v1208 = vmul.f32 %v1063, %v1207
  %v1209 = vsub.f32 1.0, %v1208
  %v1210 = vmul.f32 %v1207, %v1209
  %v1211 = vadd.f32 %v1207, %v1210
  %vm1212 = vweird.f32 %v1063
  %vm1213 = vweird.f32 %v1207
  %vm1214 = vmor %vm1212, %vm1213
  %v1215 = vsel %vm1214, %v1207, %v1211
  %v1216 = vand.u32 2147483647, %v1063
  %vm1217 = vcmp.eq.f32.partialorder %v1216, 8.507059e+37
  %v1218 = vand.u32 %v1063, 2147483648
  %v1219 = vor.u32 1.1754944e-38, %v1218
  %v1220 = vsel %vm1217, %v1219, %v1215
  %v1221 = vmul.f32 1.0, %v1220
  %v1222 = vrcp.pop %v1064
  %v1223 = vmul.f32 %v1064, %v1222
  %v1224 = vsub.f32 1.0, %v1223
  %v1225 = vmul.f32 %v1222, %v1224
  %v1226 = vadd.f32 %v1222, %v1225
  %vm1227 = vweird.f32 %v1064
  %vm1228 = vweird.f32 %v1222
  %vm1229 = vmor %vm1227, %vm1228
  %v1230 = vsel %vm1229, %v1222, %v1226
  %v1231 = vand.u32 2147483647, %v1064
  %vm1232 = vcmp.eq.f32.partialorder %v1231, 8.507059e+37
  %v1233 = vand.u32 %v1064, 2147483648
  %v1234 = vor.u32 1.1754944e-38, %v1233
  %v1235 = vsel %vm1232, %v1234, %v1230
  %v1236 = vmul.f32 1.0, %v1235
  %v1237 = vrcp.pop %v1065
  %v1238 = vmul.f32 %v1065, %v1237
  %v1239 = vsub.f32 1.0, %v1238
  %v1240 = vmul.f32 %v1237, %v1239
  %v1241 = vadd.f32 %v1237, %v1240
  %vm1242 = vweird.f32 %v1065
  %vm1243 = vweird.f32 %v1237
  %vm1244 = vmor %vm1242, %vm1243
  %v1245 = vsel %vm1244, %v1237, %v1241
  %v1246 = vand.u32 2147483647, %v1065
  %vm1247 = vcmp.eq.f32.partialorder %v1246, 8.507059e+37
  %v1248 = vand.u32 %v1065, 2147483648
  %v1249 = vor.u32 1.1754944e-38, %v1248
  %v1250 = vsel %vm1247, %v1249, %v1245
  %v1251 = vmul.f32 1.0, %v1250
  %v1252 = vrcp.pop %v1066
  %v1253 = vmul.f32 %v1066, %v1252
  %v1254 = vsub.f32 1.0, %v1253
  %v1255 = vmul.f32 %v1252, %v1254
  %v1256 = vadd.f32 %v1252, %v1255
  %vm1257 = vweird.f32 %v1066
  %vm1258 = vweird.f32 %v1252
  %vm1259 = vmor %vm1257, %vm1258
  %v1260 = vsel %vm1259, %v1252, %v1256
  %v1261 = vand.u32 2147483647, %v1066
  %vm1262 = vcmp.eq.f32.partialorder %v1261, 8.507059e+37
  %v1263 = vand.u32 %v1066, 2147483648
  %v1264 = vor.u32 1.1754944e-38, %v1263
  %v1265 = vsel %vm1262, %v1264, %v1260
  %v1266 = vmul.f32 1.0, %v1265
  %v1267 = vrcp.pop %v1067
  %v1268 = vmul.f32 %v1067, %v1267
  %v1269 = vsub.f32 1.0, %v1268
  %v1270 = vmul.f32 %v1267, %v1269
  %v1271 = vadd.f32 %v1267, %v1270
  %vm1272 = vweird.f32 %v1067
  %vm1273 = vweird.f32 %v1267
  %vm1274 = vmor %vm1272, %vm1273
  %v1275 = vsel %vm1274, %v1267, %v1271
  %v1276 = vand.u32 2147483647, %v1067
  %vm1277 = vcmp.eq.f32.partialorder %v1276, 8.507059e+37
  %v1278 = vand.u32 %v1067, 2147483648
  %v1279 = vor.u32 1.1754944e-38, %v1278
  %v1280 = vsel %vm1277, %v1279, %v1275
  %v1281 = vmul.f32 1.0, %v1280
  %v1282 = vrcp.pop %v1068
  %v1283 = vmul.f32 %v1068, %v1282
  %v1284 = vsub.f32 1.0, %v1283
  %v1285 = vmul.f32 %v1282, %v1284
  %v1286 = vadd.f32 %v1282, %v1285
  %vm1287 = vweird.f32 %v1068
  %vm1288 = vweird.f32 %v1282
  %vm1289 = vmor %vm1287, %vm1288
  %v1290 = vsel %vm1289, %v1282, %v1286
  %v1291 = vand.u32 2147483647, %v1068
  %vm1292 = vcmp.eq.f32.partialorder %v1291, 8.507059e+37
  %v1293 = vand.u32 %v1068, 2147483648
  %v1294 = vor.u32 1.1754944e-38, %v1293
  %v1295 = vsel %vm1292, %v1294, %v1290
  %v1296 = vmul.f32 1.0, %v1295
  %v1297 = vrcp.pop %v1069
  %v1298 = vmul.f32 %v1069, %v1297
  %v1299 = vsub.f32 1.0, %v1298
  %v1300 = vmul.f32 %v1297, %v1299
  %v1301 = vadd.f32 %v1297, %v1300
  %vm1302 = vweird.f32 %v1069
  %vm1303 = vweird.f32 %v1297
  %vm1304 = vmor %vm1302, %vm1303
  %v1305 = vsel %vm1304, %v1297, %v1301
  %v1306 = vand.u32 2147483647, %v1069
  %vm1307 = vcmp.eq.f32.partialorder %v1306, 8.507059e+37
  %v1308 = vand.u32 %v1069, 2147483648
  %v1309 = vor.u32 1.1754944e-38, %v1308
  %v1310 = vsel %vm1307, %v1309, %v1305
  %v1311 = vmul.f32 1.0, %v1310
  %v1312 = vrcp.pop %v1070
  %v1313 = vmul.f32 %v1070, %v1312
  %v1314 = vsub.f32 1.0, %v1313
  %v1315 = vmul.f32 %v1312, %v1314
  %v1316 = vadd.f32 %v1312, %v1315
  %vm1317 = vweird.f32 %v1070
  %vm1318 = vweird.f32 %v1312
  %vm1319 = vmor %vm1317, %vm1318
  %v1320 = vsel %vm1319, %v1312, %v1316
  %v1321 = vand.u32 2147483647, %v1070
  %vm1322 = vcmp.eq.f32.partialorder %v1321, 8.507059e+37
  %v1323 = vand.u32 %v1070, 2147483648
  %v1324 = vor.u32 1.1754944e-38, %v1323
  %v1325 = vsel %vm1322, %v1324, %v1320
  %v1326 = vmul.f32 1.0, %v1325
  %v1327 = vrcp.pop %v1071
  %v1328 = vmul.f32 %v1071, %v1327
  %v1329 = vsub.f32 1.0, %v1328
  %v1330 = vmul.f32 %v1327, %v1329
  %v1331 = vadd.f32 %v1327, %v1330
  %vm1332 = vweird.f32 %v1071
  %vm1333 = vweird.f32 %v1327
  %vm1334 = vmor %vm1332, %vm1333
  %v1335 = vsel %vm1334, %v1327, %v1331
  %v1336 = vand.u32 2147483647, %v1071
  %vm1337 = vcmp.eq.f32.partialorder %v1336, 8.507059e+37
  %v1338 = vand.u32 %v1071, 2147483648
  %v1339 = vor.u32 1.1754944e-38, %v1338
  %v1340 = vsel %vm1337, %v1339, %v1335
  %v1341 = vmul.f32 1.0, %v1340
  %v1342 = vrcp.pop %v1072
  %v1343 = vmul.f32 %v1072, %v1342
  %v1344 = vsub.f32 1.0, %v1343
  %v1345 = vmul.f32 %v1342, %v1344
  %v1346 = vadd.f32 %v1342, %v1345
  %vm1347 = vweird.f32 %v1072
  %vm1348 = vweird.f32 %v1342
  %vm1349 = vmor %vm1347, %vm1348
  %v1350 = vsel %vm1349, %v1342, %v1346
  %v1351 = vand.u32 2147483647, %v1072
  %vm1352 = vcmp.eq.f32.partialorder %v1351, 8.507059e+37
  %v1353 = vand.u32 %v1072, 2147483648
  %v1354 = vor.u32 1.1754944e-38, %v1353
  %v1355 = vsel %vm1352, %v1354, %v1350
  %v1356 = vmul.f32 1.0, %v1355
  %v1357 = vrcp.pop %v1073
  %v1358 = vmul.f32 %v1073, %v1357
  %v1359 = vsub.f32 1.0, %v1358
  %v1360 = vmul.f32 %v1357, %v1359
  %v1361 = vadd.f32 %v1357, %v1360
  %vm1362 = vweird.f32 %v1073
  %vm1363 = vweird.f32 %v1357
  %vm1364 = vmor %vm1362, %vm1363
  %v1365 = vsel %vm1364, %v1357, %v1361
  %v1366 = vand.u32 2147483647, %v1073
  %vm1367 = vcmp.eq.f32.partialorder %v1366, 8.507059e+37
  %v1368 = vand.u32 %v1073, 2147483648
  %v1369 = vor.u32 1.1754944e-38, %v1368
  %v1370 = vsel %vm1367, %v1369, %v1365
  %v1371 = vmul.f32 1.0, %v1370
  %v1372 = vrcp.pop %v1074
  %v1373 = vmul.f32 %v1074, %v1372
  %v1374 = vsub.f32 1.0, %v1373
  %v1375 = vmul.f32 %v1372, %v1374
  %v1376 = vadd.f32 %v1372, %v1375
  %vm1377 = vweird.f32 %v1074
  %vm1378 = vweird.f32 %v1372
  %vm1379 = vmor %vm1377, %vm1378
  %v1380 = vsel %vm1379, %v1372, %v1376
  %v1381 = vand.u32 2147483647, %v1074
  %vm1382 = vcmp.eq.f32.partialorder %v1381, 8.507059e+37
  %v1383 = vand.u32 %v1074, 2147483648
  %v1384 = vor.u32 1.1754944e-38, %v1383
  %v1385 = vsel %vm1382, %v1384, %v1380
  %v1386 = vmul.f32 1.0, %v1385
  %v1387 = vrcp.pop %v1075
  %v1388 = vmul.f32 %v1075, %v1387
  %v1389 = vsub.f32 1.0, %v1388
  %v1390 = vmul.f32 %v1387, %v1389
  %v1391 = vadd.f32 %v1387, %v1390
  %vm1392 = vweird.f32 %v1075
  %vm1393 = vweird.f32 %v1387
  %vm1394 = vmor %vm1392, %vm1393
  %v1395 = vsel %vm1394, %v1387, %v1391
  %v1396 = vand.u32 2147483647, %v1075
  %vm1397 = vcmp.eq.f32.partialorder %v1396, 8.507059e+37
  %v1398 = vand.u32 %v1075, 2147483648
  %v1399 = vor.u32 1.1754944e-38, %v1398
  %v1400 = vsel %vm1397, %v1399, %v1395
  %v1401 = vmul.f32 1.0, %v1400
  %v1402 = vrcp.pop %v1076
  %v1403 = vmul.f32 %v1076, %v1402
  %v1404 = vsub.f32 1.0, %v1403
  %v1405 = vmul.f32 %v1402, %v1404
  %v1406 = vadd.f32 %v1402, %v1405
  %vm1407 = vweird.f32 %v1076
  %vm1408 = vweird.f32 %v1402
  %vm1409 = vmor %vm1407, %vm1408
  %v1410 = vsel %vm1409, %v1402, %v1406
  %v1411 = vand.u32 2147483647, %v1076
  %vm1412 = vcmp.eq.f32.partialorder %v1411, 8.507059e+37
  %v1413 = vand.u32 %v1076, 2147483648
  %v1414 = vor.u32 1.1754944e-38, %v1413
  %v1415 = vsel %vm1412, %v1414, %v1410
  %v1416 = vmul.f32 1.0, %v1415
  %v1417 = vrcp.pop %v1077
  %v1418 = vmul.f32 %v1077, %v1417
  %v1419 = vsub.f32 1.0, %v1418
  %v1420 = vmul.f32 %v1417, %v1419
  %v1421 = vadd.f32 %v1417, %v1420
  %vm1422 = vweird.f32 %v1077
  %vm1423 = vweird.f32 %v1417
  %vm1424 = vmor %vm1422, %vm1423
  %v1425 = vsel %vm1424, %v1417, %v1421
  %v1426 = vand.u32 2147483647, %v1077
  %vm1427 = vcmp.eq.f32.partialorder %v1426, 8.507059e+37
  %v1428 = vand.u32 %v1077, 2147483648
  %v1429 = vor.u32 1.1754944e-38, %v1428
  %v1430 = vsel %vm1427, %v1429, %v1425
  %v1431 = vmul.f32 1.0, %v1430
  %v1432 = vrcp.pop %v1078
  %v1433 = vmul.f32 %v1078, %v1432
  %v1434 = vsub.f32 1.0, %v1433
  %v1435 = vmul.f32 %v1432, %v1434
  %v1436 = vadd.f32 %v1432, %v1435
  %vm1437 = vweird.f32 %v1078
  %vm1438 = vweird.f32 %v1432
  %vm1439 = vmor %vm1437, %vm1438
  %v1440 = vsel %vm1439, %v1432, %v1436
  %v1441 = vand.u32 2147483647, %v1078
  %vm1442 = vcmp.eq.f32.partialorder %v1441, 8.507059e+37
  %v1443 = vand.u32 %v1078, 2147483648
  %v1444 = vor.u32 1.1754944e-38, %v1443
  %v1445 = vsel %vm1442, %v1444, %v1440
  %v1446 = vmul.f32 1.0, %v1445
  %v1447 = vrcp.pop %v1079
  %v1448 = vmul.f32 %v1079, %v1447
  %v1449 = vsub.f32 1.0, %v1448
  %v1450 = vmul.f32 %v1447, %v1449
  %v1451 = vadd.f32 %v1447, %v1450
  %vm1452 = vweird.f32 %v1079
  %vm1453 = vweird.f32 %v1447
  %vm1454 = vmor %vm1452, %vm1453
  %v1455 = vsel %vm1454, %v1447, %v1451
  %v1456 = vand.u32 2147483647, %v1079
  %vm1457 = vcmp.eq.f32.partialorder %v1456, 8.507059e+37
  %v1458 = vand.u32 %v1079, 2147483648
  %v1459 = vor.u32 1.1754944e-38, %v1458
  %v1460 = vsel %vm1457, %v1459, %v1455
  %v1461 = vmul.f32 1.0, %v1460
  %v1462 = vrcp.pop %v1080
  %v1463 = vmul.f32 %v1080, %v1462
  %v1464 = vsub.f32 1.0, %v1463
  %v1465 = vmul.f32 %v1462, %v1464
  %v1466 = vadd.f32 %v1462, %v1465
  %vm1467 = vweird.f32 %v1080
  %vm1468 = vweird.f32 %v1462
  %vm1469 = vmor %vm1467, %vm1468
  %v1470 = vsel %vm1469, %v1462, %v1466
  %v1471 = vand.u32 2147483647, %v1080
  %vm1472 = vcmp.eq.f32.partialorder %v1471, 8.507059e+37
  %v1473 = vand.u32 %v1080, 2147483648
  %v1474 = vor.u32 1.1754944e-38, %v1473
  %v1475 = vsel %vm1472, %v1474, %v1470
  %v1476 = vmul.f32 1.0, %v1475
  %v1477 = vrcp.pop %v1081
  %v1478 = vmul.f32 %v1081, %v1477
  %v1479 = vsub.f32 1.0, %v1478
  %v1480 = vmul.f32 %v1477, %v1479
  %v1481 = vadd.f32 %v1477, %v1480
  %vm1482 = vweird.f32 %v1081
  %vm1483 = vweird.f32 %v1477
  %vm1484 = vmor %vm1482, %vm1483
  %v1485 = vsel %vm1484, %v1477, %v1481
  %v1486 = vand.u32 2147483647, %v1081
  %vm1487 = vcmp.eq.f32.partialorder %v1486, 8.507059e+37
  %v1488 = vand.u32 %v1081, 2147483648
  %v1489 = vor.u32 1.1754944e-38, %v1488
  %v1490 = vsel %vm1487, %v1489, %v1485
  %v1491 = vmul.f32 1.0, %v1490
  %v1492 = vrcp.pop %v1082
  %v1493 = vmul.f32 %v1082, %v1492
  %v1494 = vsub.f32 1.0, %v1493
  %v1495 = vmul.f32 %v1492, %v1494
  %v1496 = vadd.f32 %v1492, %v1495
  %vm1497 = vweird.f32 %v1082
  %vm1498 = vweird.f32 %v1492
  %vm1499 = vmor %vm1497, %vm1498
  %v1500 = vsel %vm1499, %v1492, %v1496
  %v1501 = vand.u32 2147483647, %v1082
  %vm1502 = vcmp.eq.f32.partialorder %v1501, 8.507059e+37
  %v1503 = vand.u32 %v1082, 2147483648
  %v1504 = vor.u32 1.1754944e-38, %v1503
  %v1505 = vsel %vm1502, %v1504, %v1500
  %v1506 = vmul.f32 1.0, %v1505
  %v1507 = vrcp.pop %v1083
  %v1508 = vmul.f32 %v1083, %v1507
  %v1509 = vsub.f32 1.0, %v1508
  %v1510 = vmul.f32 %v1507, %v1509
  %v1511 = vadd.f32 %v1507, %v1510
  %vm1512 = vweird.f32 %v1083
  %vm1513 = vweird.f32 %v1507
  %vm1514 = vmor %vm1512, %vm1513
  %v1515 = vsel %vm1514, %v1507, %v1511
  %v1516 = vand.u32 2147483647, %v1083
  %vm1517 = vcmp.eq.f32.partialorder %v1516, 8.507059e+37
  %v1518 = vand.u32 %v1083, 2147483648
  %v1519 = vor.u32 1.1754944e-38, %v1518
  %v1520 = vsel %vm1517, %v1519, %v1515
  %v1521 = vmul.f32 1.0, %v1520
  %v1522 = vrcp.pop %v1084
  %v1523 = vmul.f32 %v1084, %v1522
  %v1524 = vsub.f32 1.0, %v1523
  %v1525 = vmul.f32 %v1522, %v1524
  %v1526 = vadd.f32 %v1522, %v1525
  %vm1527 = vweird.f32 %v1084
  %vm1528 = vweird.f32 %v1522
  %vm1529 = vmor %vm1527, %vm1528
  %v1530 = vsel %vm1529, %v1522, %v1526
  %v1531 = vand.u32 2147483647, %v1084
  %vm1532 = vcmp.eq.f32.partialorder %v1531, 8.507059e+37
  %v1533 = vand.u32 %v1084, 2147483648
  %v1534 = vor.u32 1.1754944e-38, %v1533
  %v1535 = vsel %vm1532, %v1534, %v1530
  %v1536 = vmul.f32 1.0, %v1535
  %v1537 = vrcp.pop %v1085
  %v1538 = vmul.f32 %v1085, %v1537
  %v1539 = vsub.f32 1.0, %v1538
  %v1540 = vmul.f32 %v1537, %v1539
  %v1541 = vadd.f32 %v1537, %v1540
  %vm1542 = vweird.f32 %v1085
  %vm1543 = vweird.f32 %v1537
  %vm1544 = vmor %vm1542, %vm1543
  %v1545 = vsel %vm1544, %v1537, %v1541
  %v1546 = vand.u32 2147483647, %v1085
  %vm1547 = vcmp.eq.f32.partialorder %v1546, 8.507059e+37
  %v1548 = vand.u32 %v1085, 2147483648
  %v1549 = vor.u32 1.1754944e-38, %v1548
  %v1550 = vsel %vm1547, %v1549, %v1545
  %v1551 = vmul.f32 1.0, %v1550
  %v1552 = vrcp.pop %v1086
  %v1553 = vmul.f32 %v1086, %v1552
  %v1554 = vsub.f32 1.0, %v1553
  %v1555 = vmul.f32 %v1552, %v1554
  %v1556 = vadd.f32 %v1552, %v1555
  %vm1557 = vweird.f32 %v1086
  %vm1558 = vweird.f32 %v1552
  %vm1559 = vmor %vm1557, %vm1558
  %v1560 = vsel %vm1559, %v1552, %v1556
  %v1561 = vand.u32 2147483647, %v1086
  %vm1562 = vcmp.eq.f32.partialorder %v1561, 8.507059e+37
  %v1563 = vand.u32 %v1086, 2147483648
  %v1564 = vor.u32 1.1754944e-38, %v1563
  %v1565 = vsel %vm1562, %v1564, %v1560
  %v1566 = vmul.f32 1.0, %v1565
  %v1567 = vmul.f32 %v682, %v1101
  %v1568 = vmul.f32 %v694, %v1116
  %v1569 = vmul.f32 %v706, %v1131
  %v1570 = vmul.f32 %v718, %v1146
  %v1571 = vmul.f32 %v730, %v1161
  %v1572 = vmul.f32 %v742, %v1176
  %v1573 = vmul.f32 %v754, %v1191
  %v1574 = vmul.f32 %v766, %v1206
  %v1575 = vmul.f32 %v778, %v1221
  %v1576 = vmul.f32 %v790, %v1236
  %v1577 = vmul.f32 %v802, %v1251
  %v1578 = vmul.f32 %v814, %v1266
  %v1579 = vmul.f32 %v826, %v1281
  %v1580 = vmul.f32 %v838, %v1296
  %v1581 = vmul.f32 %v850, %v1311
  %v1582 = vmul.f32 %v862, %v1326
  %v1583 = vmul.f32 %v874, %v1341
  %v1584 = vmul.f32 %v886, %v1356
  %v1585 = vmul.f32 %v898, %v1371
  %v1586 = vmul.f32 %v910, %v1386
  %v1587 = vmul.f32 %v922, %v1401
  %v1588 = vmul.f32 %v934, %v1416
  %v1589 = vmul.f32 %v946, %v1431
  %v1590 = vmul.f32 %v958, %v1446
  %v1591 = vmul.f32 %v970, %v1461
  %v1592 = vmul.f32 %v982, %v1476
  %v1593 = vmul.f32 %v994, %v1491
  %v1594 = vmul.f32 %v1006, %v1506
  %v1595 = vmul.f32 %v1018, %v1521
  %v1596 = vmul.f32 %v1030, %v1536
  %v1597 = vmul.f32 %v1042, %v1551
  %v1598 = vmul.f32 %v1054, %v1566
  %v1599 = vmul.f32 %v1567, %v447
  %v1600 = vmul.f32 %v1568, %v450
  %v1601 = vmul.f32 %v1569, %v453
  %v1602 = vmul.f32 %v1570, %v456
  %v1603 = vmul.f32 %v1571, %v459
  %v1604 = vmul.f32 %v1572, %v462
  %v1605 = vmul.f32 %v1573, %v465
  %v1606 = vmul.f32 %v1574, %v468
  %v1607 = vmul.f32 %v1575, %v471
  %v1608 = vmul.f32 %v1576, %v474
  %v1609 = vmul.f32 %v1577, %v477
  %v1610 = vmul.f32 %v1578, %v480
  %v1611 = vmul.f32 %v1579, %v483
  %v1612 = vmul.f32 %v1580, %v486
  %v1613 = vmul.f32 %v1581, %v489
  %v1614 = vmul.f32 %v1582, %v492
  %v1615 = vmul.f32 %v1583, %v495
  %v1616 = vmul.f32 %v1584, %v498
  %v1617 = vmul.f32 %v1585, %v501
  %v1618 = vmul.f32 %v1586, %v504
  %v1619 = vmul.f32 %v1587, %v507
  %v1620 = vmul.f32 %v1588, %v510
  %v1621 = vmul.f32 %v1589, %v513
  %v1622 = vmul.f32 %v1590, %v516
  %v1623 = vmul.f32 %v1591, %v519
  %v1624 = vmul.f32 %v1592, %v522
  %v1625 = vmul.f32 %v1593, %v525
  %v1626 = vmul.f32 %v1594, %v528
  %v1627 = vmul.f32 %v1595, %v531
  %v1628 = vmul.f32 %v1596, %v534
  %v1629 = vmul.f32 %v1597, %v537
  %v1630 = vmul.f32 %v1598, %v540
  %vm1631 = vcmask 162944
  %v1632 = vsel %vm1631, %v1599, -inf
  %1633 = vmax.xlane.f32.xlu0 %v1632
  %v1634 = vpop.xlane.xlu0 %1633
  %v1635 = vsel %vm1631, %v1600, -inf
  %1636 = vmax.xlane.f32.xlu0 %v1635
  %v1637 = vpop.xlane.xlu0 %1636
  %v1638 = vsel %vm1631, %v1601, -inf
  %1639 = vmax.xlane.f32.xlu0 %v1638
  %v1640 = vpop.xlane.xlu0 %1639
  %v1641 = vsel %vm1631, %v1602, -inf
  %1642 = vmax.xlane.f32.xlu0 %v1641
  %v1643 = vpop.xlane.xlu0 %1642
  %v1644 = vsel %vm1631, %v1603, -inf
  %1645 = vmax.xlane.f32.xlu0 %v1644
  %v1646 = vpop.xlane.xlu0 %1645
  %v1647 = vsel %vm1631, %v1604, -inf
  %1648 = vmax.xlane.f32.xlu0 %v1647
  %v1649 = vpop.xlane.xlu0 %1648
  %v1650 = vsel %vm1631, %v1605, -inf
  %1651 = vmax.xlane.f32.xlu0 %v1650
  %v1652 = vpop.xlane.xlu0 %1651
  %v1653 = vsel %vm1631, %v1606, -inf
  %1654 = vmax.xlane.f32.xlu0 %v1653
  %v1655 = vpop.xlane.xlu0 %1654
  %v1656 = vsel %vm1631, %v1607, -inf
  %1657 = vmax.xlane.f32.xlu0 %v1656
  %v1658 = vpop.xlane.xlu0 %1657
  %v1659 = vsel %vm1631, %v1608, -inf
  %1660 = vmax.xlane.f32.xlu0 %v1659
  %v1661 = vpop.xlane.xlu0 %1660
  %v1662 = vsel %vm1631, %v1609, -inf
  %1663 = vmax.xlane.f32.xlu0 %v1662
  %v1664 = vpop.xlane.xlu0 %1663
  %v1665 = vsel %vm1631, %v1610, -inf
  %1666 = vmax.xlane.f32.xlu0 %v1665
  %v1667 = vpop.xlane.xlu0 %1666
  %v1668 = vsel %vm1631, %v1611, -inf
  %1669 = vmax.xlane.f32.xlu0 %v1668
  %v1670 = vpop.xlane.xlu0 %1669
  %v1671 = vsel %vm1631, %v1612, -inf
  %1672 = vmax.xlane.f32.xlu0 %v1671
  %v1673 = vpop.xlane.xlu0 %1672
  %v1674 = vsel %vm1631, %v1613, -inf
  %1675 = vmax.xlane.f32.xlu0 %v1674
  %v1676 = vpop.xlane.xlu0 %1675
  %v1677 = vsel %vm1631, %v1614, -inf
  %1678 = vmax.xlane.f32.xlu0 %v1677
  %v1679 = vpop.xlane.xlu0 %1678
  %v1680 = vsel %vm1631, %v1615, -inf
  %1681 = vmax.xlane.f32.xlu0 %v1680
  %v1682 = vpop.xlane.xlu0 %1681
  %v1683 = vsel %vm1631, %v1616, -inf
  %1684 = vmax.xlane.f32.xlu0 %v1683
  %v1685 = vpop.xlane.xlu0 %1684
  %v1686 = vsel %vm1631, %v1617, -inf
  %1687 = vmax.xlane.f32.xlu0 %v1686
  %v1688 = vpop.xlane.xlu0 %1687
  %v1689 = vsel %vm1631, %v1618, -inf
  %1690 = vmax.xlane.f32.xlu0 %v1689
  %v1691 = vpop.xlane.xlu0 %1690
  %v1692 = vsel %vm1631, %v1619, -inf
  %1693 = vmax.xlane.f32.xlu0 %v1692
  %v1694 = vpop.xlane.xlu0 %1693
  %v1695 = vsel %vm1631, %v1620, -inf
  %1696 = vmax.xlane.f32.xlu0 %v1695
  %v1697 = vpop.xlane.xlu0 %1696
  %v1698 = vsel %vm1631, %v1621, -inf
  %1699 = vmax.xlane.f32.xlu0 %v1698
  %v1700 = vpop.xlane.xlu0 %1699
  %v1701 = vsel %vm1631, %v1622, -inf
  %1702 = vmax.xlane.f32.xlu0 %v1701
  %v1703 = vpop.xlane.xlu0 %1702
  %v1704 = vsel %vm1631, %v1623, -inf
  %1705 = vmax.xlane.f32.xlu0 %v1704
  %v1706 = vpop.xlane.xlu0 %1705
  %v1707 = vsel %vm1631, %v1624, -inf
  %1708 = vmax.xlane.f32.xlu0 %v1707
  %v1709 = vpop.xlane.xlu0 %1708
  %v1710 = vsel %vm1631, %v1625, -inf
  %1711 = vmax.xlane.f32.xlu0 %v1710
  %v1712 = vpop.xlane.xlu0 %1711
  %v1713 = vsel %vm1631, %v1626, -inf
  %1714 = vmax.xlane.f32.xlu0 %v1713
  %v1715 = vpop.xlane.xlu0 %1714
  %v1716 = vsel %vm1631, %v1627, -inf
  %1717 = vmax.xlane.f32.xlu0 %v1716
  %v1718 = vpop.xlane.xlu0 %1717
  %v1719 = vsel %vm1631, %v1628, -inf
  %1720 = vmax.xlane.f32.xlu0 %v1719
  %v1721 = vpop.xlane.xlu0 %1720
  %v1722 = vsel %vm1631, %v1629, -inf
  %1723 = vmax.xlane.f32.xlu0 %v1722
  %v1724 = vpop.xlane.xlu0 %1723
  %v1725 = vsel %vm1631, %v1630, -inf
  %1726 = vmax.xlane.f32.xlu0 %v1725
  %v1727 = vpop.xlane.xlu0 %1726
  %v1728 = vsub.f32 %v1599, %v1634
  %v1729 = vsub.f32 %v1600, %v1637
  %v1730 = vsub.f32 %v1601, %v1640
  %v1731 = vsub.f32 %v1602, %v1643
  %v1732 = vsub.f32 %v1603, %v1646
  %v1733 = vsub.f32 %v1604, %v1649
  %v1734 = vsub.f32 %v1605, %v1652
  %v1735 = vsub.f32 %v1606, %v1655
  %v1736 = vsub.f32 %v1607, %v1658
  %v1737 = vsub.f32 %v1608, %v1661
  %v1738 = vsub.f32 %v1609, %v1664
  %v1739 = vsub.f32 %v1610, %v1667
  %v1740 = vsub.f32 %v1611, %v1670
  %v1741 = vsub.f32 %v1612, %v1673
  %v1742 = vsub.f32 %v1613, %v1676
  %v1743 = vsub.f32 %v1614, %v1679
  %v1744 = vsub.f32 %v1615, %v1682
  %v1745 = vsub.f32 %v1616, %v1685
  %v1746 = vsub.f32 %v1617, %v1688
  %v1747 = vsub.f32 %v1618, %v1691
  %v1748 = vsub.f32 %v1619, %v1694
  %v1749 = vsub.f32 %v1620, %v1697
  %v1750 = vsub.f32 %v1621, %v1700
  %v1751 = vsub.f32 %v1622, %v1703
  %v1752 = vsub.f32 %v1623, %v1706
  %v1753 = vsub.f32 %v1624, %v1709
  %v1754 = vsub.f32 %v1625, %v1712
  %v1755 = vsub.f32 %v1626, %v1715
  %v1756 = vsub.f32 %v1627, %v1718
  %v1757 = vsub.f32 %v1628, %v1721
  %v1758 = vsub.f32 %v1629, %v1724
  %v1759 = vsub.f32 %v1630, %v1727
  %v1760 = vmul.f32 %v1728, 1.442695
  %v1761 = vpow.pop %v1760
  %v1762 = vmul.f32 %v1729, 1.442695
  %v1763 = vpow.pop %v1762
  %v1764 = vmul.f32 %v1730, 1.442695
  %v1765 = vpow.pop %v1764
  %v1766 = vmul.f32 %v1731, 1.442695
  %v1767 = vpow.pop %v1766
  %v1768 = vmul.f32 %v1732, 1.442695
  %v1769 = vpow.pop %v1768
  %v1770 = vmul.f32 %v1733, 1.442695
  %v1771 = vpow.pop %v1770
  %v1772 = vmul.f32 %v1734, 1.442695
  %v1773 = vpow.pop %v1772
  %v1774 = vmul.f32 %v1735, 1.442695
  %v1775 = vpow.pop %v1774
  %v1776 = vmul.f32 %v1736, 1.442695
  %v1777 = vpow.pop %v1776
  %v1778 = vmul.f32 %v1737, 1.442695
  %v1779 = vpow.pop %v1778
  %v1780 = vmul.f32 %v1738, 1.442695
  %v1781 = vpow.pop %v1780
  %v1782 = vmul.f32 %v1739, 1.442695
  %v1783 = vpow.pop %v1782
  %v1784 = vmul.f32 %v1740, 1.442695
  %v1785 = vpow.pop %v1784
  %v1786 = vmul.f32 %v1741, 1.442695
  %v1787 = vpow.pop %v1786
  %v1788 = vmul.f32 %v1742, 1.442695
  %v1789 = vpow.pop %v1788
  %v1790 = vmul.f32 %v1743, 1.442695
  %v1791 = vpow.pop %v1790
  %v1792 = vmul.f32 %v1744, 1.442695
  %v1793 = vpow.pop %v1792
  %v1794 = vmul.f32 %v1745, 1.442695
  %v1795 = vpow.pop %v1794
  %v1796 = vmul.f32 %v1746, 1.442695
  %v1797 = vpow.pop %v1796
  %v1798 = vmul.f32 %v1747, 1.442695
  %v1799 = vpow.pop %v1798
  %v1800 = vmul.f32 %v1748, 1.442695
  %v1801 = vpow.pop %v1800
  %v1802 = vmul.f32 %v1749, 1.442695
  %v1803 = vpow.pop %v1802
  %v1804 = vmul.f32 %v1750, 1.442695
  %v1805 = vpow.pop %v1804
  %v1806 = vmul.f32 %v1751, 1.442695
  %v1807 = vpow.pop %v1806
  %v1808 = vmul.f32 %v1752, 1.442695
  %v1809 = vpow.pop %v1808
  %v1810 = vmul.f32 %v1753, 1.442695
  %v1811 = vpow.pop %v1810
  %v1812 = vmul.f32 %v1754, 1.442695
  %v1813 = vpow.pop %v1812
  %v1814 = vmul.f32 %v1755, 1.442695
  %v1815 = vpow.pop %v1814
  %v1816 = vmul.f32 %v1756, 1.442695
  %v1817 = vpow.pop %v1816
  %v1818 = vmul.f32 %v1757, 1.442695
  %v1819 = vpow.pop %v1818
  %v1820 = vmul.f32 %v1758, 1.442695
  %v1821 = vpow.pop %v1820
  %v1822 = vmul.f32 %v1759, 1.442695
  %v1823 = vpow.pop %v1822
  %1856 = vrot.lane.b32.xlu0 %v1761, 112
  %v1857 = vpop.permute.xlu0 %1856
  %1858 = vrot.lane.b32.xlu0 %v1763, 112
  %v1859 = vpop.permute.xlu0 %1858
  %1860 = vrot.lane.b32.xlu0 %v1765, 112
  %v1861 = vpop.permute.xlu0 %1860
  %1862 = vrot.lane.b32.xlu0 %v1767, 112
  %v1863 = vpop.permute.xlu0 %1862
  %1864 = vrot.lane.b32.xlu0 %v1769, 112
  %v1865 = vpop.permute.xlu0 %1864
  %1866 = vrot.lane.b32.xlu0 %v1771, 112
  %v1867 = vpop.permute.xlu0 %1866
  %1868 = vrot.lane.b32.xlu0 %v1773, 112
  %v1869 = vpop.permute.xlu0 %1868
  %1870 = vrot.lane.b32.xlu0 %v1775, 112
  %v1871 = vpop.permute.xlu0 %1870
  %1872 = vrot.lane.b32.xlu0 %v1777, 112
  %v1873 = vpop.permute.xlu0 %1872
  %1874 = vrot.lane.b32.xlu0 %v1779, 112
  %v1875 = vpop.permute.xlu0 %1874
  %1876 = vrot.lane.b32.xlu0 %v1781, 112
  %v1877 = vpop.permute.xlu0 %1876
  %1878 = vrot.lane.b32.xlu0 %v1783, 112
  %v1879 = vpop.permute.xlu0 %1878
  %1880 = vrot.lane.b32.xlu0 %v1785, 112
  %v1881 = vpop.permute.xlu0 %1880
  %1882 = vrot.lane.b32.xlu0 %v1787, 112
  %v1883 = vpop.permute.xlu0 %1882
  %1884 = vrot.lane.b32.xlu0 %v1789, 112
  %v1885 = vpop.permute.xlu0 %1884
  %1886 = vrot.lane.b32.xlu0 %v1791, 112
  %v1887 = vpop.permute.xlu0 %1886
  %1888 = vrot.lane.b32.xlu0 %v1793, 112
  %v1889 = vpop.permute.xlu0 %1888
  %1890 = vrot.lane.b32.xlu0 %v1795, 112
  %v1891 = vpop.permute.xlu0 %1890
  %1892 = vrot.lane.b32.xlu0 %v1797, 112
  %v1893 = vpop.permute.xlu0 %1892
  %1894 = vrot.lane.b32.xlu0 %v1799, 112
  %v1895 = vpop.permute.xlu0 %1894
  %1896 = vrot.lane.b32.xlu0 %v1801, 112
  %v1897 = vpop.permute.xlu0 %1896
  %1898 = vrot.lane.b32.xlu0 %v1803, 112
  %v1899 = vpop.permute.xlu0 %1898
  %1900 = vrot.lane.b32.xlu0 %v1805, 112
  %v1901 = vpop.permute.xlu0 %1900
  %1902 = vrot.lane.b32.xlu0 %v1807, 112
  %v1903 = vpop.permute.xlu0 %1902
  %1904 = vrot.lane.b32.xlu0 %v1809, 112
  %v1905 = vpop.permute.xlu0 %1904
  %1906 = vrot.lane.b32.xlu0 %v1811, 112
  %v1907 = vpop.permute.xlu0 %1906
  %1908 = vrot.lane.b32.xlu0 %v1813, 112
  %v1909 = vpop.permute.xlu0 %1908
  %1910 = vrot.lane.b32.xlu0 %v1815, 112
  %v1911 = vpop.permute.xlu0 %1910
  %1912 = vrot.lane.b32.xlu0 %v1817, 112
  %v1913 = vpop.permute.xlu0 %1912
  %1914 = vrot.lane.b32.xlu0 %v1819, 112
  %v1915 = vpop.permute.xlu0 %1914
  %1916 = vrot.lane.b32.xlu0 %v1821, 112
  %v1917 = vpop.permute.xlu0 %1916
  %1918 = vrot.lane.b32.xlu0 %v1823, 112
  %v1919 = vpop.permute.xlu0 %1918
  %vm1952 = vcmask 31744
  %v1953 = vsel %vm1952, %v1857, 0.0
  %1954 = vadd.xlane.f32.xlu0 %v1953
  %v1955 = vpop.xlane.xlu0 %1954
  %v1956 = vsel %vm1952, %v1859, 0.0
  %1957 = vadd.xlane.f32.xlu0 %v1956
  %v1958 = vpop.xlane.xlu0 %1957
  %v1959 = vsel %vm1952, %v1861, 0.0
  %1960 = vadd.xlane.f32.xlu0 %v1959
  %v1961 = vpop.xlane.xlu0 %1960
  %v1962 = vsel %vm1952, %v1863, 0.0
  %1963 = vadd.xlane.f32.xlu0 %v1962
  %v1964 = vpop.xlane.xlu0 %1963
  %v1965 = vsel %vm1952, %v1865, 0.0
  %1966 = vadd.xlane.f32.xlu0 %v1965
  %v1967 = vpop.xlane.xlu0 %1966
  %v1968 = vsel %vm1952, %v1867, 0.0
  %1969 = vadd.xlane.f32.xlu0 %v1968
  %v1970 = vpop.xlane.xlu0 %1969
  %v1971 = vsel %vm1952, %v1869, 0.0
  %1972 = vadd.xlane.f32.xlu0 %v1971
  %v1973 = vpop.xlane.xlu0 %1972
  %v1974 = vsel %vm1952, %v1871, 0.0
  %1975 = vadd.xlane.f32.xlu0 %v1974
  %v1976 = vpop.xlane.xlu0 %1975
  %v1977 = vsel %vm1952, %v1873, 0.0
  %1978 = vadd.xlane.f32.xlu0 %v1977
  %v1979 = vpop.xlane.xlu0 %1978
  %v1980 = vsel %vm1952, %v1875, 0.0
  %1981 = vadd.xlane.f32.xlu0 %v1980
  %v1982 = vpop.xlane.xlu0 %1981
  %v1983 = vsel %vm1952, %v1877, 0.0
  %1984 = vadd.xlane.f32.xlu0 %v1983
  %v1985 = vpop.xlane.xlu0 %1984
  %v1986 = vsel %vm1952, %v1879, 0.0
  %1987 = vadd.xlane.f32.xlu0 %v1986
  %v1988 = vpop.xlane.xlu0 %1987
  %v1989 = vsel %vm1952, %v1881, 0.0
  %1990 = vadd.xlane.f32.xlu0 %v1989
  %v1991 = vpop.xlane.xlu0 %1990
  %v1992 = vsel %vm1952, %v1883, 0.0
  %1993 = vadd.xlane.f32.xlu0 %v1992
  %v1994 = vpop.xlane.xlu0 %1993
  %v1995 = vsel %vm1952, %v1885, 0.0
  %1996 = vadd.xlane.f32.xlu0 %v1995
  %v1997 = vpop.xlane.xlu0 %1996
  %v1998 = vsel %vm1952, %v1887, 0.0
  %1999 = vadd.xlane.f32.xlu0 %v1998
  %v2000 = vpop.xlane.xlu0 %1999
  %v2001 = vsel %vm1952, %v1889, 0.0
  %2002 = vadd.xlane.f32.xlu0 %v2001
  %v2003 = vpop.xlane.xlu0 %2002
  %v2004 = vsel %vm1952, %v1891, 0.0
  %2005 = vadd.xlane.f32.xlu0 %v2004
  %v2006 = vpop.xlane.xlu0 %2005
  %v2007 = vsel %vm1952, %v1893, 0.0
  %2008 = vadd.xlane.f32.xlu0 %v2007
  %v2009 = vpop.xlane.xlu0 %2008
  %v2010 = vsel %vm1952, %v1895, 0.0
  %2011 = vadd.xlane.f32.xlu0 %v2010
  %v2012 = vpop.xlane.xlu0 %2011
  %v2013 = vsel %vm1952, %v1897, 0.0
  %2014 = vadd.xlane.f32.xlu0 %v2013
  %v2015 = vpop.xlane.xlu0 %2014
  %v2016 = vsel %vm1952, %v1899, 0.0
  %2017 = vadd.xlane.f32.xlu0 %v2016
  %v2018 = vpop.xlane.xlu0 %2017
  %v2019 = vsel %vm1952, %v1901, 0.0
  %2020 = vadd.xlane.f32.xlu0 %v2019
  %v2021 = vpop.xlane.xlu0 %2020
  %v2022 = vsel %vm1952, %v1903, 0.0
  %2023 = vadd.xlane.f32.xlu0 %v2022
  %v2024 = vpop.xlane.xlu0 %2023
  %v2025 = vsel %vm1952, %v1905, 0.0
  %2026 = vadd.xlane.f32.xlu0 %v2025
  %v2027 = vpop.xlane.xlu0 %2026
  %v2028 = vsel %vm1952, %v1907, 0.0
  %2029 = vadd.xlane.f32.xlu0 %v2028
  %v2030 = vpop.xlane.xlu0 %2029
  %v2031 = vsel %vm1952, %v1909, 0.0
  %2032 = vadd.xlane.f32.xlu0 %v2031
  %v2033 = vpop.xlane.xlu0 %2032
  %v2034 = vsel %vm1952, %v1911, 0.0
  %2035 = vadd.xlane.f32.xlu0 %v2034
  %v2036 = vpop.xlane.xlu0 %2035
  %v2037 = vsel %vm1952, %v1913, 0.0
  %2038 = vadd.xlane.f32.xlu0 %v2037
  %v2039 = vpop.xlane.xlu0 %2038
  %v2040 = vsel %vm1952, %v1915, 0.0
  %2041 = vadd.xlane.f32.xlu0 %v2040
  %v2042 = vpop.xlane.xlu0 %2041
  %v2043 = vsel %vm1952, %v1917, 0.0
  %2044 = vadd.xlane.f32.xlu0 %v2043
  %v2045 = vpop.xlane.xlu0 %2044
  %v2046 = vsel %vm1952, %v1919, 0.0
  %2047 = vadd.xlane.f32.xlu0 %v2046
  %v2048 = vpop.xlane.xlu0 %2047
  %v2049 = vrcp.pop %v1955
  %v2050 = vmul.f32 %v1955, %v2049
  %v2051 = vsub.f32 1.0, %v2050
  %v2052 = vmul.f32 %v2049, %v2051
  %v2053 = vadd.f32 %v2049, %v2052
  %vm2054 = vweird.f32 %v1955
  %vm2055 = vweird.f32 %v2049
  %vm2056 = vmor %vm2054, %vm2055
  %v2057 = vsel %vm2056, %v2049, %v2053
  %v2058 = vand.u32 2147483647, %v1955
  %vm2059 = vcmp.eq.f32.partialorder %v2058, 8.507059e+37
  %v2060 = vand.u32 %v1955, 2147483648
  %v2061 = vor.u32 1.1754944e-38, %v2060
  %v2062 = vsel %vm2059, %v2061, %v2057
  %v2063 = vmul.f32 1.0, %v2062
  %v2064 = vrcp.pop %v1958
  %v2065 = vmul.f32 %v1958, %v2064
  %v2066 = vsub.f32 1.0, %v2065
  %v2067 = vmul.f32 %v2064, %v2066
  %v2068 = vadd.f32 %v2064, %v2067
  %vm2069 = vweird.f32 %v1958
  %vm2070 = vweird.f32 %v2064
  %vm2071 = vmor %vm2069, %vm2070
  %v2072 = vsel %vm2071, %v2064, %v2068
  %v2073 = vand.u32 2147483647, %v1958
  %vm2074 = vcmp.eq.f32.partialorder %v2073, 8.507059e+37
  %v2075 = vand.u32 %v1958, 2147483648
  %v2076 = vor.u32 1.1754944e-38, %v2075
  %v2077 = vsel %vm2074, %v2076, %v2072
  %v2078 = vmul.f32 1.0, %v2077
  %v2079 = vrcp.pop %v1961
  %v2080 = vmul.f32 %v1961, %v2079
  %v2081 = vsub.f32 1.0, %v2080
  %v2082 = vmul.f32 %v2079, %v2081
  %v2083 = vadd.f32 %v2079, %v2082
  %vm2084 = vweird.f32 %v1961
  %vm2085 = vweird.f32 %v2079
  %vm2086 = vmor %vm2084, %vm2085
  %v2087 = vsel %vm2086, %v2079, %v2083
  %v2088 = vand.u32 2147483647, %v1961
  %vm2089 = vcmp.eq.f32.partialorder %v2088, 8.507059e+37
  %v2090 = vand.u32 %v1961, 2147483648
  %v2091 = vor.u32 1.1754944e-38, %v2090
  %v2092 = vsel %vm2089, %v2091, %v2087
  %v2093 = vmul.f32 1.0, %v2092
  %v2094 = vrcp.pop %v1964
  %v2095 = vmul.f32 %v1964, %v2094
  %v2096 = vsub.f32 1.0, %v2095
  %v2097 = vmul.f32 %v2094, %v2096
  %v2098 = vadd.f32 %v2094, %v2097
  %vm2099 = vweird.f32 %v1964
  %vm2100 = vweird.f32 %v2094
  %vm2101 = vmor %vm2099, %vm2100
  %v2102 = vsel %vm2101, %v2094, %v2098
  %v2103 = vand.u32 2147483647, %v1964
  %vm2104 = vcmp.eq.f32.partialorder %v2103, 8.507059e+37
  %v2105 = vand.u32 %v1964, 2147483648
  %v2106 = vor.u32 1.1754944e-38, %v2105
  %v2107 = vsel %vm2104, %v2106, %v2102
  %v2108 = vmul.f32 1.0, %v2107
  %v2109 = vrcp.pop %v1967
  %v2110 = vmul.f32 %v1967, %v2109
  %v2111 = vsub.f32 1.0, %v2110
  %v2112 = vmul.f32 %v2109, %v2111
  %v2113 = vadd.f32 %v2109, %v2112
  %vm2114 = vweird.f32 %v1967
  %vm2115 = vweird.f32 %v2109
  %vm2116 = vmor %vm2114, %vm2115
  %v2117 = vsel %vm2116, %v2109, %v2113
  %v2118 = vand.u32 2147483647, %v1967
  %vm2119 = vcmp.eq.f32.partialorder %v2118, 8.507059e+37
  %v2120 = vand.u32 %v1967, 2147483648
  %v2121 = vor.u32 1.1754944e-38, %v2120
  %v2122 = vsel %vm2119, %v2121, %v2117
  %v2123 = vmul.f32 1.0, %v2122
  %v2124 = vrcp.pop %v1970
  %v2125 = vmul.f32 %v1970, %v2124
  %v2126 = vsub.f32 1.0, %v2125
  %v2127 = vmul.f32 %v2124, %v2126
  %v2128 = vadd.f32 %v2124, %v2127
  %vm2129 = vweird.f32 %v1970
  %vm2130 = vweird.f32 %v2124
  %vm2131 = vmor %vm2129, %vm2130
  %v2132 = vsel %vm2131, %v2124, %v2128
  %v2133 = vand.u32 2147483647, %v1970
  %vm2134 = vcmp.eq.f32.partialorder %v2133, 8.507059e+37
  %v2135 = vand.u32 %v1970, 2147483648
  %v2136 = vor.u32 1.1754944e-38, %v2135
  %v2137 = vsel %vm2134, %v2136, %v2132
  %v2138 = vmul.f32 1.0, %v2137
  %v2139 = vrcp.pop %v1973
  %v2140 = vmul.f32 %v1973, %v2139
  %v2141 = vsub.f32 1.0, %v2140
  %v2142 = vmul.f32 %v2139, %v2141
  %v2143 = vadd.f32 %v2139, %v2142
  %vm2144 = vweird.f32 %v1973
  %vm2145 = vweird.f32 %v2139
  %vm2146 = vmor %vm2144, %vm2145
  %v2147 = vsel %vm2146, %v2139, %v2143
  %v2148 = vand.u32 2147483647, %v1973
  %vm2149 = vcmp.eq.f32.partialorder %v2148, 8.507059e+37
  %v2150 = vand.u32 %v1973, 2147483648
  %v2151 = vor.u32 1.1754944e-38, %v2150
  %v2152 = vsel %vm2149, %v2151, %v2147
  %v2153 = vmul.f32 1.0, %v2152
  %v2154 = vrcp.pop %v1976
  %v2155 = vmul.f32 %v1976, %v2154
  %v2156 = vsub.f32 1.0, %v2155
  %v2157 = vmul.f32 %v2154, %v2156
  %v2158 = vadd.f32 %v2154, %v2157
  %vm2159 = vweird.f32 %v1976
  %vm2160 = vweird.f32 %v2154
  %vm2161 = vmor %vm2159, %vm2160
  %v2162 = vsel %vm2161, %v2154, %v2158
  %v2163 = vand.u32 2147483647, %v1976
  %vm2164 = vcmp.eq.f32.partialorder %v2163, 8.507059e+37
  %v2165 = vand.u32 %v1976, 2147483648
  %v2166 = vor.u32 1.1754944e-38, %v2165
  %v2167 = vsel %vm2164, %v2166, %v2162
  %v2168 = vmul.f32 1.0, %v2167
  %v2169 = vrcp.pop %v1979
  %v2170 = vmul.f32 %v1979, %v2169
  %v2171 = vsub.f32 1.0, %v2170
  %v2172 = vmul.f32 %v2169, %v2171
  %v2173 = vadd.f32 %v2169, %v2172
  %vm2174 = vweird.f32 %v1979
  %vm2175 = vweird.f32 %v2169
  %vm2176 = vmor %vm2174, %vm2175
  %v2177 = vsel %vm2176, %v2169, %v2173
  %v2178 = vand.u32 2147483647, %v1979
  %vm2179 = vcmp.eq.f32.partialorder %v2178, 8.507059e+37
  %v2180 = vand.u32 %v1979, 2147483648
  %v2181 = vor.u32 1.1754944e-38, %v2180
  %v2182 = vsel %vm2179, %v2181, %v2177
  %v2183 = vmul.f32 1.0, %v2182
  %v2184 = vrcp.pop %v1982
  %v2185 = vmul.f32 %v1982, %v2184
  %v2186 = vsub.f32 1.0, %v2185
  %v2187 = vmul.f32 %v2184, %v2186
  %v2188 = vadd.f32 %v2184, %v2187
  %vm2189 = vweird.f32 %v1982
  %vm2190 = vweird.f32 %v2184
  %vm2191 = vmor %vm2189, %vm2190
  %v2192 = vsel %vm2191, %v2184, %v2188
  %v2193 = vand.u32 2147483647, %v1982
  %vm2194 = vcmp.eq.f32.partialorder %v2193, 8.507059e+37
  %v2195 = vand.u32 %v1982, 2147483648
  %v2196 = vor.u32 1.1754944e-38, %v2195
  %v2197 = vsel %vm2194, %v2196, %v2192
  %v2198 = vmul.f32 1.0, %v2197
  %v2199 = vrcp.pop %v1985
  %v2200 = vmul.f32 %v1985, %v2199
  %v2201 = vsub.f32 1.0, %v2200
  %v2202 = vmul.f32 %v2199, %v2201
  %v2203 = vadd.f32 %v2199, %v2202
  %vm2204 = vweird.f32 %v1985
  %vm2205 = vweird.f32 %v2199
  %vm2206 = vmor %vm2204, %vm2205
  %v2207 = vsel %vm2206, %v2199, %v2203
  %v2208 = vand.u32 2147483647, %v1985
  %vm2209 = vcmp.eq.f32.partialorder %v2208, 8.507059e+37
  %v2210 = vand.u32 %v1985, 2147483648
  %v2211 = vor.u32 1.1754944e-38, %v2210
  %v2212 = vsel %vm2209, %v2211, %v2207
  %v2213 = vmul.f32 1.0, %v2212
  %v2214 = vrcp.pop %v1988
  %v2215 = vmul.f32 %v1988, %v2214
  %v2216 = vsub.f32 1.0, %v2215
  %v2217 = vmul.f32 %v2214, %v2216
  %v2218 = vadd.f32 %v2214, %v2217
  %vm2219 = vweird.f32 %v1988
  %vm2220 = vweird.f32 %v2214
  %vm2221 = vmor %vm2219, %vm2220
  %v2222 = vsel %vm2221, %v2214, %v2218
  %v2223 = vand.u32 2147483647, %v1988
  %vm2224 = vcmp.eq.f32.partialorder %v2223, 8.507059e+37
  %v2225 = vand.u32 %v1988, 2147483648
  %v2226 = vor.u32 1.1754944e-38, %v2225
  %v2227 = vsel %vm2224, %v2226, %v2222
  %v2228 = vmul.f32 1.0, %v2227
  %v2229 = vrcp.pop %v1991
  %v2230 = vmul.f32 %v1991, %v2229
  %v2231 = vsub.f32 1.0, %v2230
  %v2232 = vmul.f32 %v2229, %v2231
  %v2233 = vadd.f32 %v2229, %v2232
  %vm2234 = vweird.f32 %v1991
  %vm2235 = vweird.f32 %v2229
  %vm2236 = vmor %vm2234, %vm2235
  %v2237 = vsel %vm2236, %v2229, %v2233
  %v2238 = vand.u32 2147483647, %v1991
  %vm2239 = vcmp.eq.f32.partialorder %v2238, 8.507059e+37
  %v2240 = vand.u32 %v1991, 2147483648
  %v2241 = vor.u32 1.1754944e-38, %v2240
  %v2242 = vsel %vm2239, %v2241, %v2237
  %v2243 = vmul.f32 1.0, %v2242
  %v2244 = vrcp.pop %v1994
  %v2245 = vmul.f32 %v1994, %v2244
  %v2246 = vsub.f32 1.0, %v2245
  %v2247 = vmul.f32 %v2244, %v2246
  %v2248 = vadd.f32 %v2244, %v2247
  %vm2249 = vweird.f32 %v1994
  %vm2250 = vweird.f32 %v2244
  %vm2251 = vmor %vm2249, %vm2250
  %v2252 = vsel %vm2251, %v2244, %v2248
  %v2253 = vand.u32 2147483647, %v1994
  %vm2254 = vcmp.eq.f32.partialorder %v2253, 8.507059e+37
  %v2255 = vand.u32 %v1994, 2147483648
  %v2256 = vor.u32 1.1754944e-38, %v2255
  %v2257 = vsel %vm2254, %v2256, %v2252
  %v2258 = vmul.f32 1.0, %v2257
  %v2259 = vrcp.pop %v1997
  %v2260 = vmul.f32 %v1997, %v2259
  %v2261 = vsub.f32 1.0, %v2260
  %v2262 = vmul.f32 %v2259, %v2261
  %v2263 = vadd.f32 %v2259, %v2262
  %vm2264 = vweird.f32 %v1997
  %vm2265 = vweird.f32 %v2259
  %vm2266 = vmor %vm2264, %vm2265
  %v2267 = vsel %vm2266, %v2259, %v2263
  %v2268 = vand.u32 2147483647, %v1997
  %vm2269 = vcmp.eq.f32.partialorder %v2268, 8.507059e+37
  %v2270 = vand.u32 %v1997, 2147483648
  %v2271 = vor.u32 1.1754944e-38, %v2270
  %v2272 = vsel %vm2269, %v2271, %v2267
  %v2273 = vmul.f32 1.0, %v2272
  %v2274 = vrcp.pop %v2000
  %v2275 = vmul.f32 %v2000, %v2274
  %v2276 = vsub.f32 1.0, %v2275
  %v2277 = vmul.f32 %v2274, %v2276
  %v2278 = vadd.f32 %v2274, %v2277
  %vm2279 = vweird.f32 %v2000
  %vm2280 = vweird.f32 %v2274
  %vm2281 = vmor %vm2279, %vm2280
  %v2282 = vsel %vm2281, %v2274, %v2278
  %v2283 = vand.u32 2147483647, %v2000
  %vm2284 = vcmp.eq.f32.partialorder %v2283, 8.507059e+37
  %v2285 = vand.u32 %v2000, 2147483648
  %v2286 = vor.u32 1.1754944e-38, %v2285
  %v2287 = vsel %vm2284, %v2286, %v2282
  %v2288 = vmul.f32 1.0, %v2287
  %v2289 = vrcp.pop %v2003
  %v2290 = vmul.f32 %v2003, %v2289
  %v2291 = vsub.f32 1.0, %v2290
  %v2292 = vmul.f32 %v2289, %v2291
  %v2293 = vadd.f32 %v2289, %v2292
  %vm2294 = vweird.f32 %v2003
  %vm2295 = vweird.f32 %v2289
  %vm2296 = vmor %vm2294, %vm2295
  %v2297 = vsel %vm2296, %v2289, %v2293
  %v2298 = vand.u32 2147483647, %v2003
  %vm2299 = vcmp.eq.f32.partialorder %v2298, 8.507059e+37
  %v2300 = vand.u32 %v2003, 2147483648
  %v2301 = vor.u32 1.1754944e-38, %v2300
  %v2302 = vsel %vm2299, %v2301, %v2297
  %v2303 = vmul.f32 1.0, %v2302
  %v2304 = vrcp.pop %v2006
  %v2305 = vmul.f32 %v2006, %v2304
  %v2306 = vsub.f32 1.0, %v2305
  %v2307 = vmul.f32 %v2304, %v2306
  %v2308 = vadd.f32 %v2304, %v2307
  %vm2309 = vweird.f32 %v2006
  %vm2310 = vweird.f32 %v2304
  %vm2311 = vmor %vm2309, %vm2310
  %v2312 = vsel %vm2311, %v2304, %v2308
  %v2313 = vand.u32 2147483647, %v2006
  %vm2314 = vcmp.eq.f32.partialorder %v2313, 8.507059e+37
  %v2315 = vand.u32 %v2006, 2147483648
  %v2316 = vor.u32 1.1754944e-38, %v2315
  %v2317 = vsel %vm2314, %v2316, %v2312
  %v2318 = vmul.f32 1.0, %v2317
  %v2319 = vrcp.pop %v2009
  %v2320 = vmul.f32 %v2009, %v2319
  %v2321 = vsub.f32 1.0, %v2320
  %v2322 = vmul.f32 %v2319, %v2321
  %v2323 = vadd.f32 %v2319, %v2322
  %vm2324 = vweird.f32 %v2009
  %vm2325 = vweird.f32 %v2319
  %vm2326 = vmor %vm2324, %vm2325
  %v2327 = vsel %vm2326, %v2319, %v2323
  %v2328 = vand.u32 2147483647, %v2009
  %vm2329 = vcmp.eq.f32.partialorder %v2328, 8.507059e+37
  %v2330 = vand.u32 %v2009, 2147483648
  %v2331 = vor.u32 1.1754944e-38, %v2330
  %v2332 = vsel %vm2329, %v2331, %v2327
  %v2333 = vmul.f32 1.0, %v2332
  %v2334 = vrcp.pop %v2012
  %v2335 = vmul.f32 %v2012, %v2334
  %v2336 = vsub.f32 1.0, %v2335
  %v2337 = vmul.f32 %v2334, %v2336
  %v2338 = vadd.f32 %v2334, %v2337
  %vm2339 = vweird.f32 %v2012
  %vm2340 = vweird.f32 %v2334
  %vm2341 = vmor %vm2339, %vm2340
  %v2342 = vsel %vm2341, %v2334, %v2338
  %v2343 = vand.u32 2147483647, %v2012
  %vm2344 = vcmp.eq.f32.partialorder %v2343, 8.507059e+37
  %v2345 = vand.u32 %v2012, 2147483648
  %v2346 = vor.u32 1.1754944e-38, %v2345
  %v2347 = vsel %vm2344, %v2346, %v2342
  %v2348 = vmul.f32 1.0, %v2347
  %v2349 = vrcp.pop %v2015
  %v2350 = vmul.f32 %v2015, %v2349
  %v2351 = vsub.f32 1.0, %v2350
  %v2352 = vmul.f32 %v2349, %v2351
  %v2353 = vadd.f32 %v2349, %v2352
  %vm2354 = vweird.f32 %v2015
  %vm2355 = vweird.f32 %v2349
  %vm2356 = vmor %vm2354, %vm2355
  %v2357 = vsel %vm2356, %v2349, %v2353
  %v2358 = vand.u32 2147483647, %v2015
  %vm2359 = vcmp.eq.f32.partialorder %v2358, 8.507059e+37
  %v2360 = vand.u32 %v2015, 2147483648
  %v2361 = vor.u32 1.1754944e-38, %v2360
  %v2362 = vsel %vm2359, %v2361, %v2357
  %v2363 = vmul.f32 1.0, %v2362
  %v2364 = vrcp.pop %v2018
  %v2365 = vmul.f32 %v2018, %v2364
  %v2366 = vsub.f32 1.0, %v2365
  %v2367 = vmul.f32 %v2364, %v2366
  %v2368 = vadd.f32 %v2364, %v2367
  %vm2369 = vweird.f32 %v2018
  %vm2370 = vweird.f32 %v2364
  %vm2371 = vmor %vm2369, %vm2370
  %v2372 = vsel %vm2371, %v2364, %v2368
  %v2373 = vand.u32 2147483647, %v2018
  %vm2374 = vcmp.eq.f32.partialorder %v2373, 8.507059e+37
  %v2375 = vand.u32 %v2018, 2147483648
  %v2376 = vor.u32 1.1754944e-38, %v2375
  %v2377 = vsel %vm2374, %v2376, %v2372
  %v2378 = vmul.f32 1.0, %v2377
  %v2379 = vrcp.pop %v2021
  %v2380 = vmul.f32 %v2021, %v2379
  %v2381 = vsub.f32 1.0, %v2380
  %v2382 = vmul.f32 %v2379, %v2381
  %v2383 = vadd.f32 %v2379, %v2382
  %vm2384 = vweird.f32 %v2021
  %vm2385 = vweird.f32 %v2379
  %vm2386 = vmor %vm2384, %vm2385
  %v2387 = vsel %vm2386, %v2379, %v2383
  %v2388 = vand.u32 2147483647, %v2021
  %vm2389 = vcmp.eq.f32.partialorder %v2388, 8.507059e+37
  %v2390 = vand.u32 %v2021, 2147483648
  %v2391 = vor.u32 1.1754944e-38, %v2390
  %v2392 = vsel %vm2389, %v2391, %v2387
  %v2393 = vmul.f32 1.0, %v2392
  %v2394 = vrcp.pop %v2024
  %v2395 = vmul.f32 %v2024, %v2394
  %v2396 = vsub.f32 1.0, %v2395
  %v2397 = vmul.f32 %v2394, %v2396
  %v2398 = vadd.f32 %v2394, %v2397
  %vm2399 = vweird.f32 %v2024
  %vm2400 = vweird.f32 %v2394
  %vm2401 = vmor %vm2399, %vm2400
  %v2402 = vsel %vm2401, %v2394, %v2398
  %v2403 = vand.u32 2147483647, %v2024
  %vm2404 = vcmp.eq.f32.partialorder %v2403, 8.507059e+37
  %v2405 = vand.u32 %v2024, 2147483648
  %v2406 = vor.u32 1.1754944e-38, %v2405
  %v2407 = vsel %vm2404, %v2406, %v2402
  %v2408 = vmul.f32 1.0, %v2407
  %v2409 = vrcp.pop %v2027
  %v2410 = vmul.f32 %v2027, %v2409
  %v2411 = vsub.f32 1.0, %v2410
  %v2412 = vmul.f32 %v2409, %v2411
  %v2413 = vadd.f32 %v2409, %v2412
  %vm2414 = vweird.f32 %v2027
  %vm2415 = vweird.f32 %v2409
  %vm2416 = vmor %vm2414, %vm2415
  %v2417 = vsel %vm2416, %v2409, %v2413
  %v2418 = vand.u32 2147483647, %v2027
  %vm2419 = vcmp.eq.f32.partialorder %v2418, 8.507059e+37
  %v2420 = vand.u32 %v2027, 2147483648
  %v2421 = vor.u32 1.1754944e-38, %v2420
  %v2422 = vsel %vm2419, %v2421, %v2417
  %v2423 = vmul.f32 1.0, %v2422
  %v2424 = vrcp.pop %v2030
  %v2425 = vmul.f32 %v2030, %v2424
  %v2426 = vsub.f32 1.0, %v2425
  %v2427 = vmul.f32 %v2424, %v2426
  %v2428 = vadd.f32 %v2424, %v2427
  %vm2429 = vweird.f32 %v2030
  %vm2430 = vweird.f32 %v2424
  %vm2431 = vmor %vm2429, %vm2430
  %v2432 = vsel %vm2431, %v2424, %v2428
  %v2433 = vand.u32 2147483647, %v2030
  %vm2434 = vcmp.eq.f32.partialorder %v2433, 8.507059e+37
  %v2435 = vand.u32 %v2030, 2147483648
  %v2436 = vor.u32 1.1754944e-38, %v2435
  %v2437 = vsel %vm2434, %v2436, %v2432
  %v2438 = vmul.f32 1.0, %v2437
  %v2439 = vrcp.pop %v2033
  %v2440 = vmul.f32 %v2033, %v2439
  %v2441 = vsub.f32 1.0, %v2440
  %v2442 = vmul.f32 %v2439, %v2441
  %v2443 = vadd.f32 %v2439, %v2442
  %vm2444 = vweird.f32 %v2033
  %vm2445 = vweird.f32 %v2439
  %vm2446 = vmor %vm2444, %vm2445
  %v2447 = vsel %vm2446, %v2439, %v2443
  %v2448 = vand.u32 2147483647, %v2033
  %vm2449 = vcmp.eq.f32.partialorder %v2448, 8.507059e+37
  %v2450 = vand.u32 %v2033, 2147483648
  %v2451 = vor.u32 1.1754944e-38, %v2450
  %v2452 = vsel %vm2449, %v2451, %v2447
  %v2453 = vmul.f32 1.0, %v2452
  %v2454 = vrcp.pop %v2036
  %v2455 = vmul.f32 %v2036, %v2454
  %v2456 = vsub.f32 1.0, %v2455
  %v2457 = vmul.f32 %v2454, %v2456
  %v2458 = vadd.f32 %v2454, %v2457
  %vm2459 = vweird.f32 %v2036
  %vm2460 = vweird.f32 %v2454
  %vm2461 = vmor %vm2459, %vm2460
  %v2462 = vsel %vm2461, %v2454, %v2458
  %v2463 = vand.u32 2147483647, %v2036
  %vm2464 = vcmp.eq.f32.partialorder %v2463, 8.507059e+37
  %v2465 = vand.u32 %v2036, 2147483648
  %v2466 = vor.u32 1.1754944e-38, %v2465
  %v2467 = vsel %vm2464, %v2466, %v2462
  %v2468 = vmul.f32 1.0, %v2467
  %v2469 = vrcp.pop %v2039
  %v2470 = vmul.f32 %v2039, %v2469
  %v2471 = vsub.f32 1.0, %v2470
  %v2472 = vmul.f32 %v2469, %v2471
  %v2473 = vadd.f32 %v2469, %v2472
  %vm2474 = vweird.f32 %v2039
  %vm2475 = vweird.f32 %v2469
  %vm2476 = vmor %vm2474, %vm2475
  %v2477 = vsel %vm2476, %v2469, %v2473
  %v2478 = vand.u32 2147483647, %v2039
  %vm2479 = vcmp.eq.f32.partialorder %v2478, 8.507059e+37
  %v2480 = vand.u32 %v2039, 2147483648
  %v2481 = vor.u32 1.1754944e-38, %v2480
  %v2482 = vsel %vm2479, %v2481, %v2477
  %v2483 = vmul.f32 1.0, %v2482
  %v2484 = vrcp.pop %v2042
  %v2485 = vmul.f32 %v2042, %v2484
  %v2486 = vsub.f32 1.0, %v2485
  %v2487 = vmul.f32 %v2484, %v2486
  %v2488 = vadd.f32 %v2484, %v2487
  %vm2489 = vweird.f32 %v2042
  %vm2490 = vweird.f32 %v2484
  %vm2491 = vmor %vm2489, %vm2490
  %v2492 = vsel %vm2491, %v2484, %v2488
  %v2493 = vand.u32 2147483647, %v2042
  %vm2494 = vcmp.eq.f32.partialorder %v2493, 8.507059e+37
  %v2495 = vand.u32 %v2042, 2147483648
  %v2496 = vor.u32 1.1754944e-38, %v2495
  %v2497 = vsel %vm2494, %v2496, %v2492
  %v2498 = vmul.f32 1.0, %v2497
  %v2499 = vrcp.pop %v2045
  %v2500 = vmul.f32 %v2045, %v2499
  %v2501 = vsub.f32 1.0, %v2500
  %v2502 = vmul.f32 %v2499, %v2501
  %v2503 = vadd.f32 %v2499, %v2502
  %vm2504 = vweird.f32 %v2045
  %vm2505 = vweird.f32 %v2499
  %vm2506 = vmor %vm2504, %vm2505
  %v2507 = vsel %vm2506, %v2499, %v2503
  %v2508 = vand.u32 2147483647, %v2045
  %vm2509 = vcmp.eq.f32.partialorder %v2508, 8.507059e+37
  %v2510 = vand.u32 %v2045, 2147483648
  %v2511 = vor.u32 1.1754944e-38, %v2510
  %v2512 = vsel %vm2509, %v2511, %v2507
  %v2513 = vmul.f32 1.0, %v2512
  %v2514 = vrcp.pop %v2048
  %v2515 = vmul.f32 %v2048, %v2514
  %v2516 = vsub.f32 1.0, %v2515
  %v2517 = vmul.f32 %v2514, %v2516
  %v2518 = vadd.f32 %v2514, %v2517
  %vm2519 = vweird.f32 %v2048
  %vm2520 = vweird.f32 %v2514
  %vm2521 = vmor %vm2519, %vm2520
  %v2522 = vsel %vm2521, %v2514, %v2518
  %v2523 = vand.u32 2147483647, %v2048
  %vm2524 = vcmp.eq.f32.partialorder %v2523, 8.507059e+37
  %v2525 = vand.u32 %v2048, 2147483648
  %v2526 = vor.u32 1.1754944e-38, %v2525
  %v2527 = vsel %vm2524, %v2526, %v2522
  %v2528 = vmul.f32 1.0, %v2527
  %v2529 = vmul.f32 %v1761, %v2063
  %v2530 = vmul.f32 %v1763, %v2078
  %v2531 = vmul.f32 %v1765, %v2093
  %v2532 = vmul.f32 %v1767, %v2108
  %v2533 = vmul.f32 %v1769, %v2123
  %v2534 = vmul.f32 %v1771, %v2138
  %v2535 = vmul.f32 %v1773, %v2153
  %v2536 = vmul.f32 %v1775, %v2168
  %v2537 = vmul.f32 %v1777, %v2183
  %v2538 = vmul.f32 %v1779, %v2198
  %v2539 = vmul.f32 %v1781, %v2213
  %v2540 = vmul.f32 %v1783, %v2228
  %v2541 = vmul.f32 %v1785, %v2243
  %v2542 = vmul.f32 %v1787, %v2258
  %v2543 = vmul.f32 %v1789, %v2273
  %v2544 = vmul.f32 %v1791, %v2288
  %v2545 = vmul.f32 %v1793, %v2303
  %v2546 = vmul.f32 %v1795, %v2318
  %v2547 = vmul.f32 %v1797, %v2333
  %v2548 = vmul.f32 %v1799, %v2348
  %v2549 = vmul.f32 %v1801, %v2363
  %v2550 = vmul.f32 %v1803, %v2378
  %v2551 = vmul.f32 %v1805, %v2393
  %v2552 = vmul.f32 %v1807, %v2408
  %v2553 = vmul.f32 %v1809, %v2423
  %v2554 = vmul.f32 %v1811, %v2438
  %v2555 = vmul.f32 %v1813, %v2453
  %v2556 = vmul.f32 %v1815, %v2468
  %v2557 = vmul.f32 %v1817, %v2483
  %v2558 = vmul.f32 %v1819, %v2498
  %v2559 = vmul.f32 %v1821, %v2513
  %v2560 = vmul.f32 %v1823, %v2528
  %v2561 = vld [vmem:[%s7] sm:$0xff]
  %v2562 = vld [vmem:[%s7 + $0x8] sm:$0xff]
  %v2563 = vld [vmem:[%s7 + $0x10] sm:$0xff]
  %v2564 = vld [vmem:[%s7 + $0x18] sm:$0xff]
  %v2565 = vld [vmem:[%s8] sm:$0x1]
  %v2567 = vperm.slane %v2565, 0
  %v2570 = vsel %vm83, %v73, 0
  %v2573 = vsel %vm83, %v74, 0
  %2575 = vmatpush.msra.mxu0 0.0
  %2576 = vmatpush.msra.mxu0 0.0
  %2577 = vmatpush.msra.mxu0 0.0
  %2578 = vmatpush.msra.mxu0 0.0
  %2579 = vmatpush.msra.mxu0 0.0
  %2580 = vmatpush.msra.mxu0 0.0
  %2581 = vmatpush.msra.mxu0 0.0
  %2582 = vmatpush.msra.mxu0 0.0
  %2583 = vmatpush.msra.mxu0 0.0
  %2584 = vmatpush.msra.mxu0 0.0
  %2585 = vmatpush.msra.mxu0 0.0
  %2586 = vmatpush.msra.mxu0 0.0
  %2587 = vmatpush.msra.mxu0 %v2564
  %2588 = vmatpush.msra.mxu0 %v2563
  %2589 = vmatpush.msra.mxu0 %v2562
  %2590 = vmatpush.msra.mxu0 %v2561
  %2591 = vmatmul.f32.gmra.mxu0 %v2570
  %v2592 = vpop.f32.mrf.mxu0
  %v2593 = vadd.f32 %v2567, %v2592
  %2594 = vmatmul.f32.gmra.mxu0 %v2573
  %v2595 = vpop.f32.mrf.mxu0
  %v2596 = vadd.f32 %v2567, %v2595
  %2597 = vdwg.mxu0
  %v2598 = vmul.f32 %v2593, %v2593
  %v2599 = vmul.f32 %v2596, %v2596
  %v2600 = vsel %vm574, %v2598, 0.0
  %2601 = vadd.xlane.f32.xlu0 %v2600
  %v2602 = vpop.xlane.xlu0 %2601
  %v2603 = vsel %vm574, %v2599, 0.0
  %2604 = vadd.xlane.f32.xlu0 %v2603
  %v2605 = vpop.xlane.xlu0 %2604
  %v2606 = vrsqrt.pop %v2602
  %v2607 = vmul.f32 %v2606, %v2602
  %v2608 = vmul.f32 %v2607, %v2606
  %v2609 = vmul.f32 0.5, %v2608
  %v2610 = vsub.f32 1.5, %v2609
  %v2611 = vmul.f32 %v2606, %v2610
  %v2612 = vmul.f32 %v2602, %v2611
  %vm2613 = vcmp.eq.f32.partialorder %v2602, inf
  %v2614 = vsel %vm2613, %v2602, %v2612
  %vm2615 = vcmp.eq.f32.partialorder %v2602, 0.0
  %v2616 = vand.u32 %v2602, 2147483648
  %v2617 = vsel %vm2615, %v2616, %v2614
  %v2618 = vrsqrt.pop %v2605
  %v2619 = vmul.f32 %v2618, %v2605
  %v2620 = vmul.f32 %v2619, %v2618
  %v2621 = vmul.f32 0.5, %v2620
  %v2622 = vsub.f32 1.5, %v2621
  %v2623 = vmul.f32 %v2618, %v2622
  %v2624 = vmul.f32 %v2605, %v2623
  %vm2625 = vcmp.eq.f32.partialorder %v2605, inf
  %v2626 = vsel %vm2625, %v2605, %v2624
  %vm2627 = vcmp.eq.f32.partialorder %v2605, 0.0
  %v2628 = vand.u32 %v2605, 2147483648
  %v2629 = vsel %vm2627, %v2628, %v2626
  %v2630 = vadd.f32 %v2602, 1.0
  %v2631 = vadd.f32 %v2605, 1.0
  %v2632 = vrcp.pop %v2630
  %v2633 = vmul.f32 %v2630, %v2632
  %v2634 = vsub.f32 1.0, %v2633
  %v2635 = vmul.f32 %v2632, %v2634
  %v2636 = vadd.f32 %v2632, %v2635
  %vm2637 = vweird.f32 %v2630
  %vm2638 = vweird.f32 %v2632
  %vm2639 = vmor %vm2637, %vm2638
  %v2640 = vsel %vm2639, %v2632, %v2636
  %v2641 = vand.u32 2147483647, %v2630
  %vm2642 = vcmp.eq.f32.partialorder %v2641, 8.507059e+37
  %v2643 = vand.u32 %v2630, 2147483648
  %v2644 = vor.u32 1.1754944e-38, %v2643
  %v2645 = vsel %vm2642, %v2644, %v2640
  %v2646 = vmul.f32 1.0, %v2645
  %v2647 = vrcp.pop %v2631
  %v2648 = vmul.f32 %v2631, %v2647
  %v2649 = vsub.f32 1.0, %v2648
  %v2650 = vmul.f32 %v2647, %v2649
  %v2651 = vadd.f32 %v2647, %v2650
  %vm2652 = vweird.f32 %v2631
  %vm2653 = vweird.f32 %v2647
  %vm2654 = vmor %vm2652, %vm2653
  %v2655 = vsel %vm2654, %v2647, %v2651
  %v2656 = vand.u32 2147483647, %v2631
  %vm2657 = vcmp.eq.f32.partialorder %v2656, 8.507059e+37
  %v2658 = vand.u32 %v2631, 2147483648
  %v2659 = vor.u32 1.1754944e-38, %v2658
  %v2660 = vsel %vm2657, %v2659, %v2655
  %v2661 = vmul.f32 1.0, %v2660
  %v2662 = vmul.f32 %v2617, %v2646
  %v2663 = vmul.f32 %v2629, %v2661
  %v2664 = vmul.f32 %v2662, %v2593
  %v2665 = vmul.f32 %v2663, %v2596
  %v2666 = vld [vmem:[%s9] sm:$0xff]
  %v2667 = vld [vmem:[%s9 + $0x8] sm:$0xff]
  %v2669 = vsel %vm574, %v2664, 0
  %v2672 = vsel %vm574, %v2665, 0
  %2674 = vmatpush.msra.mxu0 0.0
  %2675 = vmatpush.msra.mxu0 0.0
  %2676 = vmatpush.msra.mxu0 0.0
  %2677 = vmatpush.msra.mxu0 0.0
  %2678 = vmatpush.msra.mxu0 0.0
  %2679 = vmatpush.msra.mxu0 0.0
  %2680 = vmatpush.msra.mxu0 0.0
  %2681 = vmatpush.msra.mxu0 0.0
  %2682 = vmatpush.msra.mxu0 0.0
  %2683 = vmatpush.msra.mxu0 0.0
  %2684 = vmatpush.msra.mxu0 0.0
  %2685 = vmatpush.msra.mxu0 0.0
  %2686 = vmatpush.msra.mxu0 0.0
  %2687 = vmatpush.msra.mxu0 0.0
  %2688 = vmatpush.msra.mxu0 %v2667
  %2689 = vmatpush.msra.mxu0 %v2666
  %2690 = vmatmul.f32.gmra.mxu0 %v2669
  %v2691 = vpop.f32.mrf.mxu0
  %v2692 = vadd.f32 0.0, %v2691
  %2693 = vmatmul.f32.gmra.mxu0 %v2672
  %v2694 = vpop.f32.mrf.mxu0
  %v2695 = vadd.f32 0.0, %v2694
  %2696 = vdwg.mxu0
  %v2699 = vrot.slane %v2692, 1
  %v2700 = vrot.slane %v2692, 2
  %v2701 = vrot.slane %v2692, 3
  %v2702 = vrot.slane %v2692, 4
  %v2703 = vrot.slane %v2692, 5
  %v2704 = vrot.slane %v2692, 6
  %v2705 = vrot.slane %v2692, 7
  %v2706 = vrot.slane %v2695, 1
  %v2707 = vrot.slane %v2695, 2
  %v2708 = vrot.slane %v2695, 3
  %v2709 = vrot.slane %v2695, 4
  %v2710 = vrot.slane %v2695, 5
  %v2711 = vrot.slane %v2695, 6
  %v2712 = vrot.slane %v2695, 7
  %v2713 = vsel %vm574, %v2692, 0
  %v2716 = vsel %vm574, %v1599, 0
  %v2719 = vsel %vm574, %v1600, 0
  %2721 = vmatpush.xpose.msra.mxu0 0.0
  %2722 = vmatpush.xpose.msra.mxu0 0.0
  %2723 = vmatpush.xpose.msra.mxu0 0.0
  %2724 = vmatpush.xpose.msra.mxu0 0.0
  %2725 = vmatpush.xpose.msra.mxu0 0.0
  %2726 = vmatpush.xpose.msra.mxu0 0.0
  %2727 = vmatpush.xpose.msra.mxu0 0.0
  %2728 = vmatpush.xpose.msra.mxu0 0.0
  %2729 = vmatpush.xpose.msra.mxu0 0.0
  %2730 = vmatpush.xpose.msra.mxu0 0.0
  %2731 = vmatpush.xpose.msra.mxu0 0.0
  %2732 = vmatpush.xpose.msra.mxu0 0.0
  %2733 = vmatpush.xpose.msra.mxu0 0.0
  %2734 = vmatpush.xpose.msra.mxu0 0.0
  %2735 = vmatpush.xpose.msra.mxu0 %v2719
  %2736 = vmatpush.xpose.msra.mxu0 %v2716
  %2737 = vmatmul.f32.gmra.mxu0 %v2713
  %v2738 = vpop.f32.mrf.mxu0
  %v2739 = vadd.f32 0.0, %v2738
  %2740 = vdwg.mxu0
  %v2741 = vsel %vm574, %v2699, 0
  %v2744 = vsel %vm574, %v1601, 0
  %v2747 = vsel %vm574, %v1602, 0
  %2749 = vmatpush.xpose.msra.mxu0 0.0
  %2750 = vmatpush.xpose.msra.mxu0 0.0
  %2751 = vmatpush.xpose.msra.mxu0 0.0
  %2752 = vmatpush.xpose.msra.mxu0 0.0
  %2753 = vmatpush.xpose.msra.mxu0 0.0
  %2754 = vmatpush.xpose.msra.mxu0 0.0
  %2755 = vmatpush.xpose.msra.mxu0 0.0
  %2756 = vmatpush.xpose.msra.mxu0 0.0
  %2757 = vmatpush.xpose.msra.mxu0 0.0
  %2758 = vmatpush.xpose.msra.mxu0 0.0
  %2759 = vmatpush.xpose.msra.mxu0 0.0
  %2760 = vmatpush.xpose.msra.mxu0 0.0
  %2761 = vmatpush.xpose.msra.mxu0 0.0
  %2762 = vmatpush.xpose.msra.mxu0 0.0
  %2763 = vmatpush.xpose.msra.mxu0 %v2747
  %2764 = vmatpush.xpose.msra.mxu0 %v2744
  %2765 = vmatmul.f32.gmra.mxu0 %v2741
  %v2766 = vpop.f32.mrf.mxu0
  %v2767 = vadd.f32 0.0, %v2766
  %2768 = vdwg.mxu0
  %v2769 = vsel %vm574, %v2700, 0
  %v2772 = vsel %vm574, %v1603, 0
  %v2775 = vsel %vm574, %v1604, 0
  %2777 = vmatpush.xpose.msra.mxu0 0.0
  %2778 = vmatpush.xpose.msra.mxu0 0.0
  %2779 = vmatpush.xpose.msra.mxu0 0.0
  %2780 = vmatpush.xpose.msra.mxu0 0.0
  %2781 = vmatpush.xpose.msra.mxu0 0.0
  %2782 = vmatpush.xpose.msra.mxu0 0.0
  %2783 = vmatpush.xpose.msra.mxu0 0.0
  %2784 = vmatpush.xpose.msra.mxu0 0.0
  %2785 = vmatpush.xpose.msra.mxu0 0.0
  %2786 = vmatpush.xpose.msra.mxu0 0.0
  %2787 = vmatpush.xpose.msra.mxu0 0.0
  %2788 = vmatpush.xpose.msra.mxu0 0.0
  %2789 = vmatpush.xpose.msra.mxu0 0.0
  %2790 = vmatpush.xpose.msra.mxu0 0.0
  %2791 = vmatpush.xpose.msra.mxu0 %v2775
  %2792 = vmatpush.xpose.msra.mxu0 %v2772
  %2793 = vmatmul.f32.gmra.mxu0 %v2769
  %v2794 = vpop.f32.mrf.mxu0
  %v2795 = vadd.f32 0.0, %v2794
  %2796 = vdwg.mxu0
  %v2797 = vsel %vm574, %v2701, 0
  %v2800 = vsel %vm574, %v1605, 0
  %v2803 = vsel %vm574, %v1606, 0
  %2805 = vmatpush.xpose.msra.mxu0 0.0
  %2806 = vmatpush.xpose.msra.mxu0 0.0
  %2807 = vmatpush.xpose.msra.mxu0 0.0
  %2808 = vmatpush.xpose.msra.mxu0 0.0
  %2809 = vmatpush.xpose.msra.mxu0 0.0
  %2810 = vmatpush.xpose.msra.mxu0 0.0
  %2811 = vmatpush.xpose.msra.mxu0 0.0
  %2812 = vmatpush.xpose.msra.mxu0 0.0
  %2813 = vmatpush.xpose.msra.mxu0 0.0
  %2814 = vmatpush.xpose.msra.mxu0 0.0
  %2815 = vmatpush.xpose.msra.mxu0 0.0
  %2816 = vmatpush.xpose.msra.mxu0 0.0
  %2817 = vmatpush.xpose.msra.mxu0 0.0
  %2818 = vmatpush.xpose.msra.mxu0 0.0
  %2819 = vmatpush.xpose.msra.mxu0 %v2803
  %2820 = vmatpush.xpose.msra.mxu0 %v2800
  %2821 = vmatmul.f32.gmra.mxu0 %v2797
  %v2822 = vpop.f32.mrf.mxu0
  %v2823 = vadd.f32 0.0, %v2822
  %2824 = vdwg.mxu0
  %v2825 = vsel %vm574, %v2702, 0
  %v2828 = vsel %vm574, %v1607, 0
  %v2831 = vsel %vm574, %v1608, 0
  %2833 = vmatpush.xpose.msra.mxu0 0.0
  %2834 = vmatpush.xpose.msra.mxu0 0.0
  %2835 = vmatpush.xpose.msra.mxu0 0.0
  %2836 = vmatpush.xpose.msra.mxu0 0.0
  %2837 = vmatpush.xpose.msra.mxu0 0.0
  %2838 = vmatpush.xpose.msra.mxu0 0.0
  %2839 = vmatpush.xpose.msra.mxu0 0.0
  %2840 = vmatpush.xpose.msra.mxu0 0.0
  %2841 = vmatpush.xpose.msra.mxu0 0.0
  %2842 = vmatpush.xpose.msra.mxu0 0.0
  %2843 = vmatpush.xpose.msra.mxu0 0.0
  %2844 = vmatpush.xpose.msra.mxu0 0.0
  %2845 = vmatpush.xpose.msra.mxu0 0.0
  %2846 = vmatpush.xpose.msra.mxu0 0.0
  %2847 = vmatpush.xpose.msra.mxu0 %v2831
  %2848 = vmatpush.xpose.msra.mxu0 %v2828
  %2849 = vmatmul.f32.gmra.mxu0 %v2825
  %v2850 = vpop.f32.mrf.mxu0
  %v2851 = vadd.f32 0.0, %v2850
  %2852 = vdwg.mxu0
  %v2853 = vsel %vm574, %v2703, 0
  %v2856 = vsel %vm574, %v1609, 0
  %v2859 = vsel %vm574, %v1610, 0
  %2861 = vmatpush.xpose.msra.mxu0 0.0
  %2862 = vmatpush.xpose.msra.mxu0 0.0
  %2863 = vmatpush.xpose.msra.mxu0 0.0
  %2864 = vmatpush.xpose.msra.mxu0 0.0
  %2865 = vmatpush.xpose.msra.mxu0 0.0
  %2866 = vmatpush.xpose.msra.mxu0 0.0
  %2867 = vmatpush.xpose.msra.mxu0 0.0
  %2868 = vmatpush.xpose.msra.mxu0 0.0
  %2869 = vmatpush.xpose.msra.mxu0 0.0
  %2870 = vmatpush.xpose.msra.mxu0 0.0
  %2871 = vmatpush.xpose.msra.mxu0 0.0
  %2872 = vmatpush.xpose.msra.mxu0 0.0
  %2873 = vmatpush.xpose.msra.mxu0 0.0
  %2874 = vmatpush.xpose.msra.mxu0 0.0
  %2875 = vmatpush.xpose.msra.mxu0 %v2859
  %2876 = vmatpush.xpose.msra.mxu0 %v2856
  %2877 = vmatmul.f32.gmra.mxu0 %v2853
  %v2878 = vpop.f32.mrf.mxu0
  %v2879 = vadd.f32 0.0, %v2878
  %2880 = vdwg.mxu0
  %v2881 = vsel %vm574, %v2704, 0
  %v2884 = vsel %vm574, %v1611, 0
  %v2887 = vsel %vm574, %v1612, 0
  %2889 = vmatpush.xpose.msra.mxu0 0.0
  %2890 = vmatpush.xpose.msra.mxu0 0.0
  %2891 = vmatpush.xpose.msra.mxu0 0.0
  %2892 = vmatpush.xpose.msra.mxu0 0.0
  %2893 = vmatpush.xpose.msra.mxu0 0.0
  %2894 = vmatpush.xpose.msra.mxu0 0.0
  %2895 = vmatpush.xpose.msra.mxu0 0.0
  %2896 = vmatpush.xpose.msra.mxu0 0.0
  %2897 = vmatpush.xpose.msra.mxu0 0.0
  %2898 = vmatpush.xpose.msra.mxu0 0.0
  %2899 = vmatpush.xpose.msra.mxu0 0.0
  %2900 = vmatpush.xpose.msra.mxu0 0.0
  %2901 = vmatpush.xpose.msra.mxu0 0.0
  %2902 = vmatpush.xpose.msra.mxu0 0.0
  %2903 = vmatpush.xpose.msra.mxu0 %v2887
  %2904 = vmatpush.xpose.msra.mxu0 %v2884
  %2905 = vmatmul.f32.gmra.mxu0 %v2881
  %v2906 = vpop.f32.mrf.mxu0
  %v2907 = vadd.f32 0.0, %v2906
  %2908 = vdwg.mxu0
  %v2909 = vsel %vm574, %v2705, 0
  %v2912 = vsel %vm574, %v1613, 0
  %v2915 = vsel %vm574, %v1614, 0
  %2917 = vmatpush.xpose.msra.mxu0 0.0
  %2918 = vmatpush.xpose.msra.mxu0 0.0
  %2919 = vmatpush.xpose.msra.mxu0 0.0
  %2920 = vmatpush.xpose.msra.mxu0 0.0
  %2921 = vmatpush.xpose.msra.mxu0 0.0
  %2922 = vmatpush.xpose.msra.mxu0 0.0
  %2923 = vmatpush.xpose.msra.mxu0 0.0
  %2924 = vmatpush.xpose.msra.mxu0 0.0
  %2925 = vmatpush.xpose.msra.mxu0 0.0
  %2926 = vmatpush.xpose.msra.mxu0 0.0
  %2927 = vmatpush.xpose.msra.mxu0 0.0
  %2928 = vmatpush.xpose.msra.mxu0 0.0
  %2929 = vmatpush.xpose.msra.mxu0 0.0
  %2930 = vmatpush.xpose.msra.mxu0 0.0
  %2931 = vmatpush.xpose.msra.mxu0 %v2915
  %2932 = vmatpush.xpose.msra.mxu0 %v2912
  %2933 = vmatmul.f32.gmra.mxu0 %v2909
  %v2934 = vpop.f32.mrf.mxu0
  %v2935 = vadd.f32 0.0, %v2934
  %2936 = vdwg.mxu0
  %v2937 = vsel %vm574, %v2695, 0
  %v2940 = vsel %vm574, %v1615, 0
  %v2943 = vsel %vm574, %v1616, 0
  %2945 = vmatpush.xpose.msra.mxu0 0.0
  %2946 = vmatpush.xpose.msra.mxu0 0.0
  %2947 = vmatpush.xpose.msra.mxu0 0.0
  %2948 = vmatpush.xpose.msra.mxu0 0.0
  %2949 = vmatpush.xpose.msra.mxu0 0.0
  %2950 = vmatpush.xpose.msra.mxu0 0.0
  %2951 = vmatpush.xpose.msra.mxu0 0.0
  %2952 = vmatpush.xpose.msra.mxu0 0.0
  %2953 = vmatpush.xpose.msra.mxu0 0.0
  %2954 = vmatpush.xpose.msra.mxu0 0.0
  %2955 = vmatpush.xpose.msra.mxu0 0.0
  %2956 = vmatpush.xpose.msra.mxu0 0.0
  %2957 = vmatpush.xpose.msra.mxu0 0.0
  %2958 = vmatpush.xpose.msra.mxu0 0.0
  %2959 = vmatpush.xpose.msra.mxu0 %v2943
  %2960 = vmatpush.xpose.msra.mxu0 %v2940
  %2961 = vmatmul.f32.gmra.mxu0 %v2937
  %v2962 = vpop.f32.mrf.mxu0
  %v2963 = vadd.f32 0.0, %v2962
  %2964 = vdwg.mxu0
  %v2965 = vsel %vm574, %v2706, 0
  %v2968 = vsel %vm574, %v1617, 0
  %v2971 = vsel %vm574, %v1618, 0
  %2973 = vmatpush.xpose.msra.mxu0 0.0
  %2974 = vmatpush.xpose.msra.mxu0 0.0
  %2975 = vmatpush.xpose.msra.mxu0 0.0
  %2976 = vmatpush.xpose.msra.mxu0 0.0
  %2977 = vmatpush.xpose.msra.mxu0 0.0
  %2978 = vmatpush.xpose.msra.mxu0 0.0
  %2979 = vmatpush.xpose.msra.mxu0 0.0
  %2980 = vmatpush.xpose.msra.mxu0 0.0
  %2981 = vmatpush.xpose.msra.mxu0 0.0
  %2982 = vmatpush.xpose.msra.mxu0 0.0
  %2983 = vmatpush.xpose.msra.mxu0 0.0
  %2984 = vmatpush.xpose.msra.mxu0 0.0
  %2985 = vmatpush.xpose.msra.mxu0 0.0
  %2986 = vmatpush.xpose.msra.mxu0 0.0
  %2987 = vmatpush.xpose.msra.mxu0 %v2971
  %2988 = vmatpush.xpose.msra.mxu0 %v2968
  %2989 = vmatmul.f32.gmra.mxu0 %v2965
  %v2990 = vpop.f32.mrf.mxu0
  %v2991 = vadd.f32 0.0, %v2990
  %2992 = vdwg.mxu0
  %v2993 = vsel %vm574, %v2707, 0
  %v2996 = vsel %vm574, %v1619, 0
  %v2999 = vsel %vm574, %v1620, 0
  %3001 = vmatpush.xpose.msra.mxu0 0.0
  %3002 = vmatpush.xpose.msra.mxu0 0.0
  %3003 = vmatpush.xpose.msra.mxu0 0.0
  %3004 = vmatpush.xpose.msra.mxu0 0.0
  %3005 = vmatpush.xpose.msra.mxu0 0.0
  %3006 = vmatpush.xpose.msra.mxu0 0.0
  %3007 = vmatpush.xpose.msra.mxu0 0.0
  %3008 = vmatpush.xpose.msra.mxu0 0.0
  %3009 = vmatpush.xpose.msra.mxu0 0.0
  %3010 = vmatpush.xpose.msra.mxu0 0.0
  %3011 = vmatpush.xpose.msra.mxu0 0.0
  %3012 = vmatpush.xpose.msra.mxu0 0.0
  %3013 = vmatpush.xpose.msra.mxu0 0.0
  %3014 = vmatpush.xpose.msra.mxu0 0.0
  %3015 = vmatpush.xpose.msra.mxu0 %v2999
  %3016 = vmatpush.xpose.msra.mxu0 %v2996
  %3017 = vmatmul.f32.gmra.mxu0 %v2993
  %v3018 = vpop.f32.mrf.mxu0
  %v3019 = vadd.f32 0.0, %v3018
  %3020 = vdwg.mxu0
  %v3021 = vsel %vm574, %v2708, 0
  %v3024 = vsel %vm574, %v1621, 0
  %v3027 = vsel %vm574, %v1622, 0
  %3029 = vmatpush.xpose.msra.mxu0 0.0
  %3030 = vmatpush.xpose.msra.mxu0 0.0
  %3031 = vmatpush.xpose.msra.mxu0 0.0
  %3032 = vmatpush.xpose.msra.mxu0 0.0
  %3033 = vmatpush.xpose.msra.mxu0 0.0
  %3034 = vmatpush.xpose.msra.mxu0 0.0
  %3035 = vmatpush.xpose.msra.mxu0 0.0
  %3036 = vmatpush.xpose.msra.mxu0 0.0
  %3037 = vmatpush.xpose.msra.mxu0 0.0
  %3038 = vmatpush.xpose.msra.mxu0 0.0
  %3039 = vmatpush.xpose.msra.mxu0 0.0
  %3040 = vmatpush.xpose.msra.mxu0 0.0
  %3041 = vmatpush.xpose.msra.mxu0 0.0
  %3042 = vmatpush.xpose.msra.mxu0 0.0
  %3043 = vmatpush.xpose.msra.mxu0 %v3027
  %3044 = vmatpush.xpose.msra.mxu0 %v3024
  %3045 = vmatmul.f32.gmra.mxu0 %v3021
  %v3046 = vpop.f32.mrf.mxu0
  %v3047 = vadd.f32 0.0, %v3046
  %3048 = vdwg.mxu0
  %v3049 = vsel %vm574, %v2709, 0
  %v3052 = vsel %vm574, %v1623, 0
  %v3055 = vsel %vm574, %v1624, 0
  %3057 = vmatpush.xpose.msra.mxu0 0.0
  %3058 = vmatpush.xpose.msra.mxu0 0.0
  %3059 = vmatpush.xpose.msra.mxu0 0.0
  %3060 = vmatpush.xpose.msra.mxu0 0.0
  %3061 = vmatpush.xpose.msra.mxu0 0.0
  %3062 = vmatpush.xpose.msra.mxu0 0.0
  %3063 = vmatpush.xpose.msra.mxu0 0.0
  %3064 = vmatpush.xpose.msra.mxu0 0.0
  %3065 = vmatpush.xpose.msra.mxu0 0.0
  %3066 = vmatpush.xpose.msra.mxu0 0.0
  %3067 = vmatpush.xpose.msra.mxu0 0.0
  %3068 = vmatpush.xpose.msra.mxu0 0.0
  %3069 = vmatpush.xpose.msra.mxu0 0.0
  %3070 = vmatpush.xpose.msra.mxu0 0.0
  %3071 = vmatpush.xpose.msra.mxu0 %v3055
  %3072 = vmatpush.xpose.msra.mxu0 %v3052
  %3073 = vmatmul.f32.gmra.mxu0 %v3049
  %v3074 = vpop.f32.mrf.mxu0
  %v3075 = vadd.f32 0.0, %v3074
  %3076 = vdwg.mxu0
  %v3077 = vsel %vm574, %v2710, 0
  %v3080 = vsel %vm574, %v1625, 0
  %v3083 = vsel %vm574, %v1626, 0
  %3085 = vmatpush.xpose.msra.mxu0 0.0
  %3086 = vmatpush.xpose.msra.mxu0 0.0
  %3087 = vmatpush.xpose.msra.mxu0 0.0
  %3088 = vmatpush.xpose.msra.mxu0 0.0
  %3089 = vmatpush.xpose.msra.mxu0 0.0
  %3090 = vmatpush.xpose.msra.mxu0 0.0
  %3091 = vmatpush.xpose.msra.mxu0 0.0
  %3092 = vmatpush.xpose.msra.mxu0 0.0
  %3093 = vmatpush.xpose.msra.mxu0 0.0
  %3094 = vmatpush.xpose.msra.mxu0 0.0
  %3095 = vmatpush.xpose.msra.mxu0 0.0
  %3096 = vmatpush.xpose.msra.mxu0 0.0
  %3097 = vmatpush.xpose.msra.mxu0 0.0
  %3098 = vmatpush.xpose.msra.mxu0 0.0
  %3099 = vmatpush.xpose.msra.mxu0 %v3083
  %3100 = vmatpush.xpose.msra.mxu0 %v3080
  %3101 = vmatmul.f32.gmra.mxu0 %v3077
  %v3102 = vpop.f32.mrf.mxu0
  %v3103 = vadd.f32 0.0, %v3102
  %3104 = vdwg.mxu0
  %v3105 = vsel %vm574, %v2711, 0
  %v3108 = vsel %vm574, %v1627, 0
  %v3111 = vsel %vm574, %v1628, 0
  %3113 = vmatpush.xpose.msra.mxu0 0.0
  %3114 = vmatpush.xpose.msra.mxu0 0.0
  %3115 = vmatpush.xpose.msra.mxu0 0.0
  %3116 = vmatpush.xpose.msra.mxu0 0.0
  %3117 = vmatpush.xpose.msra.mxu0 0.0
  %3118 = vmatpush.xpose.msra.mxu0 0.0
  %3119 = vmatpush.xpose.msra.mxu0 0.0
  %3120 = vmatpush.xpose.msra.mxu0 0.0
  %3121 = vmatpush.xpose.msra.mxu0 0.0
  %3122 = vmatpush.xpose.msra.mxu0 0.0
  %3123 = vmatpush.xpose.msra.mxu0 0.0
  %3124 = vmatpush.xpose.msra.mxu0 0.0
  %3125 = vmatpush.xpose.msra.mxu0 0.0
  %3126 = vmatpush.xpose.msra.mxu0 0.0
  %3127 = vmatpush.xpose.msra.mxu0 %v3111
  %3128 = vmatpush.xpose.msra.mxu0 %v3108
  %3129 = vmatmul.f32.gmra.mxu0 %v3105
  %v3130 = vpop.f32.mrf.mxu0
  %v3131 = vadd.f32 0.0, %v3130
  %3132 = vdwg.mxu0
  %v3133 = vsel %vm574, %v2712, 0
  %v3136 = vsel %vm574, %v1629, 0
  %v3139 = vsel %vm574, %v1630, 0
  %3141 = vmatpush.xpose.msra.mxu0 0.0
  %3142 = vmatpush.xpose.msra.mxu0 0.0
  %3143 = vmatpush.xpose.msra.mxu0 0.0
  %3144 = vmatpush.xpose.msra.mxu0 0.0
  %3145 = vmatpush.xpose.msra.mxu0 0.0
  %3146 = vmatpush.xpose.msra.mxu0 0.0
  %3147 = vmatpush.xpose.msra.mxu0 0.0
  %3148 = vmatpush.xpose.msra.mxu0 0.0
  %3149 = vmatpush.xpose.msra.mxu0 0.0
  %3150 = vmatpush.xpose.msra.mxu0 0.0
  %3151 = vmatpush.xpose.msra.mxu0 0.0
  %3152 = vmatpush.xpose.msra.mxu0 0.0
  %3153 = vmatpush.xpose.msra.mxu0 0.0
  %3154 = vmatpush.xpose.msra.mxu0 0.0
  %3155 = vmatpush.xpose.msra.mxu0 %v3139
  %3156 = vmatpush.xpose.msra.mxu0 %v3136
  %3157 = vmatmul.f32.gmra.mxu0 %v3133
  %v3158 = vpop.f32.mrf.mxu0
  %v3159 = vadd.f32 0.0, %v3158
  %3160 = vdwg.mxu0
  %vm3161 = vcmp.gt.f32.partialorder %v71, 0.0
  %vm3162 = vcmp.gt.f32.partialorder %v72, 0.0
  %v3179 = vrot.slane %v2767, 7
  %vm3180 = vcmask 1041409
  %v3181 = vsel %vm3180, %v3179, %v2739
  %v3182 = vrot.slane %v2795, 6
  %vm3183 = vcmask 1042434
  %v3184 = vsel %vm3183, %v3182, %v3181
  %v3185 = vrot.slane %v2823, 5
  %vm3186 = vcmask 1043459
  %v3187 = vsel %vm3186, %v3185, %v3184
  %v3188 = vrot.slane %v2851, 4
  %vm3189 = vcmask 1044484
  %v3190 = vsel %vm3189, %v3188, %v3187
  %v3191 = vrot.slane %v2879, 3
  %vm3192 = vcmask 1045509
  %v3193 = vsel %vm3192, %v3191, %v3190
  %v3194 = vrot.slane %v2907, 2
  %vm3195 = vcmask 1046534
  %v3196 = vsel %vm3195, %v3194, %v3193
  %v3197 = vrot.slane %v2935, 1
  %vm3198 = vcmask 1047559
  %v3199 = vsel %vm3198, %v3197, %v3196
  %v3200 = vrot.slane %v2991, 7
  %v3201 = vsel %vm3180, %v3200, %v2963
  %v3202 = vrot.slane %v3019, 6
  %v3203 = vsel %vm3183, %v3202, %v3201
  %v3204 = vrot.slane %v3047, 5
  %v3205 = vsel %vm3186, %v3204, %v3203
  %v3206 = vrot.slane %v3075, 4
  %v3207 = vsel %vm3189, %v3206, %v3205
  %v3208 = vrot.slane %v3103, 3
  %v3209 = vsel %vm3192, %v3208, %v3207
  %v3210 = vrot.slane %v3131, 2
  %v3211 = vsel %vm3195, %v3210, %v3209
  %v3212 = vrot.slane %v3159, 1
  %v3213 = vsel %vm3198, %v3212, %v3211
  %v3216 = vsel %vm3161, %v3199, -1e+30
  %v3217 = vsel %vm3162, %v3213, -1e+30
  %v3218 = vsel %vm574, %v3216, -inf
  %3219 = vmax.xlane.f32.xlu0 %v3218
  %v3220 = vpop.xlane.xlu0 %3219
  %v3221 = vsel %vm574, %v3217, -inf
  %3222 = vmax.xlane.f32.xlu0 %v3221
  %v3223 = vpop.xlane.xlu0 %3222
  %v3224 = vsub.f32 %v3216, %v3220
  %v3225 = vsub.f32 %v3217, %v3223
  %v3226 = vmul.f32 %v3224, 1.442695
  %v3227 = vpow.pop %v3226
  %v3228 = vmul.f32 %v3225, 1.442695
  %v3229 = vpow.pop %v3228
  %v3230 = vsel %vm574, %v3227, 0.0
  %3231 = vadd.xlane.f32.xlu0 %v3230
  %v3232 = vpop.xlane.xlu0 %3231
  %v3233 = vsel %vm574, %v3229, 0.0
  %3234 = vadd.xlane.f32.xlu0 %v3233
  %v3235 = vpop.xlane.xlu0 %3234
  %v3236 = vrcp.pop %v3232
  %v3237 = vmul.f32 %v3232, %v3236
  %v3238 = vsub.f32 1.0, %v3237
  %v3239 = vmul.f32 %v3236, %v3238
  %v3240 = vadd.f32 %v3236, %v3239
  %vm3241 = vweird.f32 %v3232
  %vm3242 = vweird.f32 %v3236
  %vm3243 = vmor %vm3241, %vm3242
  %v3244 = vsel %vm3243, %v3236, %v3240
  %v3245 = vand.u32 2147483647, %v3232
  %vm3246 = vcmp.eq.f32.partialorder %v3245, 8.507059e+37
  %v3247 = vand.u32 %v3232, 2147483648
  %v3248 = vor.u32 1.1754944e-38, %v3247
  %v3249 = vsel %vm3246, %v3248, %v3244
  %v3250 = vmul.f32 1.0, %v3249
  %v3251 = vrcp.pop %v3235
  %v3252 = vmul.f32 %v3235, %v3251
  %v3253 = vsub.f32 1.0, %v3252
  %v3254 = vmul.f32 %v3251, %v3253
  %v3255 = vadd.f32 %v3251, %v3254
  %vm3256 = vweird.f32 %v3235
  %vm3257 = vweird.f32 %v3251
  %vm3258 = vmor %vm3256, %vm3257
  %v3259 = vsel %vm3258, %v3251, %v3255
  %v3260 = vand.u32 2147483647, %v3235
  %vm3261 = vcmp.eq.f32.partialorder %v3260, 8.507059e+37
  %v3262 = vand.u32 %v3235, 2147483648
  %v3263 = vor.u32 1.1754944e-38, %v3262
  %v3264 = vsel %vm3261, %v3263, %v3259
  %v3265 = vmul.f32 1.0, %v3264
  %v3266 = vmul.f32 %v3227, %v3250
  %v3267 = vmul.f32 %v3229, %v3265
  %s3268 = sld [smem:[#allocation2]]
  %v3269 = vstv %s3268
  %v3270 = vmul.f32 %v3266, %v3269
  %v3271 = vmul.f32 %v3267, %v3269
  %v3272 = vperm.slane %v3270, 0
  %v3273 = vlaneseq
  %v3274 = vshrl.u32 %v3273, 7
  %3276 = vset.pattern.permute.xlu0 %v3274
  %3277 = vperm.xlu0 %3276, %v3272
  %v3278 = vpop.permute.xlu0 %3277
  %v3279 = vlaneseq
  %v3280 = vshrl.u32 %v3279, 7
  %v3281 = vadd.s32 %v3280, 8
  %3282 = vset.pattern.permute.xlu0 %v3281
  %3283 = vperm.xlu0 %3282, %v3272
  %v3284 = vpop.permute.xlu0 %3283
  %v3285 = vperm.slane %v3270, 1
  %v3286 = vlaneseq
  %v3287 = vshrl.u32 %v3286, 7
  %3289 = vset.pattern.permute.xlu0 %v3287
  %3290 = vperm.xlu0 %3289, %v3285
  %v3291 = vpop.permute.xlu0 %3290
  %v3292 = vlaneseq
  %v3293 = vshrl.u32 %v3292, 7
  %v3294 = vadd.s32 %v3293, 8
  %3295 = vset.pattern.permute.xlu0 %v3294
  %3296 = vperm.xlu0 %3295, %v3285
  %v3297 = vpop.permute.xlu0 %3296
  %v3298 = vperm.slane %v3270, 2
  %v3299 = vlaneseq
  %v3300 = vshrl.u32 %v3299, 7
  %3302 = vset.pattern.permute.xlu0 %v3300
  %3303 = vperm.xlu0 %3302, %v3298
  %v3304 = vpop.permute.xlu0 %3303
  %v3305 = vlaneseq
  %v3306 = vshrl.u32 %v3305, 7
  %v3307 = vadd.s32 %v3306, 8
  %3308 = vset.pattern.permute.xlu0 %v3307
  %3309 = vperm.xlu0 %3308, %v3298
  %v3310 = vpop.permute.xlu0 %3309
  %v3311 = vperm.slane %v3270, 3
  %v3312 = vlaneseq
  %v3313 = vshrl.u32 %v3312, 7
  %3315 = vset.pattern.permute.xlu0 %v3313
  %3316 = vperm.xlu0 %3315, %v3311
  %v3317 = vpop.permute.xlu0 %3316
  %v3318 = vlaneseq
  %v3319 = vshrl.u32 %v3318, 7
  %v3320 = vadd.s32 %v3319, 8
  %3321 = vset.pattern.permute.xlu0 %v3320
  %3322 = vperm.xlu0 %3321, %v3311
  %v3323 = vpop.permute.xlu0 %3322
  %v3324 = vperm.slane %v3270, 4
  %v3325 = vlaneseq
  %v3326 = vshrl.u32 %v3325, 7
  %3328 = vset.pattern.permute.xlu0 %v3326
  %3329 = vperm.xlu0 %3328, %v3324
  %v3330 = vpop.permute.xlu0 %3329
  %v3331 = vlaneseq
  %v3332 = vshrl.u32 %v3331, 7
  %v3333 = vadd.s32 %v3332, 8
  %3334 = vset.pattern.permute.xlu0 %v3333
  %3335 = vperm.xlu0 %3334, %v3324
  %v3336 = vpop.permute.xlu0 %3335
  %v3337 = vperm.slane %v3270, 5
  %v3338 = vlaneseq
  %v3339 = vshrl.u32 %v3338, 7
  %3341 = vset.pattern.permute.xlu0 %v3339
  %3342 = vperm.xlu0 %3341, %v3337
  %v3343 = vpop.permute.xlu0 %3342
  %v3344 = vlaneseq
  %v3345 = vshrl.u32 %v3344, 7
  %v3346 = vadd.s32 %v3345, 8
  %3347 = vset.pattern.permute.xlu0 %v3346
  %3348 = vperm.xlu0 %3347, %v3337
  %v3349 = vpop.permute.xlu0 %3348
  %v3350 = vperm.slane %v3270, 6
  %v3351 = vlaneseq
  %v3352 = vshrl.u32 %v3351, 7
  %3354 = vset.pattern.permute.xlu0 %v3352
  %3355 = vperm.xlu0 %3354, %v3350
  %v3356 = vpop.permute.xlu0 %3355
  %v3357 = vlaneseq
  %v3358 = vshrl.u32 %v3357, 7
  %v3359 = vadd.s32 %v3358, 8
  %3360 = vset.pattern.permute.xlu0 %v3359
  %3361 = vperm.xlu0 %3360, %v3350
  %v3362 = vpop.permute.xlu0 %3361
  %v3363 = vperm.slane %v3270, 7
  %v3364 = vlaneseq
  %v3365 = vshrl.u32 %v3364, 7
  %3367 = vset.pattern.permute.xlu0 %v3365
  %3368 = vperm.xlu0 %3367, %v3363
  %v3369 = vpop.permute.xlu0 %3368
  %v3370 = vlaneseq
  %v3371 = vshrl.u32 %v3370, 7
  %v3372 = vadd.s32 %v3371, 8
  %3373 = vset.pattern.permute.xlu0 %v3372
  %3374 = vperm.xlu0 %3373, %v3363
  %v3375 = vpop.permute.xlu0 %3374
  %v3376 = vperm.slane %v3271, 0
  %v3377 = vlaneseq
  %v3378 = vshrl.u32 %v3377, 7
  %3380 = vset.pattern.permute.xlu0 %v3378
  %3381 = vperm.xlu0 %3380, %v3376
  %v3382 = vpop.permute.xlu0 %3381
  %v3383 = vlaneseq
  %v3384 = vshrl.u32 %v3383, 7
  %v3385 = vadd.s32 %v3384, 8
  %3386 = vset.pattern.permute.xlu0 %v3385
  %3387 = vperm.xlu0 %3386, %v3376
  %v3388 = vpop.permute.xlu0 %3387
  %v3389 = vperm.slane %v3271, 1
  %v3390 = vlaneseq
  %v3391 = vshrl.u32 %v3390, 7
  %3393 = vset.pattern.permute.xlu0 %v3391
  %3394 = vperm.xlu0 %3393, %v3389
  %v3395 = vpop.permute.xlu0 %3394
  %v3396 = vlaneseq
  %v3397 = vshrl.u32 %v3396, 7
  %v3398 = vadd.s32 %v3397, 8
  %3399 = vset.pattern.permute.xlu0 %v3398
  %3400 = vperm.xlu0 %3399, %v3389
  %v3401 = vpop.permute.xlu0 %3400
  %v3402 = vperm.slane %v3271, 2
  %v3403 = vlaneseq
  %v3404 = vshrl.u32 %v3403, 7
  %3406 = vset.pattern.permute.xlu0 %v3404
  %3407 = vperm.xlu0 %3406, %v3402
  %v3408 = vpop.permute.xlu0 %3407
  %v3409 = vlaneseq
  %v3410 = vshrl.u32 %v3409, 7
  %v3411 = vadd.s32 %v3410, 8
  %3412 = vset.pattern.permute.xlu0 %v3411
  %3413 = vperm.xlu0 %3412, %v3402
  %v3414 = vpop.permute.xlu0 %3413
  %v3415 = vperm.slane %v3271, 3
  %v3416 = vlaneseq
  %v3417 = vshrl.u32 %v3416, 7
  %3419 = vset.pattern.permute.xlu0 %v3417
  %3420 = vperm.xlu0 %3419, %v3415
  %v3421 = vpop.permute.xlu0 %3420
  %v3422 = vlaneseq
  %v3423 = vshrl.u32 %v3422, 7
  %v3424 = vadd.s32 %v3423, 8
  %3425 = vset.pattern.permute.xlu0 %v3424
  %3426 = vperm.xlu0 %3425, %v3415
  %v3427 = vpop.permute.xlu0 %3426
  %v3428 = vperm.slane %v3271, 4
  %v3429 = vlaneseq
  %v3430 = vshrl.u32 %v3429, 7
  %3432 = vset.pattern.permute.xlu0 %v3430
  %3433 = vperm.xlu0 %3432, %v3428
  %v3434 = vpop.permute.xlu0 %3433
  %v3435 = vlaneseq
  %v3436 = vshrl.u32 %v3435, 7
  %v3437 = vadd.s32 %v3436, 8
  %3438 = vset.pattern.permute.xlu0 %v3437
  %3439 = vperm.xlu0 %3438, %v3428
  %v3440 = vpop.permute.xlu0 %3439
  %v3441 = vperm.slane %v3271, 5
  %v3442 = vlaneseq
  %v3443 = vshrl.u32 %v3442, 7
  %3445 = vset.pattern.permute.xlu0 %v3443
  %3446 = vperm.xlu0 %3445, %v3441
  %v3447 = vpop.permute.xlu0 %3446
  %v3448 = vlaneseq
  %v3449 = vshrl.u32 %v3448, 7
  %v3450 = vadd.s32 %v3449, 8
  %3451 = vset.pattern.permute.xlu0 %v3450
  %3452 = vperm.xlu0 %3451, %v3441
  %v3453 = vpop.permute.xlu0 %3452
  %v3454 = vperm.slane %v3271, 6
  %v3455 = vlaneseq
  %v3456 = vshrl.u32 %v3455, 7
  %3458 = vset.pattern.permute.xlu0 %v3456
  %3459 = vperm.xlu0 %3458, %v3454
  %v3460 = vpop.permute.xlu0 %3459
  %v3461 = vlaneseq
  %v3462 = vshrl.u32 %v3461, 7
  %v3463 = vadd.s32 %v3462, 8
  %3464 = vset.pattern.permute.xlu0 %v3463
  %3465 = vperm.xlu0 %3464, %v3454
  %v3466 = vpop.permute.xlu0 %3465
  %v3467 = vperm.slane %v3271, 7
  %v3468 = vlaneseq
  %v3469 = vshrl.u32 %v3468, 7
  %3471 = vset.pattern.permute.xlu0 %v3469
  %3472 = vperm.xlu0 %3471, %v3467
  %v3473 = vpop.permute.xlu0 %3472
  %v3474 = vlaneseq
  %v3475 = vshrl.u32 %v3474, 7
  %v3476 = vadd.s32 %v3475, 8
  %3477 = vset.pattern.permute.xlu0 %v3476
  %3478 = vperm.xlu0 %3477, %v3467
  %v3479 = vpop.permute.xlu0 %3478
  %v3480 = vmul.f32 %v2529, %v3278
  %v3481 = vmul.f32 %v2530, %v3284
  %v3482 = vmul.f32 %v2531, %v3291
  %v3483 = vmul.f32 %v2532, %v3297
  %v3484 = vmul.f32 %v2533, %v3304
  %v3485 = vmul.f32 %v2534, %v3310
  %v3486 = vmul.f32 %v2535, %v3317
  %v3487 = vmul.f32 %v2536, %v3323
  %v3488 = vmul.f32 %v2537, %v3330
  %v3489 = vmul.f32 %v2538, %v3336
  %v3490 = vmul.f32 %v2539, %v3343
  %v3491 = vmul.f32 %v2540, %v3349
  %v3492 = vmul.f32 %v2541, %v3356
  %v3493 = vmul.f32 %v2542, %v3362
  %v3494 = vmul.f32 %v2543, %v3369
  %v3495 = vmul.f32 %v2544, %v3375
  %v3496 = vmul.f32 %v2545, %v3382
  %v3497 = vmul.f32 %v2546, %v3388
  %v3498 = vmul.f32 %v2547, %v3395
  %v3499 = vmul.f32 %v2548, %v3401
  %v3500 = vmul.f32 %v2549, %v3408
  %v3501 = vmul.f32 %v2550, %v3414
  %v3502 = vmul.f32 %v2551, %v3421
  %v3503 = vmul.f32 %v2552, %v3427
  %v3504 = vmul.f32 %v2553, %v3434
  %v3505 = vmul.f32 %v2554, %v3440
  %v3506 = vmul.f32 %v2555, %v3447
  %v3507 = vmul.f32 %v2556, %v3453
  %v3508 = vmul.f32 %v2557, %v3460
  %v3509 = vmul.f32 %v2558, %v3466
  %v3510 = vmul.f32 %v2559, %v3473
  %v3511 = vmul.f32 %v2560, %v3479
  %3513 = vset.pattern.permute.xlu0 16
  %3514 = vperm.xlu0 %3513, %v3480
  %v3515 = vpop.permute.xlu0 %3514
  %3518 = vset.pattern.permute.xlu0 16
  %3519 = vperm.xlu0 %3518, %v3481
  %v3520 = vpop.permute.xlu0 %3519
  %3523 = vset.pattern.permute.xlu0 16
  %3524 = vperm.xlu0 %3523, %v3482
  %v3525 = vpop.permute.xlu0 %3524
  %3528 = vset.pattern.permute.xlu0 16
  %3529 = vperm.xlu0 %3528, %v3483
  %v3530 = vpop.permute.xlu0 %3529
  %3533 = vset.pattern.permute.xlu0 16
  %3534 = vperm.xlu0 %3533, %v3484
  %v3535 = vpop.permute.xlu0 %3534
  %3538 = vset.pattern.permute.xlu0 16
  %3539 = vperm.xlu0 %3538, %v3485
  %v3540 = vpop.permute.xlu0 %3539
  %3543 = vset.pattern.permute.xlu0 16
  %3544 = vperm.xlu0 %3543, %v3486
  %v3545 = vpop.permute.xlu0 %3544
  %3548 = vset.pattern.permute.xlu0 16
  %3549 = vperm.xlu0 %3548, %v3487
  %v3550 = vpop.permute.xlu0 %3549
  %3553 = vset.pattern.permute.xlu0 16
  %3554 = vperm.xlu0 %3553, %v3488
  %v3555 = vpop.permute.xlu0 %3554
  %3558 = vset.pattern.permute.xlu0 16
  %3559 = vperm.xlu0 %3558, %v3489
  %v3560 = vpop.permute.xlu0 %3559
  %3563 = vset.pattern.permute.xlu0 16
  %3564 = vperm.xlu0 %3563, %v3490
  %v3565 = vpop.permute.xlu0 %3564
  %3568 = vset.pattern.permute.xlu0 16
  %3569 = vperm.xlu0 %3568, %v3491
  %v3570 = vpop.permute.xlu0 %3569
  %3573 = vset.pattern.permute.xlu0 16
  %3574 = vperm.xlu0 %3573, %v3492
  %v3575 = vpop.permute.xlu0 %3574
  %3578 = vset.pattern.permute.xlu0 16
  %3579 = vperm.xlu0 %3578, %v3493
  %v3580 = vpop.permute.xlu0 %3579
  %3583 = vset.pattern.permute.xlu0 16
  %3584 = vperm.xlu0 %3583, %v3494
  %v3585 = vpop.permute.xlu0 %3584
  %3588 = vset.pattern.permute.xlu0 16
  %3589 = vperm.xlu0 %3588, %v3495
  %v3590 = vpop.permute.xlu0 %3589
  %3593 = vset.pattern.permute.xlu0 16
  %3594 = vperm.xlu0 %3593, %v3496
  %v3595 = vpop.permute.xlu0 %3594
  %3598 = vset.pattern.permute.xlu0 16
  %3599 = vperm.xlu0 %3598, %v3497
  %v3600 = vpop.permute.xlu0 %3599
  %3603 = vset.pattern.permute.xlu0 16
  %3604 = vperm.xlu0 %3603, %v3498
  %v3605 = vpop.permute.xlu0 %3604
  %3608 = vset.pattern.permute.xlu0 16
  %3609 = vperm.xlu0 %3608, %v3499
  %v3610 = vpop.permute.xlu0 %3609
  %3613 = vset.pattern.permute.xlu0 16
  %3614 = vperm.xlu0 %3613, %v3500
  %v3615 = vpop.permute.xlu0 %3614
  %3618 = vset.pattern.permute.xlu0 16
  %3619 = vperm.xlu0 %3618, %v3501
  %v3620 = vpop.permute.xlu0 %3619
  %3623 = vset.pattern.permute.xlu0 16
  %3624 = vperm.xlu0 %3623, %v3502
  %v3625 = vpop.permute.xlu0 %3624
  %3628 = vset.pattern.permute.xlu0 16
  %3629 = vperm.xlu0 %3628, %v3503
  %v3630 = vpop.permute.xlu0 %3629
  %3633 = vset.pattern.permute.xlu0 16
  %3634 = vperm.xlu0 %3633, %v3504
  %v3635 = vpop.permute.xlu0 %3634
  %3638 = vset.pattern.permute.xlu0 16
  %3639 = vperm.xlu0 %3638, %v3505
  %v3640 = vpop.permute.xlu0 %3639
  %3643 = vset.pattern.permute.xlu0 16
  %3644 = vperm.xlu0 %3643, %v3506
  %v3645 = vpop.permute.xlu0 %3644
  %3648 = vset.pattern.permute.xlu0 16
  %3649 = vperm.xlu0 %3648, %v3507
  %v3650 = vpop.permute.xlu0 %3649
  %3653 = vset.pattern.permute.xlu0 16
  %3654 = vperm.xlu0 %3653, %v3508
  %v3655 = vpop.permute.xlu0 %3654
  %3658 = vset.pattern.permute.xlu0 16
  %3659 = vperm.xlu0 %3658, %v3509
  %v3660 = vpop.permute.xlu0 %3659
  %3663 = vset.pattern.permute.xlu0 16
  %3664 = vperm.xlu0 %3663, %v3510
  %v3665 = vpop.permute.xlu0 %3664
  %3668 = vset.pattern.permute.xlu0 16
  %3669 = vperm.xlu0 %3668, %v3511
  %v3670 = vpop.permute.xlu0 %3669
  %v3672 = vmul.f32 %v3515, %v1599
  %v3673 = vmul.f32 %v3520, %v1600
  %v3674 = vmul.f32 %v3525, %v1601
  %v3675 = vmul.f32 %v3530, %v1602
  %v3676 = vmul.f32 %v3535, %v1603
  %v3677 = vmul.f32 %v3540, %v1604
  %v3678 = vmul.f32 %v3545, %v1605
  %v3679 = vmul.f32 %v3550, %v1606
  %v3680 = vmul.f32 %v3555, %v1607
  %v3681 = vmul.f32 %v3560, %v1608
  %v3682 = vmul.f32 %v3565, %v1609
  %v3683 = vmul.f32 %v3570, %v1610
  %v3684 = vmul.f32 %v3575, %v1611
  %v3685 = vmul.f32 %v3580, %v1612
  %v3686 = vmul.f32 %v3585, %v1613
  %v3687 = vmul.f32 %v3590, %v1614
  %v3688 = vmul.f32 %v3595, %v1615
  %v3689 = vmul.f32 %v3600, %v1616
  %v3690 = vmul.f32 %v3605, %v1617
  %v3691 = vmul.f32 %v3610, %v1618
  %v3692 = vmul.f32 %v3615, %v1619
  %v3693 = vmul.f32 %v3620, %v1620
  %v3694 = vmul.f32 %v3625, %v1621
  %v3695 = vmul.f32 %v3630, %v1622
  %v3696 = vmul.f32 %v3635, %v1623
  %v3697 = vmul.f32 %v3640, %v1624
  %v3698 = vmul.f32 %v3645, %v1625
  %v3699 = vmul.f32 %v3650, %v1626
  %v3700 = vmul.f32 %v3655, %v1627
  %v3701 = vmul.f32 %v3660, %v1628
  %v3702 = vmul.f32 %v3665, %v1629
  %v3703 = vmul.f32 %v3670, %v1630
  %v3704 = vsel %vm574, %v3672, 0.0
  %v3705 = vsel %vm574, %v3673, 0.0
  %v3706 = vadd.f32 %v3704, %v3705
  %v3707 = vrot.slane %v3706, 4
  %v3708 = vadd.f32 %v3706, %v3707
  %v3709 = vrot.slane %v3708, 2
  %v3710 = vadd.f32 %v3708, %v3709
  %v3711 = vrot.slane %v3710, 1
  %v3712 = vadd.f32 %v3710, %v3711
  %v3713 = vsel %vm574, %v3674, 0.0
  %v3714 = vsel %vm574, %v3675, 0.0
  %v3715 = vadd.f32 %v3713, %v3714
  %v3716 = vrot.slane %v3715, 4
  %v3717 = vadd.f32 %v3715, %v3716
  %v3718 = vrot.slane %v3717, 2
  %v3719 = vadd.f32 %v3717, %v3718
  %v3720 = vrot.slane %v3719, 1
  %v3721 = vadd.f32 %v3719, %v3720
  %v3722 = vsel %vm574, %v3676, 0.0
  %v3723 = vsel %vm574, %v3677, 0.0
  %v3724 = vadd.f32 %v3722, %v3723
  %v3725 = vrot.slane %v3724, 4
  %v3726 = vadd.f32 %v3724, %v3725
  %v3727 = vrot.slane %v3726, 2
  %v3728 = vadd.f32 %v3726, %v3727
  %v3729 = vrot.slane %v3728, 1
  %v3730 = vadd.f32 %v3728, %v3729
  %v3731 = vsel %vm574, %v3678, 0.0
  %v3732 = vsel %vm574, %v3679, 0.0
  %v3733 = vadd.f32 %v3731, %v3732
  %v3734 = vrot.slane %v3733, 4
  %v3735 = vadd.f32 %v3733, %v3734
  %v3736 = vrot.slane %v3735, 2
  %v3737 = vadd.f32 %v3735, %v3736
  %v3738 = vrot.slane %v3737, 1
  %v3739 = vadd.f32 %v3737, %v3738
  %v3740 = vsel %vm574, %v3680, 0.0
  %v3741 = vsel %vm574, %v3681, 0.0
  %v3742 = vadd.f32 %v3740, %v3741
  %v3743 = vrot.slane %v3742, 4
  %v3744 = vadd.f32 %v3742, %v3743
  %v3745 = vrot.slane %v3744, 2
  %v3746 = vadd.f32 %v3744, %v3745
  %v3747 = vrot.slane %v3746, 1
  %v3748 = vadd.f32 %v3746, %v3747
  %v3749 = vsel %vm574, %v3682, 0.0
  %v3750 = vsel %vm574, %v3683, 0.0
  %v3751 = vadd.f32 %v3749, %v3750
  %v3752 = vrot.slane %v3751, 4
  %v3753 = vadd.f32 %v3751, %v3752
  %v3754 = vrot.slane %v3753, 2
  %v3755 = vadd.f32 %v3753, %v3754
  %v3756 = vrot.slane %v3755, 1
  %v3757 = vadd.f32 %v3755, %v3756
  %v3758 = vsel %vm574, %v3684, 0.0
  %v3759 = vsel %vm574, %v3685, 0.0
  %v3760 = vadd.f32 %v3758, %v3759
  %v3761 = vrot.slane %v3760, 4
  %v3762 = vadd.f32 %v3760, %v3761
  %v3763 = vrot.slane %v3762, 2
  %v3764 = vadd.f32 %v3762, %v3763
  %v3765 = vrot.slane %v3764, 1
  %v3766 = vadd.f32 %v3764, %v3765
  %v3767 = vsel %vm574, %v3686, 0.0
  %v3768 = vsel %vm574, %v3687, 0.0
  %v3769 = vadd.f32 %v3767, %v3768
  %v3770 = vrot.slane %v3769, 4
  %v3771 = vadd.f32 %v3769, %v3770
  %v3772 = vrot.slane %v3771, 2
  %v3773 = vadd.f32 %v3771, %v3772
  %v3774 = vrot.slane %v3773, 1
  %v3775 = vadd.f32 %v3773, %v3774
  %v3776 = vsel %vm574, %v3688, 0.0
  %v3777 = vsel %vm574, %v3689, 0.0
  %v3778 = vadd.f32 %v3776, %v3777
  %v3779 = vrot.slane %v3778, 4
  %v3780 = vadd.f32 %v3778, %v3779
  %v3781 = vrot.slane %v3780, 2
  %v3782 = vadd.f32 %v3780, %v3781
  %v3783 = vrot.slane %v3782, 1
  %v3784 = vadd.f32 %v3782, %v3783
  %v3785 = vsel %vm574, %v3690, 0.0
  %v3786 = vsel %vm574, %v3691, 0.0
  %v3787 = vadd.f32 %v3785, %v3786
  %v3788 = vrot.slane %v3787, 4
  %v3789 = vadd.f32 %v3787, %v3788
  %v3790 = vrot.slane %v3789, 2
  %v3791 = vadd.f32 %v3789, %v3790
  %v3792 = vrot.slane %v3791, 1
  %v3793 = vadd.f32 %v3791, %v3792
  %v3794 = vsel %vm574, %v3692, 0.0
  %v3795 = vsel %vm574, %v3693, 0.0
  %v3796 = vadd.f32 %v3794, %v3795
  %v3797 = vrot.slane %v3796, 4
  %v3798 = vadd.f32 %v3796, %v3797
  %v3799 = vrot.slane %v3798, 2
  %v3800 = vadd.f32 %v3798, %v3799
  %v3801 = vrot.slane %v3800, 1
  %v3802 = vadd.f32 %v3800, %v3801
  %v3803 = vsel %vm574, %v3694, 0.0
  %v3804 = vsel %vm574, %v3695, 0.0
  %v3805 = vadd.f32 %v3803, %v3804
  %v3806 = vrot.slane %v3805, 4
  %v3807 = vadd.f32 %v3805, %v3806
  %v3808 = vrot.slane %v3807, 2
  %v3809 = vadd.f32 %v3807, %v3808
  %v3810 = vrot.slane %v3809, 1
  %v3811 = vadd.f32 %v3809, %v3810
  %v3812 = vsel %vm574, %v3696, 0.0
  %v3813 = vsel %vm574, %v3697, 0.0
  %v3814 = vadd.f32 %v3812, %v3813
  %v3815 = vrot.slane %v3814, 4
  %v3816 = vadd.f32 %v3814, %v3815
  %v3817 = vrot.slane %v3816, 2
  %v3818 = vadd.f32 %v3816, %v3817
  %v3819 = vrot.slane %v3818, 1
  %v3820 = vadd.f32 %v3818, %v3819
  %v3821 = vsel %vm574, %v3698, 0.0
  %v3822 = vsel %vm574, %v3699, 0.0
  %v3823 = vadd.f32 %v3821, %v3822
  %v3824 = vrot.slane %v3823, 4
  %v3825 = vadd.f32 %v3823, %v3824
  %v3826 = vrot.slane %v3825, 2
  %v3827 = vadd.f32 %v3825, %v3826
  %v3828 = vrot.slane %v3827, 1
  %v3829 = vadd.f32 %v3827, %v3828
  %v3830 = vsel %vm574, %v3700, 0.0
  %v3831 = vsel %vm574, %v3701, 0.0
  %v3832 = vadd.f32 %v3830, %v3831
  %v3833 = vrot.slane %v3832, 4
  %v3834 = vadd.f32 %v3832, %v3833
  %v3835 = vrot.slane %v3834, 2
  %v3836 = vadd.f32 %v3834, %v3835
  %v3837 = vrot.slane %v3836, 1
  %v3838 = vadd.f32 %v3836, %v3837
  %v3839 = vsel %vm574, %v3702, 0.0
  %v3840 = vsel %vm574, %v3703, 0.0
  %v3841 = vadd.f32 %v3839, %v3840
  %v3842 = vrot.slane %v3841, 4
  %v3843 = vadd.f32 %v3841, %v3842
  %v3844 = vrot.slane %v3843, 2
  %v3845 = vadd.f32 %v3843, %v3844
  %v3846 = vrot.slane %v3845, 1
  %v3847 = vadd.f32 %v3845, %v3846
  %v3848 = vmul.f32 %v3712, %v3712
  %v3849 = vmul.f32 %v3721, %v3721
  %v3850 = vmul.f32 %v3730, %v3730
  %v3851 = vmul.f32 %v3739, %v3739
  %v3852 = vmul.f32 %v3748, %v3748
  %v3853 = vmul.f32 %v3757, %v3757
  %v3854 = vmul.f32 %v3766, %v3766
  %v3855 = vmul.f32 %v3775, %v3775
  %v3856 = vmul.f32 %v3784, %v3784
  %v3857 = vmul.f32 %v3793, %v3793
  %v3858 = vmul.f32 %v3802, %v3802
  %v3859 = vmul.f32 %v3811, %v3811
  %v3860 = vmul.f32 %v3820, %v3820
  %v3861 = vmul.f32 %v3829, %v3829
  %v3862 = vmul.f32 %v3838, %v3838
  %v3863 = vmul.f32 %v3847, %v3847
  %v3880 = vsel %vm3180, %v3849, %v3848
  %v3881 = vsel %vm3183, %v3850, %v3880
  %v3882 = vsel %vm3186, %v3851, %v3881
  %v3883 = vsel %vm3189, %v3852, %v3882
  %v3884 = vsel %vm3192, %v3853, %v3883
  %v3885 = vsel %vm3195, %v3854, %v3884
  %v3886 = vsel %vm3198, %v3855, %v3885
  %v3887 = vsel %vm3180, %v3857, %v3856
  %v3888 = vsel %vm3183, %v3858, %v3887
  %v3889 = vsel %vm3186, %v3859, %v3888
  %v3890 = vsel %vm3189, %v3860, %v3889
  %v3891 = vsel %vm3192, %v3861, %v3890
  %v3892 = vsel %vm3195, %v3862, %v3891
  %v3893 = vsel %vm3198, %v3863, %v3892
  %v3896 = vsel %vm574, %v3886, 0.0
  %3897 = vadd.xlane.f32.xlu0 %v3896
  %v3898 = vpop.xlane.xlu0 %3897
  %v3899 = vsel %vm574, %v3893, 0.0
  %3900 = vadd.xlane.f32.xlu0 %v3899
  %v3901 = vpop.xlane.xlu0 %3900
  %3902 = vset.pattern.permute.xlu0 17
  %3903 = vperm.xlu0 %3902, %v3480
  %v3904 = vpop.permute.xlu0 %3903
  %3906 = vset.pattern.permute.xlu0 17
  %3907 = vperm.xlu0 %3906, %v3481
  %v3908 = vpop.permute.xlu0 %3907
  %3910 = vset.pattern.permute.xlu0 17
  %3911 = vperm.xlu0 %3910, %v3482
  %v3912 = vpop.permute.xlu0 %3911
  %3914 = vset.pattern.permute.xlu0 17
  %3915 = vperm.xlu0 %3914, %v3483
  %v3916 = vpop.permute.xlu0 %3915
  %3918 = vset.pattern.permute.xlu0 17
  %3919 = vperm.xlu0 %3918, %v3484
  %v3920 = vpop.permute.xlu0 %3919
  %3922 = vset.pattern.permute.xlu0 17
  %3923 = vperm.xlu0 %3922, %v3485
  %v3924 = vpop.permute.xlu0 %3923
  %3926 = vset.pattern.permute.xlu0 17
  %3927 = vperm.xlu0 %3926, %v3486
  %v3928 = vpop.permute.xlu0 %3927
  %3930 = vset.pattern.permute.xlu0 17
  %3931 = vperm.xlu0 %3930, %v3487
  %v3932 = vpop.permute.xlu0 %3931
  %3934 = vset.pattern.permute.xlu0 17
  %3935 = vperm.xlu0 %3934, %v3488
  %v3936 = vpop.permute.xlu0 %3935
  %3938 = vset.pattern.permute.xlu0 17
  %3939 = vperm.xlu0 %3938, %v3489
  %v3940 = vpop.permute.xlu0 %3939
  %3942 = vset.pattern.permute.xlu0 17
  %3943 = vperm.xlu0 %3942, %v3490
  %v3944 = vpop.permute.xlu0 %3943
  %3946 = vset.pattern.permute.xlu0 17
  %3947 = vperm.xlu0 %3946, %v3491
  %v3948 = vpop.permute.xlu0 %3947
  %3950 = vset.pattern.permute.xlu0 17
  %3951 = vperm.xlu0 %3950, %v3492
  %v3952 = vpop.permute.xlu0 %3951
  %3954 = vset.pattern.permute.xlu0 17
  %3955 = vperm.xlu0 %3954, %v3493
  %v3956 = vpop.permute.xlu0 %3955
  %3958 = vset.pattern.permute.xlu0 17
  %3959 = vperm.xlu0 %3958, %v3494
  %v3960 = vpop.permute.xlu0 %3959
  %3962 = vset.pattern.permute.xlu0 17
  %3963 = vperm.xlu0 %3962, %v3495
  %v3964 = vpop.permute.xlu0 %3963
  %3966 = vset.pattern.permute.xlu0 17
  %3967 = vperm.xlu0 %3966, %v3496
  %v3968 = vpop.permute.xlu0 %3967
  %3970 = vset.pattern.permute.xlu0 17
  %3971 = vperm.xlu0 %3970, %v3497
  %v3972 = vpop.permute.xlu0 %3971
  %3974 = vset.pattern.permute.xlu0 17
  %3975 = vperm.xlu0 %3974, %v3498
  %v3976 = vpop.permute.xlu0 %3975
  %3978 = vset.pattern.permute.xlu0 17
  %3979 = vperm.xlu0 %3978, %v3499
  %v3980 = vpop.permute.xlu0 %3979
  %3982 = vset.pattern.permute.xlu0 17
  %3983 = vperm.xlu0 %3982, %v3500
  %v3984 = vpop.permute.xlu0 %3983
  %3986 = vset.pattern.permute.xlu0 17
  %3987 = vperm.xlu0 %3986, %v3501
  %v3988 = vpop.permute.xlu0 %3987
  %3990 = vset.pattern.permute.xlu0 17
  %3991 = vperm.xlu0 %3990, %v3502
  %v3992 = vpop.permute.xlu0 %3991
  %3994 = vset.pattern.permute.xlu0 17
  %3995 = vperm.xlu0 %3994, %v3503
  %v3996 = vpop.permute.xlu0 %3995
  %3998 = vset.pattern.permute.xlu0 17
  %3999 = vperm.xlu0 %3998, %v3504
  %v4000 = vpop.permute.xlu0 %3999
  %4002 = vset.pattern.permute.xlu0 17
  %4003 = vperm.xlu0 %4002, %v3505
  %v4004 = vpop.permute.xlu0 %4003
  %4006 = vset.pattern.permute.xlu0 17
  %4007 = vperm.xlu0 %4006, %v3506
  %v4008 = vpop.permute.xlu0 %4007
  %4010 = vset.pattern.permute.xlu0 17
  %4011 = vperm.xlu0 %4010, %v3507
  %v4012 = vpop.permute.xlu0 %4011
  %4014 = vset.pattern.permute.xlu0 17
  %4015 = vperm.xlu0 %4014, %v3508
  %v4016 = vpop.permute.xlu0 %4015
  %4018 = vset.pattern.permute.xlu0 17
  %4019 = vperm.xlu0 %4018, %v3509
  %v4020 = vpop.permute.xlu0 %4019
  %4022 = vset.pattern.permute.xlu0 17
  %4023 = vperm.xlu0 %4022, %v3510
  %v4024 = vpop.permute.xlu0 %4023
  %4026 = vset.pattern.permute.xlu0 17
  %4027 = vperm.xlu0 %4026, %v3511
  %v4028 = vpop.permute.xlu0 %4027
  %v4030 = vmul.f32 %v3904, %v1599
  %v4031 = vmul.f32 %v3908, %v1600
  %v4032 = vmul.f32 %v3912, %v1601
  %v4033 = vmul.f32 %v3916, %v1602
  %v4034 = vmul.f32 %v3920, %v1603
  %v4035 = vmul.f32 %v3924, %v1604
  %v4036 = vmul.f32 %v3928, %v1605
  %v4037 = vmul.f32 %v3932, %v1606
  %v4038 = vmul.f32 %v3936, %v1607
  %v4039 = vmul.f32 %v3940, %v1608
  %v4040 = vmul.f32 %v3944, %v1609
  %v4041 = vmul.f32 %v3948, %v1610
  %v4042 = vmul.f32 %v3952, %v1611
  %v4043 = vmul.f32 %v3956, %v1612
  %v4044 = vmul.f32 %v3960, %v1613
  %v4045 = vmul.f32 %v3964, %v1614
  %v4046 = vmul.f32 %v3968, %v1615
  %v4047 = vmul.f32 %v3972, %v1616
  %v4048 = vmul.f32 %v3976, %v1617
  %v4049 = vmul.f32 %v3980, %v1618
  %v4050 = vmul.f32 %v3984, %v1619
  %v4051 = vmul.f32 %v3988, %v1620
  %v4052 = vmul.f32 %v3992, %v1621
  %v4053 = vmul.f32 %v3996, %v1622
  %v4054 = vmul.f32 %v4000, %v1623
  %v4055 = vmul.f32 %v4004, %v1624
  %v4056 = vmul.f32 %v4008, %v1625
  %v4057 = vmul.f32 %v4012, %v1626
  %v4058 = vmul.f32 %v4016, %v1627
  %v4059 = vmul.f32 %v4020, %v1628
  %v4060 = vmul.f32 %v4024, %v1629
  %v4061 = vmul.f32 %v4028, %v1630
  %v4062 = vsel %vm574, %v4030, 0.0
  %v4063 = vsel %vm574, %v4031, 0.0
  %v4064 = vadd.f32 %v4062, %v4063
  %v4065 = vrot.slane %v4064, 4
  %v4066 = vadd.f32 %v4064, %v4065
  %v4067 = vrot.slane %v4066, 2
  %v4068 = vadd.f32 %v4066, %v4067
  %v4069 = vrot.slane %v4068, 1
  %v4070 = vadd.f32 %v4068, %v4069
  %v4071 = vsel %vm574, %v4032, 0.0
  %v4072 = vsel %vm574, %v4033, 0.0
  %v4073 = vadd.f32 %v4071, %v4072
  %v4074 = vrot.slane %v4073, 4
  %v4075 = vadd.f32 %v4073, %v4074
  %v4076 = vrot.slane %v4075, 2
  %v4077 = vadd.f32 %v4075, %v4076
  %v4078 = vrot.slane %v4077, 1
  %v4079 = vadd.f32 %v4077, %v4078
  %v4080 = vsel %vm574, %v4034, 0.0
  %v4081 = vsel %vm574, %v4035, 0.0
  %v4082 = vadd.f32 %v4080, %v4081
  %v4083 = vrot.slane %v4082, 4
  %v4084 = vadd.f32 %v4082, %v4083
  %v4085 = vrot.slane %v4084, 2
  %v4086 = vadd.f32 %v4084, %v4085
  %v4087 = vrot.slane %v4086, 1
  %v4088 = vadd.f32 %v4086, %v4087
  %v4089 = vsel %vm574, %v4036, 0.0
  %v4090 = vsel %vm574, %v4037, 0.0
  %v4091 = vadd.f32 %v4089, %v4090
  %v4092 = vrot.slane %v4091, 4
  %v4093 = vadd.f32 %v4091, %v4092
  %v4094 = vrot.slane %v4093, 2
  %v4095 = vadd.f32 %v4093, %v4094
  %v4096 = vrot.slane %v4095, 1
  %v4097 = vadd.f32 %v4095, %v4096
  %v4098 = vsel %vm574, %v4038, 0.0
  %v4099 = vsel %vm574, %v4039, 0.0
  %v4100 = vadd.f32 %v4098, %v4099
  %v4101 = vrot.slane %v4100, 4
  %v4102 = vadd.f32 %v4100, %v4101
  %v4103 = vrot.slane %v4102, 2
  %v4104 = vadd.f32 %v4102, %v4103
  %v4105 = vrot.slane %v4104, 1
  %v4106 = vadd.f32 %v4104, %v4105
  %v4107 = vsel %vm574, %v4040, 0.0
  %v4108 = vsel %vm574, %v4041, 0.0
  %v4109 = vadd.f32 %v4107, %v4108
  %v4110 = vrot.slane %v4109, 4
  %v4111 = vadd.f32 %v4109, %v4110
  %v4112 = vrot.slane %v4111, 2
  %v4113 = vadd.f32 %v4111, %v4112
  %v4114 = vrot.slane %v4113, 1
  %v4115 = vadd.f32 %v4113, %v4114
  %v4116 = vsel %vm574, %v4042, 0.0
  %v4117 = vsel %vm574, %v4043, 0.0
  %v4118 = vadd.f32 %v4116, %v4117
  %v4119 = vrot.slane %v4118, 4
  %v4120 = vadd.f32 %v4118, %v4119
  %v4121 = vrot.slane %v4120, 2
  %v4122 = vadd.f32 %v4120, %v4121
  %v4123 = vrot.slane %v4122, 1
  %v4124 = vadd.f32 %v4122, %v4123
  %v4125 = vsel %vm574, %v4044, 0.0
  %v4126 = vsel %vm574, %v4045, 0.0
  %v4127 = vadd.f32 %v4125, %v4126
  %v4128 = vrot.slane %v4127, 4
  %v4129 = vadd.f32 %v4127, %v4128
  %v4130 = vrot.slane %v4129, 2
  %v4131 = vadd.f32 %v4129, %v4130
  %v4132 = vrot.slane %v4131, 1
  %v4133 = vadd.f32 %v4131, %v4132
  %v4134 = vsel %vm574, %v4046, 0.0
  %v4135 = vsel %vm574, %v4047, 0.0
  %v4136 = vadd.f32 %v4134, %v4135
  %v4137 = vrot.slane %v4136, 4
  %v4138 = vadd.f32 %v4136, %v4137
  %v4139 = vrot.slane %v4138, 2
  %v4140 = vadd.f32 %v4138, %v4139
  %v4141 = vrot.slane %v4140, 1
  %v4142 = vadd.f32 %v4140, %v4141
  %v4143 = vsel %vm574, %v4048, 0.0
  %v4144 = vsel %vm574, %v4049, 0.0
  %v4145 = vadd.f32 %v4143, %v4144
  %v4146 = vrot.slane %v4145, 4
  %v4147 = vadd.f32 %v4145, %v4146
  %v4148 = vrot.slane %v4147, 2
  %v4149 = vadd.f32 %v4147, %v4148
  %v4150 = vrot.slane %v4149, 1
  %v4151 = vadd.f32 %v4149, %v4150
  %v4152 = vsel %vm574, %v4050, 0.0
  %v4153 = vsel %vm574, %v4051, 0.0
  %v4154 = vadd.f32 %v4152, %v4153
  %v4155 = vrot.slane %v4154, 4
  %v4156 = vadd.f32 %v4154, %v4155
  %v4157 = vrot.slane %v4156, 2
  %v4158 = vadd.f32 %v4156, %v4157
  %v4159 = vrot.slane %v4158, 1
  %v4160 = vadd.f32 %v4158, %v4159
  %v4161 = vsel %vm574, %v4052, 0.0
  %v4162 = vsel %vm574, %v4053, 0.0
  %v4163 = vadd.f32 %v4161, %v4162
  %v4164 = vrot.slane %v4163, 4
  %v4165 = vadd.f32 %v4163, %v4164
  %v4166 = vrot.slane %v4165, 2
  %v4167 = vadd.f32 %v4165, %v4166
  %v4168 = vrot.slane %v4167, 1
  %v4169 = vadd.f32 %v4167, %v4168
  %v4170 = vsel %vm574, %v4054, 0.0
  %v4171 = vsel %vm574, %v4055, 0.0
  %v4172 = vadd.f32 %v4170, %v4171
  %v4173 = vrot.slane %v4172, 4
  %v4174 = vadd.f32 %v4172, %v4173
  %v4175 = vrot.slane %v4174, 2
  %v4176 = vadd.f32 %v4174, %v4175
  %v4177 = vrot.slane %v4176, 1
  %v4178 = vadd.f32 %v4176, %v4177
  %v4179 = vsel %vm574, %v4056, 0.0
  %v4180 = vsel %vm574, %v4057, 0.0
  %v4181 = vadd.f32 %v4179, %v4180
  %v4182 = vrot.slane %v4181, 4
  %v4183 = vadd.f32 %v4181, %v4182
  %v4184 = vrot.slane %v4183, 2
  %v4185 = vadd.f32 %v4183, %v4184
  %v4186 = vrot.slane %v4185, 1
  %v4187 = vadd.f32 %v4185, %v4186
  %v4188 = vsel %vm574, %v4058, 0.0
  %v4189 = vsel %vm574, %v4059, 0.0
  %v4190 = vadd.f32 %v4188, %v4189
  %v4191 = vrot.slane %v4190, 4
  %v4192 = vadd.f32 %v4190, %v4191
  %v4193 = vrot.slane %v4192, 2
  %v4194 = vadd.f32 %v4192, %v4193
  %v4195 = vrot.slane %v4194, 1
  %v4196 = vadd.f32 %v4194, %v4195
  %v4197 = vsel %vm574, %v4060, 0.0
  %v4198 = vsel %vm574, %v4061, 0.0
  %v4199 = vadd.f32 %v4197, %v4198
  %v4200 = vrot.slane %v4199, 4
  %v4201 = vadd.f32 %v4199, %v4200
  %v4202 = vrot.slane %v4201, 2
  %v4203 = vadd.f32 %v4201, %v4202
  %v4204 = vrot.slane %v4203, 1
  %v4205 = vadd.f32 %v4203, %v4204
  %v4206 = vmul.f32 %v4070, %v4070
  %v4207 = vmul.f32 %v4079, %v4079
  %v4208 = vmul.f32 %v4088, %v4088
  %v4209 = vmul.f32 %v4097, %v4097
  %v4210 = vmul.f32 %v4106, %v4106
  %v4211 = vmul.f32 %v4115, %v4115
  %v4212 = vmul.f32 %v4124, %v4124
  %v4213 = vmul.f32 %v4133, %v4133
  %v4214 = vmul.f32 %v4142, %v4142
  %v4215 = vmul.f32 %v4151, %v4151
  %v4216 = vmul.f32 %v4160, %v4160
  %v4217 = vmul.f32 %v4169, %v4169
  %v4218 = vmul.f32 %v4178, %v4178
  %v4219 = vmul.f32 %v4187, %v4187
  %v4220 = vmul.f32 %v4196, %v4196
  %v4221 = vmul.f32 %v4205, %v4205
  %v4238 = vsel %vm3180, %v4207, %v4206
  %v4239 = vsel %vm3183, %v4208, %v4238
  %v4240 = vsel %vm3186, %v4209, %v4239
  %v4241 = vsel %vm3189, %v4210, %v4240
  %v4242 = vsel %vm3192, %v4211, %v4241
  %v4243 = vsel %vm3195, %v4212, %v4242
  %v4244 = vsel %vm3198, %v4213, %v4243
  %v4245 = vsel %vm3180, %v4215, %v4214
  %v4246 = vsel %vm3183, %v4216, %v4245
  %v4247 = vsel %vm3186, %v4217, %v4246
  %v4248 = vsel %vm3189, %v4218, %v4247
  %v4249 = vsel %vm3192, %v4219, %v4248
  %v4250 = vsel %vm3195, %v4220, %v4249
  %v4251 = vsel %vm3198, %v4221, %v4250
  %v4254 = vsel %vm574, %v4244, 0.0
  %4255 = vadd.xlane.f32.xlu0 %v4254
  %v4256 = vpop.xlane.xlu0 %4255
  %v4257 = vsel %vm574, %v4251, 0.0
  %4258 = vadd.xlane.f32.xlu0 %v4257
  %v4259 = vpop.xlane.xlu0 %4258
  %4260 = vset.pattern.permute.xlu0 18
  %4261 = vperm.xlu0 %4260, %v3480
  %v4262 = vpop.permute.xlu0 %4261
  %4264 = vset.pattern.permute.xlu0 18
  %4265 = vperm.xlu0 %4264, %v3481
  %v4266 = vpop.permute.xlu0 %4265
  %4268 = vset.pattern.permute.xlu0 18
  %4269 = vperm.xlu0 %4268, %v3482
  %v4270 = vpop.permute.xlu0 %4269
  %4272 = vset.pattern.permute.xlu0 18
  %4273 = vperm.xlu0 %4272, %v3483
  %v4274 = vpop.permute.xlu0 %4273
  %4276 = vset.pattern.permute.xlu0 18
  %4277 = vperm.xlu0 %4276, %v3484
  %v4278 = vpop.permute.xlu0 %4277
  %4280 = vset.pattern.permute.xlu0 18
  %4281 = vperm.xlu0 %4280, %v3485
  %v4282 = vpop.permute.xlu0 %4281
  %4284 = vset.pattern.permute.xlu0 18
  %4285 = vperm.xlu0 %4284, %v3486
  %v4286 = vpop.permute.xlu0 %4285
  %4288 = vset.pattern.permute.xlu0 18
  %4289 = vperm.xlu0 %4288, %v3487
  %v4290 = vpop.permute.xlu0 %4289
  %4292 = vset.pattern.permute.xlu0 18
  %4293 = vperm.xlu0 %4292, %v3488
  %v4294 = vpop.permute.xlu0 %4293
  %4296 = vset.pattern.permute.xlu0 18
  %4297 = vperm.xlu0 %4296, %v3489
  %v4298 = vpop.permute.xlu0 %4297
  %4300 = vset.pattern.permute.xlu0 18
  %4301 = vperm.xlu0 %4300, %v3490
  %v4302 = vpop.permute.xlu0 %4301
  %4304 = vset.pattern.permute.xlu0 18
  %4305 = vperm.xlu0 %4304, %v3491
  %v4306 = vpop.permute.xlu0 %4305
  %4308 = vset.pattern.permute.xlu0 18
  %4309 = vperm.xlu0 %4308, %v3492
  %v4310 = vpop.permute.xlu0 %4309
  %4312 = vset.pattern.permute.xlu0 18
  %4313 = vperm.xlu0 %4312, %v3493
  %v4314 = vpop.permute.xlu0 %4313
  %4316 = vset.pattern.permute.xlu0 18
  %4317 = vperm.xlu0 %4316, %v3494
  %v4318 = vpop.permute.xlu0 %4317
  %4320 = vset.pattern.permute.xlu0 18
  %4321 = vperm.xlu0 %4320, %v3495
  %v4322 = vpop.permute.xlu0 %4321
  %4324 = vset.pattern.permute.xlu0 18
  %4325 = vperm.xlu0 %4324, %v3496
  %v4326 = vpop.permute.xlu0 %4325
  %4328 = vset.pattern.permute.xlu0 18
  %4329 = vperm.xlu0 %4328, %v3497
  %v4330 = vpop.permute.xlu0 %4329
  %4332 = vset.pattern.permute.xlu0 18
  %4333 = vperm.xlu0 %4332, %v3498
  %v4334 = vpop.permute.xlu0 %4333
  %4336 = vset.pattern.permute.xlu0 18
  %4337 = vperm.xlu0 %4336, %v3499
  %v4338 = vpop.permute.xlu0 %4337
  %4340 = vset.pattern.permute.xlu0 18
  %4341 = vperm.xlu0 %4340, %v3500
  %v4342 = vpop.permute.xlu0 %4341
  %4344 = vset.pattern.permute.xlu0 18
  %4345 = vperm.xlu0 %4344, %v3501
  %v4346 = vpop.permute.xlu0 %4345
  %4348 = vset.pattern.permute.xlu0 18
  %4349 = vperm.xlu0 %4348, %v3502
  %v4350 = vpop.permute.xlu0 %4349
  %4352 = vset.pattern.permute.xlu0 18
  %4353 = vperm.xlu0 %4352, %v3503
  %v4354 = vpop.permute.xlu0 %4353
  %4356 = vset.pattern.permute.xlu0 18
  %4357 = vperm.xlu0 %4356, %v3504
  %v4358 = vpop.permute.xlu0 %4357
  %4360 = vset.pattern.permute.xlu0 18
  %4361 = vperm.xlu0 %4360, %v3505
  %v4362 = vpop.permute.xlu0 %4361
  %4364 = vset.pattern.permute.xlu0 18
  %4365 = vperm.xlu0 %4364, %v3506
  %v4366 = vpop.permute.xlu0 %4365
  %4368 = vset.pattern.permute.xlu0 18
  %4369 = vperm.xlu0 %4368, %v3507
  %v4370 = vpop.permute.xlu0 %4369
  %4372 = vset.pattern.permute.xlu0 18
  %4373 = vperm.xlu0 %4372, %v3508
  %v4374 = vpop.permute.xlu0 %4373
  %4376 = vset.pattern.permute.xlu0 18
  %4377 = vperm.xlu0 %4376, %v3509
  %v4378 = vpop.permute.xlu0 %4377
  %4380 = vset.pattern.permute.xlu0 18
  %4381 = vperm.xlu0 %4380, %v3510
  %v4382 = vpop.permute.xlu0 %4381
  %4384 = vset.pattern.permute.xlu0 18
  %4385 = vperm.xlu0 %4384, %v3511
  %v4386 = vpop.permute.xlu0 %4385
  %v4388 = vmul.f32 %v4262, %v1599
  %v4389 = vmul.f32 %v4266, %v1600
  %v4390 = vmul.f32 %v4270, %v1601
  %v4391 = vmul.f32 %v4274, %v1602
  %v4392 = vmul.f32 %v4278, %v1603
  %v4393 = vmul.f32 %v4282, %v1604
  %v4394 = vmul.f32 %v4286, %v1605
  %v4395 = vmul.f32 %v4290, %v1606
  %v4396 = vmul.f32 %v4294, %v1607
  %v4397 = vmul.f32 %v4298, %v1608
  %v4398 = vmul.f32 %v4302, %v1609
  %v4399 = vmul.f32 %v4306, %v1610
  %v4400 = vmul.f32 %v4310, %v1611
  %v4401 = vmul.f32 %v4314, %v1612
  %v4402 = vmul.f32 %v4318, %v1613
  %v4403 = vmul.f32 %v4322, %v1614
  %v4404 = vmul.f32 %v4326, %v1615
  %v4405 = vmul.f32 %v4330, %v1616
  %v4406 = vmul.f32 %v4334, %v1617
  %v4407 = vmul.f32 %v4338, %v1618
  %v4408 = vmul.f32 %v4342, %v1619
  %v4409 = vmul.f32 %v4346, %v1620
  %v4410 = vmul.f32 %v4350, %v1621
  %v4411 = vmul.f32 %v4354, %v1622
  %v4412 = vmul.f32 %v4358, %v1623
  %v4413 = vmul.f32 %v4362, %v1624
  %v4414 = vmul.f32 %v4366, %v1625
  %v4415 = vmul.f32 %v4370, %v1626
  %v4416 = vmul.f32 %v4374, %v1627
  %v4417 = vmul.f32 %v4378, %v1628
  %v4418 = vmul.f32 %v4382, %v1629
  %v4419 = vmul.f32 %v4386, %v1630
  %v4420 = vsel %vm574, %v4388, 0.0
  %v4421 = vsel %vm574, %v4389, 0.0
  %v4422 = vadd.f32 %v4420, %v4421
  %v4423 = vrot.slane %v4422, 4
  %v4424 = vadd.f32 %v4422, %v4423
  %v4425 = vrot.slane %v4424, 2
  %v4426 = vadd.f32 %v4424, %v4425
  %v4427 = vrot.slane %v4426, 1
  %v4428 = vadd.f32 %v4426, %v4427
  %v4429 = vsel %vm574, %v4390, 0.0
  %v4430 = vsel %vm574, %v4391, 0.0
  %v4431 = vadd.f32 %v4429, %v4430
  %v4432 = vrot.slane %v4431, 4
  %v4433 = vadd.f32 %v4431, %v4432
  %v4434 = vrot.slane %v4433, 2
  %v4435 = vadd.f32 %v4433, %v4434
  %v4436 = vrot.slane %v4435, 1
  %v4437 = vadd.f32 %v4435, %v4436
  %v4438 = vsel %vm574, %v4392, 0.0
  %v4439 = vsel %vm574, %v4393, 0.0
  %v4440 = vadd.f32 %v4438, %v4439
  %v4441 = vrot.slane %v4440, 4
  %v4442 = vadd.f32 %v4440, %v4441
  %v4443 = vrot.slane %v4442, 2
  %v4444 = vadd.f32 %v4442, %v4443
  %v4445 = vrot.slane %v4444, 1
  %v4446 = vadd.f32 %v4444, %v4445
  %v4447 = vsel %vm574, %v4394, 0.0
  %v4448 = vsel %vm574, %v4395, 0.0
  %v4449 = vadd.f32 %v4447, %v4448
  %v4450 = vrot.slane %v4449, 4
  %v4451 = vadd.f32 %v4449, %v4450
  %v4452 = vrot.slane %v4451, 2
  %v4453 = vadd.f32 %v4451, %v4452
  %v4454 = vrot.slane %v4453, 1
  %v4455 = vadd.f32 %v4453, %v4454
  %v4456 = vsel %vm574, %v4396, 0.0
  %v4457 = vsel %vm574, %v4397, 0.0
  %v4458 = vadd.f32 %v4456, %v4457
  %v4459 = vrot.slane %v4458, 4
  %v4460 = vadd.f32 %v4458, %v4459
  %v4461 = vrot.slane %v4460, 2
  %v4462 = vadd.f32 %v4460, %v4461
  %v4463 = vrot.slane %v4462, 1
  %v4464 = vadd.f32 %v4462, %v4463
  %v4465 = vsel %vm574, %v4398, 0.0
  %v4466 = vsel %vm574, %v4399, 0.0
  %v4467 = vadd.f32 %v4465, %v4466
  %v4468 = vrot.slane %v4467, 4
  %v4469 = vadd.f32 %v4467, %v4468
  %v4470 = vrot.slane %v4469, 2
  %v4471 = vadd.f32 %v4469, %v4470
  %v4472 = vrot.slane %v4471, 1
  %v4473 = vadd.f32 %v4471, %v4472
  %v4474 = vsel %vm574, %v4400, 0.0
  %v4475 = vsel %vm574, %v4401, 0.0
  %v4476 = vadd.f32 %v4474, %v4475
  %v4477 = vrot.slane %v4476, 4
  %v4478 = vadd.f32 %v4476, %v4477
  %v4479 = vrot.slane %v4478, 2
  %v4480 = vadd.f32 %v4478, %v4479
  %v4481 = vrot.slane %v4480, 1
  %v4482 = vadd.f32 %v4480, %v4481
  %v4483 = vsel %vm574, %v4402, 0.0
  %v4484 = vsel %vm574, %v4403, 0.0
  %v4485 = vadd.f32 %v4483, %v4484
  %v4486 = vrot.slane %v4485, 4
  %v4487 = vadd.f32 %v4485, %v4486
  %v4488 = vrot.slane %v4487, 2
  %v4489 = vadd.f32 %v4487, %v4488
  %v4490 = vrot.slane %v4489, 1
  %v4491 = vadd.f32 %v4489, %v4490
  %v4492 = vsel %vm574, %v4404, 0.0
  %v4493 = vsel %vm574, %v4405, 0.0
  %v4494 = vadd.f32 %v4492, %v4493
  %v4495 = vrot.slane %v4494, 4
  %v4496 = vadd.f32 %v4494, %v4495
  %v4497 = vrot.slane %v4496, 2
  %v4498 = vadd.f32 %v4496, %v4497
  %v4499 = vrot.slane %v4498, 1
  %v4500 = vadd.f32 %v4498, %v4499
  %v4501 = vsel %vm574, %v4406, 0.0
  %v4502 = vsel %vm574, %v4407, 0.0
  %v4503 = vadd.f32 %v4501, %v4502
  %v4504 = vrot.slane %v4503, 4
  %v4505 = vadd.f32 %v4503, %v4504
  %v4506 = vrot.slane %v4505, 2
  %v4507 = vadd.f32 %v4505, %v4506
  %v4508 = vrot.slane %v4507, 1
  %v4509 = vadd.f32 %v4507, %v4508
  %v4510 = vsel %vm574, %v4408, 0.0
  %v4511 = vsel %vm574, %v4409, 0.0
  %v4512 = vadd.f32 %v4510, %v4511
  %v4513 = vrot.slane %v4512, 4
  %v4514 = vadd.f32 %v4512, %v4513
  %v4515 = vrot.slane %v4514, 2
  %v4516 = vadd.f32 %v4514, %v4515
  %v4517 = vrot.slane %v4516, 1
  %v4518 = vadd.f32 %v4516, %v4517
  %v4519 = vsel %vm574, %v4410, 0.0
  %v4520 = vsel %vm574, %v4411, 0.0
  %v4521 = vadd.f32 %v4519, %v4520
  %v4522 = vrot.slane %v4521, 4
  %v4523 = vadd.f32 %v4521, %v4522
  %v4524 = vrot.slane %v4523, 2
  %v4525 = vadd.f32 %v4523, %v4524
  %v4526 = vrot.slane %v4525, 1
  %v4527 = vadd.f32 %v4525, %v4526
  %v4528 = vsel %vm574, %v4412, 0.0
  %v4529 = vsel %vm574, %v4413, 0.0
  %v4530 = vadd.f32 %v4528, %v4529
  %v4531 = vrot.slane %v4530, 4
  %v4532 = vadd.f32 %v4530, %v4531
  %v4533 = vrot.slane %v4532, 2
  %v4534 = vadd.f32 %v4532, %v4533
  %v4535 = vrot.slane %v4534, 1
  %v4536 = vadd.f32 %v4534, %v4535
  %v4537 = vsel %vm574, %v4414, 0.0
  %v4538 = vsel %vm574, %v4415, 0.0
  %v4539 = vadd.f32 %v4537, %v4538
  %v4540 = vrot.slane %v4539, 4
  %v4541 = vadd.f32 %v4539, %v4540
  %v4542 = vrot.slane %v4541, 2
  %v4543 = vadd.f32 %v4541, %v4542
  %v4544 = vrot.slane %v4543, 1
  %v4545 = vadd.f32 %v4543, %v4544
  %v4546 = vsel %vm574, %v4416, 0.0
  %v4547 = vsel %vm574, %v4417, 0.0
  %v4548 = vadd.f32 %v4546, %v4547
  %v4549 = vrot.slane %v4548, 4
  %v4550 = vadd.f32 %v4548, %v4549
  %v4551 = vrot.slane %v4550, 2
  %v4552 = vadd.f32 %v4550, %v4551
  %v4553 = vrot.slane %v4552, 1
  %v4554 = vadd.f32 %v4552, %v4553
  %v4555 = vsel %vm574, %v4418, 0.0
  %v4556 = vsel %vm574, %v4419, 0.0
  %v4557 = vadd.f32 %v4555, %v4556
  %v4558 = vrot.slane %v4557, 4
  %v4559 = vadd.f32 %v4557, %v4558
  %v4560 = vrot.slane %v4559, 2
  %v4561 = vadd.f32 %v4559, %v4560
  %v4562 = vrot.slane %v4561, 1
  %v4563 = vadd.f32 %v4561, %v4562
  %v4564 = vmul.f32 %v4428, %v4428
  %v4565 = vmul.f32 %v4437, %v4437
  %v4566 = vmul.f32 %v4446, %v4446
  %v4567 = vmul.f32 %v4455, %v4455
  %v4568 = vmul.f32 %v4464, %v4464
  %v4569 = vmul.f32 %v4473, %v4473
  %v4570 = vmul.f32 %v4482, %v4482
  %v4571 = vmul.f32 %v4491, %v4491
  %v4572 = vmul.f32 %v4500, %v4500
  %v4573 = vmul.f32 %v4509, %v4509
  %v4574 = vmul.f32 %v4518, %v4518
  %v4575 = vmul.f32 %v4527, %v4527
  %v4576 = vmul.f32 %v4536, %v4536
  %v4577 = vmul.f32 %v4545, %v4545
  %v4578 = vmul.f32 %v4554, %v4554
  %v4579 = vmul.f32 %v4563, %v4563
  %v4596 = vsel %vm3180, %v4565, %v4564
  %v4597 = vsel %vm3183, %v4566, %v4596
  %v4598 = vsel %vm3186, %v4567, %v4597
  %v4599 = vsel %vm3189, %v4568, %v4598
  %v4600 = vsel %vm3192, %v4569, %v4599
  %v4601 = vsel %vm3195, %v4570, %v4600
  %v4602 = vsel %vm3198, %v4571, %v4601
  %v4603 = vsel %vm3180, %v4573, %v4572
  %v4604 = vsel %vm3183, %v4574, %v4603
  %v4605 = vsel %vm3186, %v4575, %v4604
  %v4606 = vsel %vm3189, %v4576, %v4605
  %v4607 = vsel %vm3192, %v4577, %v4606
  %v4608 = vsel %vm3195, %v4578, %v4607
  %v4609 = vsel %vm3198, %v4579, %v4608
  %v4612 = vsel %vm574, %v4602, 0.0
  %4613 = vadd.xlane.f32.xlu0 %v4612
  %v4614 = vpop.xlane.xlu0 %4613
  %v4615 = vsel %vm574, %v4609, 0.0
  %4616 = vadd.xlane.f32.xlu0 %v4615
  %v4617 = vpop.xlane.xlu0 %4616
  %4618 = vset.pattern.permute.xlu0 19
  %4619 = vperm.xlu0 %4618, %v3480
  %v4620 = vpop.permute.xlu0 %4619
  %4622 = vset.pattern.permute.xlu0 19
  %4623 = vperm.xlu0 %4622, %v3481
  %v4624 = vpop.permute.xlu0 %4623
  %4626 = vset.pattern.permute.xlu0 19
  %4627 = vperm.xlu0 %4626, %v3482
  %v4628 = vpop.permute.xlu0 %4627
  %4630 = vset.pattern.permute.xlu0 19
  %4631 = vperm.xlu0 %4630, %v3483
  %v4632 = vpop.permute.xlu0 %4631
  %4634 = vset.pattern.permute.xlu0 19
  %4635 = vperm.xlu0 %4634, %v3484
  %v4636 = vpop.permute.xlu0 %4635
  %4638 = vset.pattern.permute.xlu0 19
  %4639 = vperm.xlu0 %4638, %v3485
  %v4640 = vpop.permute.xlu0 %4639
  %4642 = vset.pattern.permute.xlu0 19
  %4643 = vperm.xlu0 %4642, %v3486
  %v4644 = vpop.permute.xlu0 %4643
  %4646 = vset.pattern.permute.xlu0 19
  %4647 = vperm.xlu0 %4646, %v3487
  %v4648 = vpop.permute.xlu0 %4647
  %4650 = vset.pattern.permute.xlu0 19
  %4651 = vperm.xlu0 %4650, %v3488
  %v4652 = vpop.permute.xlu0 %4651
  %4654 = vset.pattern.permute.xlu0 19
  %4655 = vperm.xlu0 %4654, %v3489
  %v4656 = vpop.permute.xlu0 %4655
  %4658 = vset.pattern.permute.xlu0 19
  %4659 = vperm.xlu0 %4658, %v3490
  %v4660 = vpop.permute.xlu0 %4659
  %4662 = vset.pattern.permute.xlu0 19
  %4663 = vperm.xlu0 %4662, %v3491
  %v4664 = vpop.permute.xlu0 %4663
  %4666 = vset.pattern.permute.xlu0 19
  %4667 = vperm.xlu0 %4666, %v3492
  %v4668 = vpop.permute.xlu0 %4667
  %4670 = vset.pattern.permute.xlu0 19
  %4671 = vperm.xlu0 %4670, %v3493
  %v4672 = vpop.permute.xlu0 %4671
  %4674 = vset.pattern.permute.xlu0 19
  %4675 = vperm.xlu0 %4674, %v3494
  %v4676 = vpop.permute.xlu0 %4675
  %4678 = vset.pattern.permute.xlu0 19
  %4679 = vperm.xlu0 %4678, %v3495
  %v4680 = vpop.permute.xlu0 %4679
  %4682 = vset.pattern.permute.xlu0 19
  %4683 = vperm.xlu0 %4682, %v3496
  %v4684 = vpop.permute.xlu0 %4683
  %4686 = vset.pattern.permute.xlu0 19
  %4687 = vperm.xlu0 %4686, %v3497
  %v4688 = vpop.permute.xlu0 %4687
  %4690 = vset.pattern.permute.xlu0 19
  %4691 = vperm.xlu0 %4690, %v3498
  %v4692 = vpop.permute.xlu0 %4691
  %4694 = vset.pattern.permute.xlu0 19
  %4695 = vperm.xlu0 %4694, %v3499
  %v4696 = vpop.permute.xlu0 %4695
  %4698 = vset.pattern.permute.xlu0 19
  %4699 = vperm.xlu0 %4698, %v3500
  %v4700 = vpop.permute.xlu0 %4699
  %4702 = vset.pattern.permute.xlu0 19
  %4703 = vperm.xlu0 %4702, %v3501
  %v4704 = vpop.permute.xlu0 %4703
  %4706 = vset.pattern.permute.xlu0 19
  %4707 = vperm.xlu0 %4706, %v3502
  %v4708 = vpop.permute.xlu0 %4707
  %4710 = vset.pattern.permute.xlu0 19
  %4711 = vperm.xlu0 %4710, %v3503
  %v4712 = vpop.permute.xlu0 %4711
  %4714 = vset.pattern.permute.xlu0 19
  %4715 = vperm.xlu0 %4714, %v3504
  %v4716 = vpop.permute.xlu0 %4715
  %4718 = vset.pattern.permute.xlu0 19
  %4719 = vperm.xlu0 %4718, %v3505
  %v4720 = vpop.permute.xlu0 %4719
  %4722 = vset.pattern.permute.xlu0 19
  %4723 = vperm.xlu0 %4722, %v3506
  %v4724 = vpop.permute.xlu0 %4723
  %4726 = vset.pattern.permute.xlu0 19
  %4727 = vperm.xlu0 %4726, %v3507
  %v4728 = vpop.permute.xlu0 %4727
  %4730 = vset.pattern.permute.xlu0 19
  %4731 = vperm.xlu0 %4730, %v3508
  %v4732 = vpop.permute.xlu0 %4731
  %4734 = vset.pattern.permute.xlu0 19
  %4735 = vperm.xlu0 %4734, %v3509
  %v4736 = vpop.permute.xlu0 %4735
  %4738 = vset.pattern.permute.xlu0 19
  %4739 = vperm.xlu0 %4738, %v3510
  %v4740 = vpop.permute.xlu0 %4739
  %4742 = vset.pattern.permute.xlu0 19
  %4743 = vperm.xlu0 %4742, %v3511
  %v4744 = vpop.permute.xlu0 %4743
  %v4746 = vmul.f32 %v4620, %v1599
  %v4747 = vmul.f32 %v4624, %v1600
  %v4748 = vmul.f32 %v4628, %v1601
  %v4749 = vmul.f32 %v4632, %v1602
  %v4750 = vmul.f32 %v4636, %v1603
  %v4751 = vmul.f32 %v4640, %v1604
  %v4752 = vmul.f32 %v4644, %v1605
  %v4753 = vmul.f32 %v4648, %v1606
  %v4754 = vmul.f32 %v4652, %v1607
  %v4755 = vmul.f32 %v4656, %v1608
  %v4756 = vmul.f32 %v4660, %v1609
  %v4757 = vmul.f32 %v4664, %v1610
  %v4758 = vmul.f32 %v4668, %v1611
  %v4759 = vmul.f32 %v4672, %v1612
  %v4760 = vmul.f32 %v4676, %v1613
  %v4761 = vmul.f32 %v4680, %v1614
  %v4762 = vmul.f32 %v4684, %v1615
  %v4763 = vmul.f32 %v4688, %v1616
  %v4764 = vmul.f32 %v4692, %v1617
  %v4765 = vmul.f32 %v4696, %v1618
  %v4766 = vmul.f32 %v4700, %v1619
  %v4767 = vmul.f32 %v4704, %v1620
  %v4768 = vmul.f32 %v4708, %v1621
  %v4769 = vmul.f32 %v4712, %v1622
  %v4770 = vmul.f32 %v4716, %v1623
  %v4771 = vmul.f32 %v4720, %v1624
  %v4772 = vmul.f32 %v4724, %v1625
  %v4773 = vmul.f32 %v4728, %v1626
  %v4774 = vmul.f32 %v4732, %v1627
  %v4775 = vmul.f32 %v4736, %v1628
  %v4776 = vmul.f32 %v4740, %v1629
  %v4777 = vmul.f32 %v4744, %v1630
  %v4778 = vsel %vm574, %v4746, 0.0
  %v4779 = vsel %vm574, %v4747, 0.0
  %v4780 = vadd.f32 %v4778, %v4779
  %v4781 = vrot.slane %v4780, 4
  %v4782 = vadd.f32 %v4780, %v4781
  %v4783 = vrot.slane %v4782, 2
  %v4784 = vadd.f32 %v4782, %v4783
  %v4785 = vrot.slane %v4784, 1
  %v4786 = vadd.f32 %v4784, %v4785
  %v4787 = vsel %vm574, %v4748, 0.0
  %v4788 = vsel %vm574, %v4749, 0.0
  %v4789 = vadd.f32 %v4787, %v4788
  %v4790 = vrot.slane %v4789, 4
  %v4791 = vadd.f32 %v4789, %v4790
  %v4792 = vrot.slane %v4791, 2
  %v4793 = vadd.f32 %v4791, %v4792
  %v4794 = vrot.slane %v4793, 1
  %v4795 = vadd.f32 %v4793, %v4794
  %v4796 = vsel %vm574, %v4750, 0.0
  %v4797 = vsel %vm574, %v4751, 0.0
  %v4798 = vadd.f32 %v4796, %v4797
  %v4799 = vrot.slane %v4798, 4
  %v4800 = vadd.f32 %v4798, %v4799
  %v4801 = vrot.slane %v4800, 2
  %v4802 = vadd.f32 %v4800, %v4801
  %v4803 = vrot.slane %v4802, 1
  %v4804 = vadd.f32 %v4802, %v4803
  %v4805 = vsel %vm574, %v4752, 0.0
  %v4806 = vsel %vm574, %v4753, 0.0
  %v4807 = vadd.f32 %v4805, %v4806
  %v4808 = vrot.slane %v4807, 4
  %v4809 = vadd.f32 %v4807, %v4808
  %v4810 = vrot.slane %v4809, 2
  %v4811 = vadd.f32 %v4809, %v4810
  %v4812 = vrot.slane %v4811, 1
  %v4813 = vadd.f32 %v4811, %v4812
  %v4814 = vsel %vm574, %v4754, 0.0
  %v4815 = vsel %vm574, %v4755, 0.0
  %v4816 = vadd.f32 %v4814, %v4815
  %v4817 = vrot.slane %v4816, 4
  %v4818 = vadd.f32 %v4816, %v4817
  %v4819 = vrot.slane %v4818, 2
  %v4820 = vadd.f32 %v4818, %v4819
  %v4821 = vrot.slane %v4820, 1
  %v4822 = vadd.f32 %v4820, %v4821
  %v4823 = vsel %vm574, %v4756, 0.0
  %v4824 = vsel %vm574, %v4757, 0.0
  %v4825 = vadd.f32 %v4823, %v4824
  %v4826 = vrot.slane %v4825, 4
  %v4827 = vadd.f32 %v4825, %v4826
  %v4828 = vrot.slane %v4827, 2
  %v4829 = vadd.f32 %v4827, %v4828
  %v4830 = vrot.slane %v4829, 1
  %v4831 = vadd.f32 %v4829, %v4830
  %v4832 = vsel %vm574, %v4758, 0.0
  %v4833 = vsel %vm574, %v4759, 0.0
  %v4834 = vadd.f32 %v4832, %v4833
  %v4835 = vrot.slane %v4834, 4
  %v4836 = vadd.f32 %v4834, %v4835
  %v4837 = vrot.slane %v4836, 2
  %v4838 = vadd.f32 %v4836, %v4837
  %v4839 = vrot.slane %v4838, 1
  %v4840 = vadd.f32 %v4838, %v4839
  %v4841 = vsel %vm574, %v4760, 0.0
  %v4842 = vsel %vm574, %v4761, 0.0
  %v4843 = vadd.f32 %v4841, %v4842
  %v4844 = vrot.slane %v4843, 4
  %v4845 = vadd.f32 %v4843, %v4844
  %v4846 = vrot.slane %v4845, 2
  %v4847 = vadd.f32 %v4845, %v4846
  %v4848 = vrot.slane %v4847, 1
  %v4849 = vadd.f32 %v4847, %v4848
  %v4850 = vsel %vm574, %v4762, 0.0
  %v4851 = vsel %vm574, %v4763, 0.0
  %v4852 = vadd.f32 %v4850, %v4851
  %v4853 = vrot.slane %v4852, 4
  %v4854 = vadd.f32 %v4852, %v4853
  %v4855 = vrot.slane %v4854, 2
  %v4856 = vadd.f32 %v4854, %v4855
  %v4857 = vrot.slane %v4856, 1
  %v4858 = vadd.f32 %v4856, %v4857
  %v4859 = vsel %vm574, %v4764, 0.0
  %v4860 = vsel %vm574, %v4765, 0.0
  %v4861 = vadd.f32 %v4859, %v4860
  %v4862 = vrot.slane %v4861, 4
  %v4863 = vadd.f32 %v4861, %v4862
  %v4864 = vrot.slane %v4863, 2
  %v4865 = vadd.f32 %v4863, %v4864
  %v4866 = vrot.slane %v4865, 1
  %v4867 = vadd.f32 %v4865, %v4866
  %v4868 = vsel %vm574, %v4766, 0.0
  %v4869 = vsel %vm574, %v4767, 0.0
  %v4870 = vadd.f32 %v4868, %v4869
  %v4871 = vrot.slane %v4870, 4
  %v4872 = vadd.f32 %v4870, %v4871
  %v4873 = vrot.slane %v4872, 2
  %v4874 = vadd.f32 %v4872, %v4873
  %v4875 = vrot.slane %v4874, 1
  %v4876 = vadd.f32 %v4874, %v4875
  %v4877 = vsel %vm574, %v4768, 0.0
  %v4878 = vsel %vm574, %v4769, 0.0
  %v4879 = vadd.f32 %v4877, %v4878
  %v4880 = vrot.slane %v4879, 4
  %v4881 = vadd.f32 %v4879, %v4880
  %v4882 = vrot.slane %v4881, 2
  %v4883 = vadd.f32 %v4881, %v4882
  %v4884 = vrot.slane %v4883, 1
  %v4885 = vadd.f32 %v4883, %v4884
  %v4886 = vsel %vm574, %v4770, 0.0
  %v4887 = vsel %vm574, %v4771, 0.0
  %v4888 = vadd.f32 %v4886, %v4887
  %v4889 = vrot.slane %v4888, 4
  %v4890 = vadd.f32 %v4888, %v4889
  %v4891 = vrot.slane %v4890, 2
  %v4892 = vadd.f32 %v4890, %v4891
  %v4893 = vrot.slane %v4892, 1
  %v4894 = vadd.f32 %v4892, %v4893
  %v4895 = vsel %vm574, %v4772, 0.0
  %v4896 = vsel %vm574, %v4773, 0.0
  %v4897 = vadd.f32 %v4895, %v4896
  %v4898 = vrot.slane %v4897, 4
  %v4899 = vadd.f32 %v4897, %v4898
  %v4900 = vrot.slane %v4899, 2
  %v4901 = vadd.f32 %v4899, %v4900
  %v4902 = vrot.slane %v4901, 1
  %v4903 = vadd.f32 %v4901, %v4902
  %v4904 = vsel %vm574, %v4774, 0.0
  %v4905 = vsel %vm574, %v4775, 0.0
  %v4906 = vadd.f32 %v4904, %v4905
  %v4907 = vrot.slane %v4906, 4
  %v4908 = vadd.f32 %v4906, %v4907
  %v4909 = vrot.slane %v4908, 2
  %v4910 = vadd.f32 %v4908, %v4909
  %v4911 = vrot.slane %v4910, 1
  %v4912 = vadd.f32 %v4910, %v4911
  %v4913 = vsel %vm574, %v4776, 0.0
  %v4914 = vsel %vm574, %v4777, 0.0
  %v4915 = vadd.f32 %v4913, %v4914
  %v4916 = vrot.slane %v4915, 4
  %v4917 = vadd.f32 %v4915, %v4916
  %v4918 = vrot.slane %v4917, 2
  %v4919 = vadd.f32 %v4917, %v4918
  %v4920 = vrot.slane %v4919, 1
  %v4921 = vadd.f32 %v4919, %v4920
  %v4922 = vmul.f32 %v4786, %v4786
  %v4923 = vmul.f32 %v4795, %v4795
  %v4924 = vmul.f32 %v4804, %v4804
  %v4925 = vmul.f32 %v4813, %v4813
  %v4926 = vmul.f32 %v4822, %v4822
  %v4927 = vmul.f32 %v4831, %v4831
  %v4928 = vmul.f32 %v4840, %v4840
  %v4929 = vmul.f32 %v4849, %v4849
  %v4930 = vmul.f32 %v4858, %v4858
  %v4931 = vmul.f32 %v4867, %v4867
  %v4932 = vmul.f32 %v4876, %v4876
  %v4933 = vmul.f32 %v4885, %v4885
  %v4934 = vmul.f32 %v4894, %v4894
  %v4935 = vmul.f32 %v4903, %v4903
  %v4936 = vmul.f32 %v4912, %v4912
  %v4937 = vmul.f32 %v4921, %v4921
  %v4954 = vsel %vm3180, %v4923, %v4922
  %v4955 = vsel %vm3183, %v4924, %v4954
  %v4956 = vsel %vm3186, %v4925, %v4955
  %v4957 = vsel %vm3189, %v4926, %v4956
  %v4958 = vsel %vm3192, %v4927, %v4957
  %v4959 = vsel %vm3195, %v4928, %v4958
  %v4960 = vsel %vm3198, %v4929, %v4959
  %v4961 = vsel %vm3180, %v4931, %v4930
  %v4962 = vsel %vm3183, %v4932, %v4961
  %v4963 = vsel %vm3186, %v4933, %v4962
  %v4964 = vsel %vm3189, %v4934, %v4963
  %v4965 = vsel %vm3192, %v4935, %v4964
  %v4966 = vsel %vm3195, %v4936, %v4965
  %v4967 = vsel %vm3198, %v4937, %v4966
  %v4970 = vsel %vm574, %v4960, 0.0
  %4971 = vadd.xlane.f32.xlu0 %v4970
  %v4972 = vpop.xlane.xlu0 %4971
  %v4973 = vsel %vm574, %v4967, 0.0
  %4974 = vadd.xlane.f32.xlu0 %v4973
  %v4975 = vpop.xlane.xlu0 %4974
  %vm4976 = vcmask 7168
  %v4977 = vsel %vm4976, %v3898, %v4256
  %v4978 = vsel %vm4976, %v3901, %v4259
  %vm4979 = vcmask 15360
  %v4980 = vsel %vm4979, %v4977, %v4614
  %v4981 = vsel %vm4979, %v4978, %v4617
  %vm4982 = vcmask 23552
  %v4983 = vsel %vm4982, %v4980, %v4972
  %v4984 = vsel %vm4982, %v4981, %v4975
  %v4985 = vadd.f32 %v4983, 1.0
  %v4986 = vadd.f32 %v4984, 1.0
  %v4987 = vrcp.pop %v4985
  %v4988 = vmul.f32 %v4985, %v4987
  %v4989 = vsub.f32 1.0, %v4988
  %v4990 = vmul.f32 %v4987, %v4989
  %v4991 = vadd.f32 %v4987, %v4990
  %vm4992 = vweird.f32 %v4985
  %vm4993 = vweird.f32 %v4987
  %vm4994 = vmor %vm4992, %vm4993
  %v4995 = vsel %vm4994, %v4987, %v4991
  %v4996 = vand.u32 2147483647, %v4985
  %vm4997 = vcmp.eq.f32.partialorder %v4996, 8.507059e+37
  %v4998 = vand.u32 %v4985, 2147483648
  %v4999 = vor.u32 1.1754944e-38, %v4998
  %v5000 = vsel %vm4997, %v4999, %v4995
  %v5001 = vmul.f32 1.0, %v5000
  %v5002 = vrcp.pop %v4986
  %v5003 = vmul.f32 %v4986, %v5002
  %v5004 = vsub.f32 1.0, %v5003
  %v5005 = vmul.f32 %v5002, %v5004
  %v5006 = vadd.f32 %v5002, %v5005
  %vm5007 = vweird.f32 %v4986
  %vm5008 = vweird.f32 %v5002
  %vm5009 = vmor %vm5007, %vm5008
  %v5010 = vsel %vm5009, %v5002, %v5006
  %v5011 = vand.u32 2147483647, %v4986
  %vm5012 = vcmp.eq.f32.partialorder %v5011, 8.507059e+37
  %v5013 = vand.u32 %v4986, 2147483648
  %v5014 = vor.u32 1.1754944e-38, %v5013
  %v5015 = vsel %vm5012, %v5014, %v5010
  %v5016 = vmul.f32 1.0, %v5015
  %v5017 = vmul.f32 %v4983, %v5001
  %v5018 = vmul.f32 %v4984, %v5016
  %5019 = vst.msk [vmem:[%s11] sm:$0xff] %vm1952, %v5017
  %5020 = vst.msk [vmem:[%s11 + $0x8] sm:$0xff] %vm1952, %v5018
  // Predicated region
  $region46: #{capsule_forward.1} parent=0 // pred_check
    _
  $region47: #{capsule_forward.1} parent=0 // pred_check_branch
    %5022 = sbr.rel (0) target = $region49
  $region48: #{capsule_forward.1} parent=0 // pred_region
    _
  $region49: #{capsule_forward.1} parent=0 // pred_fallthru
    _
  // Predicated region
  $region50: #{capsule_forward.1} parent=0 // pred_check
    _
  $region51: #{capsule_forward.1} parent=0 // pred_check_branch
    %5024 = sbr.rel (0) target = $region53
  $region52: #{capsule_forward.1} parent=0 // pred_region
    _
  $region53: #{capsule_forward.1} parent=0 // pred_fallthru
    _

</llo_original>
